<compile_context>
chip_gen: v7x
topology: tpu7x:2x2x1
jax: 0.10.0
libtpu: 0.0.40
codegen_flags: <defaults>
</compile_context>

<pallas_src>
import jax
import jax.numpy as jnp
from jax import lax
from jax.experimental import pallas as pl
from jax.experimental.pallas import tpu as pltpu

glove_embedding_dim = 300      # GloVe dim in the module
word_lvl_gru_hidden_dim = 100  # GRU hidden dim in the module
dense_output_dim = 50          # dense_output_dim=50 in _load_*_model

EP = 384        # GloVe dim padded 300 -> 384 (3 clean 128-lane K tiles)
HP = 128        # hidden dim padded to one full 128-lane vreg
DP = 128        # dense dim padded to 128 lanes
VP = 128        # value-count padded to 128 lanes (covers every slot's n_values)
T_MAX = 16      # fixed max utterance length (true lengths passed as SMEM scalars)
TRK_BLK = 8     # trackers per grid step (sublane fill / per-step overhead amortization)
NEG_MASK = -1e9 # bias for padded value lanes -> exp underflows to exactly 0


# --------------------------------------------------------------------------- #
# Fused tracker-block kernel: per tracker 2x GRU encoder -> dense(ReLU) ->     #
# head -> softmax.  One grid step handles a block of up to TRK_BLK trackers.   #
# --------------------------------------------------------------------------- #
def tracker_block_kernel(lens_ref,                       # SMEM: [t_sys, t_usr]
                         x_sys_ref, x_usr_ref,           # (T_MAX, EP) bf16 (shared)
                         wih_s_ref, wih_u_ref,           # (NB, EP, 3*HP) bf16
                         bih_s_ref, bih_u_ref,           # (NB, 1, 3*HP) f32
                         whh_ref, bhh_ref,               # (NB, 2*HP, 6*HP) bf16 / (NB,1,6*HP) f32
                         w1_ref, b1_ref, w2_ref, b2_ref, # dense + head
                         probs_ref,                      # (NB, VP) f32 out
                         xp_ref):                        # (NB*T_MAX, 6*HP) f32 scratch
    nb = whh_ref.shape[0]
    t_max = x_sys_ref.shape[0]
    g3 = 3 * HP
    w_dtype = whh_ref.dtype

    len_sys = lens_ref[0]
    len_usr = lens_ref[1]
    t_end = jnp.maximum(len_sys, len_usr)     # skip all fully-padded timesteps

    # ---- Hoisted input projections: one streaming [T,EP]@[EP,3*HP] matmul per
    #      encoder per tracker (b_ih folded in), written to VMEM scratch so the
    #      recurrence reads cheap per-step rows instead of slicing live values.
    x_sys = x_sys_ref[...]
    x_usr = x_usr_ref[...]
    for i in range(nb):
        row0 = i * t_max
        xp_ref[row0:row0 + t_max, 0:g3] = (
            jnp.dot(x_sys, wih_s_ref[i], preferred_element_type=jnp.float32)
            + bih_s_ref[i])
        xp_ref[row0:row0 + t_max, g3:2 * g3] = (
            jnp.dot(x_usr, wih_u_ref[i], preferred_element_type=jnp.float32)
            + bih_u_ref[i])

    # ---- Recurrence over max(len_sys, len_usr) steps only.  One block-diagonal
    #      [1,256]@[256,768] MXU push per tracker per step covers both encoders'
    #      three gates (b_hh folded in after the matmul; GRU "n" gate needs it
    #      inside the r* term).  The nb tracker chains are independent, so their
    #      MXU / EUP / VPU work co-issues inside each step.
    def step(t, carry):
        hs, hu = carry
        upd_s = t < len_sys
        upd_u = t < len_usr
        new_hs, new_hu = [], []
        for i in range(nb):
            xp_t = xp_ref[pl.ds(i * t_max + t, 1), :]                  # (1, 6*HP) f32
            h_cat = jnp.concatenate([hs[i], hu[i]], axis=1).astype(w_dtype)  # (1, 2*HP)
            hproj = jnp.dot(h_cat, whh_ref[i],
                            preferred_element_type=jnp.float32) + bhh_ref[i]
            # sys gates (lanes 0:384 of the fused layout r|z|n)
            r_s = jax.nn.sigmoid(xp_t[:, 0:HP] + hproj[:, 0:HP])
            z_s = jax.nn.sigmoid(xp_t[:, HP:2 * HP] + hproj[:, HP:2 * HP])
            n_s = jnp.tanh(xp_t[:, 2 * HP:3 * HP] + r_s * hproj[:, 2 * HP:3 * HP])
            # usr gates (lanes 384:768)
            r_u = jax.nn.sigmoid(xp_t[:, 3 * HP:4 * HP] + hproj[:, 3 * HP:4 * HP])
            z_u = jax.nn.sigmoid(xp_t[:, 4 * HP:5 * HP] + hproj[:, 4 * HP:5 * HP])
            n_u = jnp.tanh(xp_t[:, 5 * HP:6 * HP] + r_u * hproj[:, 5 * HP:6 * HP])
            h_s_new = (1.0 - z_s) * n_s + z_s * hs[i]
            h_u_new = (1.0 - z_u) * n_u + z_u * hu[i]
            # Tail masking only matters for |len_sys - len_usr| steps.
            new_hs.append(jnp.where(upd_s, h_s_new, hs[i]))
            new_hu.append(jnp.where(upd_u, h_u_new, hu[i]))
        return tuple(new_hs), tuple(new_hu)

    h0 = tuple(jnp.zeros((1, HP), jnp.float32) for _ in range(nb))
    hs, hu = lax.fori_loop(0, t_end, step, (h0, h0))

    # ---- Dense(ReLU) -> head -> softmax per tracker; padded value lanes carry a
    #      -1e9 bias so exp underflows to exactly 0.  Dense per-row output store.
    # TODO(synk): dropout (p=0.5) is a no-op in eval() mode, so it is omitted.
    for i in range(nb):
        h_cat = jnp.concatenate([hs[i], hu[i]], axis=1).astype(w_dtype)  # (1, 2*HP)
        dense = jnp.dot(h_cat, w1_ref[i],
                        preferred_element_type=jnp.float32) + b1_ref[i]
        dense = jnp.maximum(dense, 0.0).astype(w_dtype)
        logits = jnp.dot(dense, w2_ref[i],
                         preferred_element_type=jnp.float32) + b2_ref[i]
        m = jnp.max(logits, axis=-1, keepdims=True)
        e = jnp.exp(logits - m)
        inv = pl.reciprocal(jnp.sum(e, axis=-1, keepdims=True), approx=True)
        probs_ref[i:i + 1, :] = e * inv                                  # (1, VP)


# --------------------------------------------------------------------------- #
# Host wrapper: one pallas_call; grid iterates over tracker blocks.            #
# --------------------------------------------------------------------------- #
def _grid_semantics(n_blocks):
    """CORE_PARALLEL shards the tracker-block axis over v7x's 2 TensorCores;
    plain 'parallel' elsewhere ('parallel' vs 'arbitrary' is a measured no-op)."""
    if n_blocks >= 2:
        try:
            if "v7" in jax.devices()[0].device_kind.lower():
                return (pltpu.CORE_PARALLEL,)
        except Exception:
            pass
    return ("parallel",)


@jax.jit
def trackers_forward(x_sys, x_usr, lengths, sp):
    """x_sys/x_usr: (T_MAX, EP) bf16; lengths: (2,) int32; sp: stacked tracker params.
    Returns softmax probabilities of shape (n_trackers_padded, VP)."""
    n_trk_pad = sp["whh"].shape[0]
    t_max, ep = x_sys.shape
    nb = min(n_trk_pad, TRK_BLK)
    n_blocks = n_trk_pad // nb
    hp2, g6 = sp["whh"].shape[1], sp["whh"].shape[2]
    g3 = g6 // 2
    dp = sp["w1"].shape[-1]
    vp = sp["w2"].shape[-1]

    def shared(shape):
        nd = len(shape)
        return pl.BlockSpec(shape, lambda b, lens, _n=nd: (0,) * _n)

    def per_blk(shape):
        nd = len(shape)
        return pl.BlockSpec((nb,) + shape,
                            lambda b, lens, _n=nd: (b,) + (0,) * _n)

    grid_spec = pltpu.PrefetchScalarGridSpec(
        num_scalar_prefetch=1,              # `lengths` lives in SMEM
        grid=(n_blocks,),
        in_specs=[
            shared((t_max, ep)),            # x_sys (reused by every block)
            shared((t_max, ep)),            # x_usr
            per_blk((ep, g3)),              # wih_s  (gates fused r|z|n)
            per_blk((ep, g3)),              # wih_u
            per_blk((1, g3)),               # bih_s
            per_blk((1, g3)),               # bih_u
            per_blk((hp2, g6)),             # whh    (block-diag sys|usr fused)
            per_blk((1, g6)),               # bhh
            per_blk((hp2, dp)),             # w1     ([h_sys | h_usr] -> dense)
            per_blk((1, dp)),               # b1
            per_blk((dp, vp)),              # w2
            per_blk((1, vp)),               # b2 (padded lanes = -1e9)
        ],
        out_specs=pl.BlockSpec((nb, vp), lambda b, lens: (b, 0)),
        scratch_shapes=[pltpu.VMEM((nb * t_max, g6), jnp.float32)],  # hoisted x-proj
    )

    return pl.pallas_call(
        tracker_block_kernel,
        out_shape=jax.ShapeDtypeStruct((n_trk_pad, vp), jnp.float32),
        grid_spec=grid_spec,
        compiler_params=pltpu.CompilerParams(
            dimension_semantics=_grid_semantics(n_blocks),
            # An 8-tracker weight block (~9 MB) double-buffers past v5e's 16 MiB
            # scoped default; 48 MiB leaves headroom under v7x's 64 MiB physical.
            vmem_limit_bytes=48 * 1024 * 1024),
    )(lengths, x_sys, x_usr,
      sp["wih_s"], sp["wih_u"], sp["bih_s"], sp["bih_u"],
      sp["whh"], sp["bhh"], sp["w1"], sp["b1"], sp["w2"], sp["b2"])


# --------------------------------------------------------------------------- #
# Parameter construction (natural PyTorch-style shapes) and padded packing.    #
# --------------------------------------------------------------------------- #
def make_raw_tracker_params(key, n_values,
                            emb_dim=glove_embedding_dim,
                            hidden=word_lvl_gru_hidden_dim,
                            dense_dim=dense_output_dim):
    """Synthetic weights at natural shapes; gate order r, z, n as in torch.nn.GRU
    (stored (in_features, out_features), i.e. already transposed for x @ W)."""
    ks = jax.random.split(key, 8)
    scale = 0.08

    def w(k, shape):
        return scale * jax.random.normal(k, shape, dtype=jnp.float32)

    def gru(kbase):
        k = jax.random.split(kbase, 4)
        return {
            "w_ih": w(k[0], (3, emb_dim, hidden)),
            "w_hh": w(k[1], (3, hidden, hidden)),
            "b_ih": w(k[2], (3, hidden)),
            "b_hh": w(k[3], (3, hidden)),
        }

    return {
        "gru_sys": gru(ks[0]),
        "gru_usr": gru(ks[1]),
        "w1": w(ks[2], (2 * hidden, dense_dim)),   # [h_sys | h_usr] -> dense
        "b1": w(ks[3], (dense_dim,)),
        "w2": w(ks[4], (dense_dim, n_values)),
        "b2": w(ks[5], (n_values,)),
        "n_values": n_values,
    }


def pack_tracker_params(raw):
    """Pad E->384, H->128, D->128, n_values->128; fuse GRU gates along lanes;
    build the block-diagonal sys|usr hidden-path weight; cast weights to bf16
    (biases stay f32). Padded value lanes get a -1e9 bias.

    NOTE(v5e): the 256-deep block-diagonal whh matches the v6e/v7x MXU; on v5e
    (128-deep MXU) keeping sys/usr as two K=128 dots would be marginally better."""
    H = word_lvl_gru_hidden_dim
    D = dense_output_dim

    def pad2(x, rows, cols):
        return jnp.pad(x, ((0, rows - x.shape[0]), (0, cols - x.shape[1])))

    def fuse_ih(w_ih):   # (3, E, H) -> (EP, 3*HP), gate order r|z|n along lanes
        return jnp.concatenate([pad2(w_ih[g], EP, HP) for g in range(3)], axis=1)

    def fuse_hh(w_hh):   # (3, H, H) -> (HP, 3*HP)
        return jnp.concatenate([pad2(w_hh[g], HP, HP) for g in range(3)], axis=1)

    def fuse_b(b):       # (3, H) -> (3*HP,)
        return jnp.concatenate([jnp.pad(b[g], (0, HP - H)) for g in range(3)])

    gs, gu = raw["gru_sys"], raw["gru_usr"]

    # Block-diagonal hidden->gates weight: [h_s | h_u] (256) -> [r_s z_s n_s | r_u z_u n_u] (768)
    whh = jnp.zeros((2 * HP, 6 * HP), jnp.float32)
    whh = whh.at[0:HP, 0:3 * HP].set(fuse_hh(gs["w_hh"]))
    whh = whh.at[HP:2 * HP, 3 * HP:6 * HP].set(fuse_hh(gu["w_hh"]))
    bhh = jnp.concatenate([fuse_b(gs["b_hh"]), fuse_b(gu["b_hh"])])[None, :]

    # Dense layer: first `H` rows act on h_sys, next `H` on h_usr (matches h_cat layout).
    w1 = jnp.zeros((2 * HP, DP), jnp.float32)
    w1 = w1.at[0:H, 0:D].set(raw["w1"][:H])
    w1 = w1.at[HP:HP + H, 0:D].set(raw["w1"][H:])

    n_vals = raw["n_values"]
    return {
        "wih_s": fuse_ih(gs["w_ih"]).astype(jnp.bfloat16),
        "wih_u": fuse_ih(gu["w_ih"]).astype(jnp.bfloat16),
        "bih_s": fuse_b(gs["b_ih"])[None, :].astype(jnp.float32),
        "bih_u": fuse_b(gu["b_ih"])[None, :].astype(jnp.float32),
        "whh": whh.astype(jnp.bfloat16),
        "bhh": bhh.astype(jnp.float32),
        "w1": w1.astype(jnp.bfloat16),
        "b1": jnp.pad(raw["b1"], (0, DP - D))[None, :].astype(jnp.float32),
        "w2": pad2(raw["w2"], DP, VP).astype(jnp.bfloat16),
        "b2": jnp.concatenate(
            [raw["b2"], jnp.full((VP - n_vals,), NEG_MASK, jnp.float32)])[None, :],
    }


def stack_tracker_params(packed_list):
    """Stack packed trackers; if more than TRK_BLK, pad to a multiple of TRK_BLK
    by repeating the last tracker (padded rows are sliced off by the caller)."""
    n = len(packed_list)
    if n > TRK_BLK and n % TRK_BLK != 0:
        packed_list = packed_list + [packed_list[-1]] * ((-n) % TRK_BLK)
    return {k: jnp.stack([p[k] for p in packed_list], axis=0) for k in packed_list[0]}


# --------------------------------------------------------------------------- #
# Pure-JAX f32 reference (mirrors the PyTorch tracker forward) for validation. #
# --------------------------------------------------------------------------- #
def tracker_reference(raw, x_sys, x_usr, len_sys, len_usr):
    def gru(g, x, length):
        h = jnp.zeros((word_lvl_gru_hidden_dim,), jnp.float32)
        for t in range(length):
            xt = x[t]
            r = jax.nn.sigmoid(xt @ g["w_ih"][0] + g["b_ih"][0]
                               + h @ g["w_hh"][0] + g["b_hh"][0])
            z = jax.nn.sigmoid(xt @ g["w_ih"][1] + g["b_ih"][1]
                               + h @ g["w_hh"][1] + g["b_hh"][1])
            n = jnp.tanh(xt @ g["w_ih"][2] + g["b_ih"][2]
                         + r * (h @ g["w_hh"][2] + g["b_hh"][2]))
            h = (1.0 - z) * n + z * h
        return h

    h_s = gru(raw["gru_sys"], x_sys, len_sys)
    h_u = gru(raw["gru_usr"], x_usr, len_usr)
    dense = jnp.maximum(jnp.concatenate([h_s, h_u]) @ raw["w1"] + raw["b1"], 0.0)
    logits = dense @ raw["w2"] + raw["b2"]
    return jax.nn.softmax(logits)   # == F.softmax(output.squeeze(), dim=0)


if __name__ == "__main__":
    key = jax.random.PRNGKey(0)
    k_emb, k_sys, k_usr, k_inf, k_req = jax.random.split(key, 5)

    vocab_size = 50
    t_sys, t_usr = 6, 8

    # GloVe-style embedding table + tokenized system / user utterances (plain-JAX glue).
    embedding = 0.1 * jax.random.normal(k_emb, (vocab_size, glove_embedding_dim),
                                        dtype=jnp.float32)
    sys_tokens = jax.random.randint(k_sys, (t_sys,), 0, vocab_size)
    usr_tokens = jax.random.randint(k_usr, (t_usr,), 0, vocab_size)
    x_sys = embedding[sys_tokens]        # [t_sys, 300] f32
    x_usr = embedding[usr_tokens]        # [t_usr, 300] f32

    # Pad utterances to (T_MAX, EP); true lengths go to SMEM via scalar prefetch,
    # so one compiled kernel serves every (t_sys, t_usr) pair and the recurrence
    # only runs max(t_sys, t_usr) steps.
    def pad_seq(x):
        t, e = x.shape
        return jnp.pad(x, ((0, T_MAX - t), (0, EP - e))).astype(jnp.bfloat16)

    x_sys_p, x_usr_p = pad_seq(x_sys), pad_seq(x_usr)
    lengths = jnp.array([t_sys, t_usr], jnp.int32)

    # One informable tracker ("food", 7 values) + one requestable tracker (binary),
    # mirroring inf_trackers / req_trackers — batched into a single pallas_call.
    inf_slot_values = ["italian", "chinese", "indian", "british", "french", "thai", "dontcare"]
    raw_inf = make_raw_tracker_params(k_inf, n_values=len(inf_slot_values))
    raw_req = make_raw_tracker_params(k_req, n_values=2)
    stacked = stack_tracker_params([pack_tracker_params(raw_inf),
                                    pack_tracker_params(raw_req)])

    probs = jax.block_until_ready(trackers_forward(x_sys_p, x_usr_p, lengths, stacked))

    inf_probs = probs[0, :len(inf_slot_values)]
    req_probs = probs[1, :2]

    # Validate against the pure-JAX f32 reference (bf16 MXU operands -> loose tol).
    ref_inf = tracker_reference(raw_inf, x_sys, x_usr, t_sys, t_usr)
    ref_req = tracker_reference(raw_req, x_sys, x_usr, t_sys, t_usr)
    assert float(jnp.max(jnp.abs(inf_probs - ref_inf))) < 5e-2
    assert float(jnp.max(jnp.abs(req_probs - ref_req))) < 5e-2
    # Padded value lanes must carry exactly-zero probability.
    assert float(jnp.max(probs[0, len(inf_slot_values):])) < 1e-6
    assert float(jnp.max(probs[1, 2:])) < 1e-6

    # Rule-based belief-state bookkeeping from MLBST.forward (no tensor compute):
    # TODO(synk): user/sys dialog-act rules, spaCy tokenization and BeliefState plumbing
    # are string/dict logic with no Pallas equivalent; only the probability fill is shown.
    beliefstate = {"beliefs": {"food": {}, "requested": {}}}
    for i, val in enumerate(inf_slot_values):
        beliefstate["beliefs"]["food"][val] = float(inf_probs[i])
    beliefstate["beliefs"]["requested"]["food"] = float(req_probs[1])

    assert inf_probs.shape == (len(inf_slot_values),)
    assert req_probs.shape == (2,)
    assert bool(jnp.all(jnp.isfinite(inf_probs))) and bool(jnp.all(jnp.isfinite(req_probs)))
    # Tolerance accounts for the EUP approximate reciprocal in the softmax denominator.
    assert abs(float(jnp.sum(inf_probs)) - 1.0) < 2e-2
    assert abs(float(jnp.sum(req_probs)) - 1.0) < 2e-2

    print("KERNEL_OK")
</pallas_src>

<mosaic_0001>
module attributes {stable_mosaic.version = 11 : i64} {
  func.func @tracker_block_kernel(%arg0: i32, %arg1: memref<2xi32, #tpu.memory_space<smem>>, %arg2: memref<16x384xbf16, #tpu.memory_space<vmem>>, %arg3: memref<16x384xbf16, #tpu.memory_space<vmem>>, %arg4: memref<2x384x384xbf16, #tpu.memory_space<vmem>>, %arg5: memref<2x384x384xbf16, #tpu.memory_space<vmem>>, %arg6: memref<2x1x384xf32, #tpu.memory_space<vmem>>, %arg7: memref<2x1x384xf32, #tpu.memory_space<vmem>>, %arg8: memref<2x256x768xbf16, #tpu.memory_space<vmem>>, %arg9: memref<2x1x768xf32, #tpu.memory_space<vmem>>, %arg10: memref<2x256x128xbf16, #tpu.memory_space<vmem>>, %arg11: memref<2x1x128xf32, #tpu.memory_space<vmem>>, %arg12: memref<2x128x128xbf16, #tpu.memory_space<vmem>>, %arg13: memref<2x1x128xf32, #tpu.memory_space<vmem>>, %arg14: memref<2x128xf32, #tpu.memory_space<vmem>>, %arg15: memref<32x768xf32, #tpu.memory_space<vmem>>) attributes {dimension_semantics = [#tpu.dimension_semantics<parallel>], iteration_bounds = array<i64: 1>, scalar_prefetch = 1 : i64, scratch_operands = 1 : i64, tpu.core_type = #tpu.core_type<tc>, window_params = [{pipeline_mode = #tpu.pipeline_mode<synchronous>, transform_indices = @transform_0, window_bounds = array<i64: 16, 384>}, {pipeline_mode = #tpu.pipeline_mode<synchronous>, transform_indices = @transform_1, window_bounds = array<i64: 16, 384>}, {transform_indices = @transform_2, window_bounds = array<i64: 2, 384, 384>}, {transform_indices = @transform_3, window_bounds = array<i64: 2, 384, 384>}, {transform_indices = @transform_4, window_bounds = array<i64: 2, 1, 384>}, {transform_indices = @transform_5, window_bounds = array<i64: 2, 1, 384>}, {transform_indices = @transform_6, window_bounds = array<i64: 2, 256, 768>}, {transform_indices = @transform_7, window_bounds = array<i64: 2, 1, 768>}, {transform_indices = @transform_8, window_bounds = array<i64: 2, 256, 128>}, {transform_indices = @transform_9, window_bounds = array<i64: 2, 1, 128>}, {transform_indices = @transform_10, window_bounds = array<i64: 2, 128, 128>}, {transform_indices = @transform_11, window_bounds = array<i64: 2, 1, 128>}, {transform_indices = @transform_12, window_bounds = array<i64: 2, 128>}]} {
    %c0 = arith.constant 0 : index
    %0 = memref.load %arg1[%c0] : memref<2xi32, #tpu.memory_space<smem>>
    %c1 = arith.constant 1 : index
    %1 = memref.load %arg1[%c1] : memref<2xi32, #tpu.memory_space<smem>>
    %2 = arith.maxsi %0, %1 : i32
    %c0_0 = arith.constant 0 : index
    %c0_1 = arith.constant 0 : index
    %3 = vector.load %arg2[%c0_0, %c0_1] : memref<16x384xbf16, #tpu.memory_space<vmem>>, vector<16x384xbf16>
    %c0_2 = arith.constant 0 : index
    %c0_3 = arith.constant 0 : index
    %4 = vector.load %arg3[%c0_2, %c0_3] : memref<16x384xbf16, #tpu.memory_space<vmem>>, vector<16x384xbf16>
    %c0_4 = arith.constant 0 : index
    %c0_5 = arith.constant 0 : index
    %c0_6 = arith.constant 0 : index
    %5 = vector.load %arg4[%c0_4, %c0_5, %c0_6] : memref<2x384x384xbf16, #tpu.memory_space<vmem>>, vector<1x384x384xbf16>
    %6 = vector.shape_cast %5 : vector<1x384x384xbf16> to vector<384x384xbf16>
    %cst = arith.constant dense<0.000000e+00> : vector<16x384xf32>
    %7 = tpu.matmul %3, %6, %cst {dimension_numbers = #tpu.dot_dimension_numbers<[1], [0], [0], [1], [0, 0, 1, 1], [], []>} : vector<16x384xbf16>, vector<384x384xbf16>, vector<16x384xf32> -> vector<16x384xf32>
    %c0_7 = arith.constant 0 : index
    %c0_8 = arith.constant 0 : index
    %c0_9 = arith.constant 0 : index
    %8 = vector.load %arg6[%c0_7, %c0_8, %c0_9] : memref<2x1x384xf32, #tpu.memory_space<vmem>>, vector<1x1x384xf32>
    %9 = vector.shape_cast %8 : vector<1x1x384xf32> to vector<1x384xf32>
    %10 = vector.broadcast %9 : vector<1x384xf32> to vector<16x384xf32>
    %11 = arith.addf %7, %10 : vector<16x384xf32>
    %c0_10 = arith.constant 0 : index
    %c0_11 = arith.constant 0 : index
    %12 = vector.load %arg15[%c0_10, %c0_11] : memref<32x768xf32, #tpu.memory_space<vmem>>, vector<16x384xf32>
    tpu.vector_store %arg15[%c0_10, %c0_11], %11 {strides = array<i32>} : memref<32x768xf32, #tpu.memory_space<vmem>>, vector<16x384xf32>,
    %c0_12 = arith.constant 0 : index
    %c0_13 = arith.constant 0 : index
    %c0_14 = arith.constant 0 : index
    %13 = vector.load %arg5[%c0_12, %c0_13, %c0_14] : memref<2x384x384xbf16, #tpu.memory_space<vmem>>, vector<1x384x384xbf16>
    %14 = vector.shape_cast %13 : vector<1x384x384xbf16> to vector<384x384xbf16>
    %cst_15 = arith.constant dense<0.000000e+00> : vector<16x384xf32>
    %15 = tpu.matmul %4, %14, %cst_15 {dimension_numbers = #tpu.dot_dimension_numbers<[1], [0], [0], [1], [0, 0, 1, 1], [], []>} : vector<16x384xbf16>, vector<384x384xbf16>, vector<16x384xf32> -> vector<16x384xf32>
    %c0_16 = arith.constant 0 : index
    %c0_17 = arith.constant 0 : index
    %c0_18 = arith.constant 0 : index
    %16 = vector.load %arg7[%c0_16, %c0_17, %c0_18] : memref<2x1x384xf32, #tpu.memory_space<vmem>>, vector<1x1x384xf32>
    %17 = vector.shape_cast %16 : vector<1x1x384xf32> to vector<1x384xf32>
    %18 = vector.broadcast %17 : vector<1x384xf32> to vector<16x384xf32>
    %19 = arith.addf %15, %18 : vector<16x384xf32>
    %c0_19 = arith.constant 0 : index
    %c384 = arith.constant 384 : index
    %20 = vector.load %arg15[%c0_19, %c384] : memref<32x768xf32, #tpu.memory_space<vmem>>, vector<16x384xf32>
    tpu.vector_store %arg15[%c0_19, %c384], %19 {strides = array<i32>} : memref<32x768xf32, #tpu.memory_space<vmem>>, vector<16x384xf32>,
    %c1_20 = arith.constant 1 : index
    %c0_21 = arith.constant 0 : index
    %c0_22 = arith.constant 0 : index
    %21 = vector.load %arg4[%c1_20, %c0_21, %c0_22] : memref<2x384x384xbf16, #tpu.memory_space<vmem>>, vector<1x384x384xbf16>
    %22 = vector.shape_cast %21 : vector<1x384x384xbf16> to vector<384x384xbf16>
    %cst_23 = arith.constant dense<0.000000e+00> : vector<16x384xf32>
    %23 = tpu.matmul %3, %22, %cst_23 {dimension_numbers = #tpu.dot_dimension_numbers<[1], [0], [0], [1], [0, 0, 1, 1], [], []>} : vector<16x384xbf16>, vector<384x384xbf16>, vector<16x384xf32> -> vector<16x384xf32>
    %c1_24 = arith.constant 1 : index
    %c0_25 = arith.constant 0 : index
    %c0_26 = arith.constant 0 : index
    %24 = vector.load %arg6[%c1_24, %c0_25, %c0_26] : memref<2x1x384xf32, #tpu.memory_space<vmem>>, vector<1x1x384xf32>
    %25 = vector.shape_cast %24 : vector<1x1x384xf32> to vector<1x384xf32>
    %26 = vector.broadcast %25 : vector<1x384xf32> to vector<16x384xf32>
    %27 = arith.addf %23, %26 : vector<16x384xf32>
    %c16 = arith.constant 16 : index
    %c0_27 = arith.constant 0 : index
    %28 = vector.load %arg15[%c16, %c0_27] : memref<32x768xf32, #tpu.memory_space<vmem>>, vector<16x384xf32>
    tpu.vector_store %arg15[%c16, %c0_27], %27 {strides = array<i32>} : memref<32x768xf32, #tpu.memory_space<vmem>>, vector<16x384xf32>,
    %c1_28 = arith.constant 1 : index
    %c0_29 = arith.constant 0 : index
    %c0_30 = arith.constant 0 : index
    %29 = vector.load %arg5[%c1_28, %c0_29, %c0_30] : memref<2x384x384xbf16, #tpu.memory_space<vmem>>, vector<1x384x384xbf16>
    %30 = vector.shape_cast %29 : vector<1x384x384xbf16> to vector<384x384xbf16>
    %cst_31 = arith.constant dense<0.000000e+00> : vector<16x384xf32>
    %31 = tpu.matmul %4, %30, %cst_31 {dimension_numbers = #tpu.dot_dimension_numbers<[1], [0], [0], [1], [0, 0, 1, 1], [], []>} : vector<16x384xbf16>, vector<384x384xbf16>, vector<16x384xf32> -> vector<16x384xf32>
    %c1_32 = arith.constant 1 : index
    %c0_33 = arith.constant 0 : index
    %c0_34 = arith.constant 0 : index
    %32 = vector.load %arg7[%c1_32, %c0_33, %c0_34] : memref<2x1x384xf32, #tpu.memory_space<vmem>>, vector<1x1x384xf32>
    %33 = vector.shape_cast %32 : vector<1x1x384xf32> to vector<1x384xf32>
    %34 = vector.broadcast %33 : vector<1x384xf32> to vector<16x384xf32>
    %35 = arith.addf %31, %34 : vector<16x384xf32>
    %c16_35 = arith.constant 16 : index
    %c384_36 = arith.constant 384 : index
    %36 = vector.load %arg15[%c16_35, %c384_36] : memref<32x768xf32, #tpu.memory_space<vmem>>, vector<16x384xf32>
    tpu.vector_store %arg15[%c16_35, %c384_36], %35 {strides = array<i32>} : memref<32x768xf32, #tpu.memory_space<vmem>>, vector<16x384xf32>,
    %cst_37 = arith.constant 0.000000e+00 : f32
    %37 = vector.broadcast %cst_37 : f32 to vector<1x128xf32>
    %cst_38 = arith.constant 0.000000e+00 : f32
    %38 = vector.broadcast %cst_38 : f32 to vector<1x128xf32>
    %c0_i32 = arith.constant 0 : i32
    %39 = arith.subi %2, %c0_i32 : i32
    %40 = arith.addi %c0_i32, %39 : i32
    %c1_i32 = arith.constant 1 : i32
    %41:4 = scf.for %arg16 = %c0_i32 to %40 step %c1_i32 iter_args(%arg17 = %37, %arg18 = %38, %arg19 = %37, %arg20 = %38) -> (vector<1x128xf32>, vector<1x128xf32>, vector<1x128xf32>, vector<1x128xf32>)  : i32 {
      %98 = arith.cmpi slt, %arg16, %0 : i32
      %99 = arith.cmpi slt, %arg16, %1 : i32
      %c0_i32_77 = arith.constant 0 : i32
      %100 = arith.addi %c0_i32_77, %arg16 : i32
      %101 = arith.index_cast %100 : i32 to index
      %c0_78 = arith.constant 0 : index
      %102 = vector.load %arg15[%101, %c0_78] : memref<32x768xf32, #tpu.memory_space<vmem>>, vector<1x768xf32>
      %103 = tpu.concatenate %arg17, %arg19 in 1 : vector<1x128xf32>, vector<1x128xf32> -> vector<1x256xf32>
      %104 = arith.truncf %103 : vector<1x256xf32> to vector<1x256xbf16>
      %c0_79 = arith.constant 0 : index
      %c0_80 = arith.constant 0 : index
      %c0_81 = arith.constant 0 : index
      %105 = vector.load %arg8[%c0_79, %c0_80, %c0_81] : memref<2x256x768xbf16, #tpu.memory_space<vmem>>, vector<1x256x768xbf16>
      %106 = vector.shape_cast %105 : vector<1x256x768xbf16> to vector<256x768xbf16>
      %cst_82 = arith.constant dense<0.000000e+00> : vector<1x768xf32>
      %107 = tpu.matmul %104, %106, %cst_82 {dimension_numbers = #tpu.dot_dimension_numbers<[1], [0], [0], [1], [0, 0, 1, 1], [], []>} : vector<1x256xbf16>, vector<256x768xbf16>, vector<1x768xf32> -> vector<1x768xf32>
      %c0_83 = arith.constant 0 : index
      %c0_84 = arith.constant 0 : index
      %c0_85 = arith.constant 0 : index
      %108 = vector.load %arg9[%c0_83, %c0_84, %c0_85] : memref<2x1x768xf32, #tpu.memory_space<vmem>>, vector<1x1x768xf32>
      %109 = vector.shape_cast %108 : vector<1x1x768xf32> to vector<1x768xf32>
      %110 = arith.addf %107, %109 : vector<1x768xf32>
      %111 = vector.extract_strided_slice %102 {offsets = [0, 0], sizes = [1, 128], strides = [1, 1]} : vector<1x768xf32> to vector<1x128xf32>
      %112 = vector.extract_strided_slice %110 {offsets = [0, 0], sizes = [1, 128], strides = [1, 1]} : vector<1x768xf32> to vector<1x128xf32>
      %113 = arith.addf %111, %112 : vector<1x128xf32>
      %114 = arith.negf %113 : vector<1x128xf32>
      %115 = math.exp %114 : vector<1x128xf32>
      %cst_86 = arith.constant 1.000000e+00 : f32
      %116 = vector.broadcast %cst_86 : f32 to vector<1x128xf32>
      %117 = arith.addf %116, %115 : vector<1x128xf32>
      %118 = arith.divf %116, %117 : vector<1x128xf32>
      %119 = vector.extract_strided_slice %102 {offsets = [0, 128], sizes = [1, 128], strides = [1, 1]} : vector<1x768xf32> to vector<1x128xf32>
      %120 = vector.extract_strided_slice %110 {offsets = [0, 128], sizes = [1, 128], strides = [1, 1]} : vector<1x768xf32> to vector<1x128xf32>
      %121 = arith.addf %119, %120 : vector<1x128xf32>
      %122 = arith.negf %121 : vector<1x128xf32>
      %123 = math.exp %122 : vector<1x128xf32>
      %cst_87 = arith.constant 1.000000e+00 : f32
      %124 = vector.broadcast %cst_87 : f32 to vector<1x128xf32>
      %125 = arith.addf %124, %123 : vector<1x128xf32>
      %126 = arith.divf %124, %125 : vector<1x128xf32>
      %127 = vector.extract_strided_slice %102 {offsets = [0, 256], sizes = [1, 128], strides = [1, 1]} : vector<1x768xf32> to vector<1x128xf32>
      %128 = vector.extract_strided_slice %110 {offsets = [0, 256], sizes = [1, 128], strides = [1, 1]} : vector<1x768xf32> to vector<1x128xf32>
      %129 = arith.mulf %118, %128 : vector<1x128xf32>
      %130 = arith.addf %127, %129 : vector<1x128xf32>
      %131 = math.tanh %130 : vector<1x128xf32>
      %132 = vector.extract_strided_slice %102 {offsets = [0, 384], sizes = [1, 128], strides = [1, 1]} : vector<1x768xf32> to vector<1x128xf32>
      %133 = vector.extract_strided_slice %110 {offsets = [0, 384], sizes = [1, 128], strides = [1, 1]} : vector<1x768xf32> to vector<1x128xf32>
      %134 = arith.addf %132, %133 : vector<1x128xf32>
      %135 = arith.negf %134 : vector<1x128xf32>
      %136 = math.exp %135 : vector<1x128xf32>
      %cst_88 = arith.constant 1.000000e+00 : f32
      %137 = vector.broadcast %cst_88 : f32 to vector<1x128xf32>
      %138 = arith.addf %137, %136 : vector<1x128xf32>
      %139 = arith.divf %137, %138 : vector<1x128xf32>
      %140 = vector.extract_strided_slice %102 {offsets = [0, 512], sizes = [1, 128], strides = [1, 1]} : vector<1x768xf32> to vector<1x128xf32>
      %141 = vector.extract_strided_slice %110 {offsets = [0, 512], sizes = [1, 128], strides = [1, 1]} : vector<1x768xf32> to vector<1x128xf32>
      %142 = arith.addf %140, %141 : vector<1x128xf32>
      %143 = arith.negf %142 : vector<1x128xf32>
      %144 = math.exp %143 : vector<1x128xf32>
      %cst_89 = arith.constant 1.000000e+00 : f32
      %145 = vector.broadcast %cst_89 : f32 to vector<1x128xf32>
      %146 = arith.addf %145, %144 : vector<1x128xf32>
      %147 = arith.divf %145, %146 : vector<1x128xf32>
      %148 = vector.extract_strided_slice %102 {offsets = [0, 640], sizes = [1, 128], strides = [1, 1]} : vector<1x768xf32> to vector<1x128xf32>
      %149 = vector.extract_strided_slice %110 {offsets = [0, 640], sizes = [1, 128], strides = [1, 1]} : vector<1x768xf32> to vector<1x128xf32>
      %150 = arith.mulf %139, %149 : vector<1x128xf32>
      %151 = arith.addf %148, %150 : vector<1x128xf32>
      %152 = math.tanh %151 : vector<1x128xf32>
      %cst_90 = arith.constant 1.000000e+00 : f32
      %153 = vector.broadcast %cst_90 : f32 to vector<1x128xf32>
      %154 = arith.subf %153, %126 : vector<1x128xf32>
      %155 = arith.mulf %154, %131 : vector<1x128xf32>
      %156 = arith.mulf %126, %arg17 : vector<1x128xf32>
      %157 = arith.addf %155, %156 : vector<1x128xf32>
      %cst_91 = arith.constant 1.000000e+00 : f32
      %158 = vector.broadcast %cst_91 : f32 to vector<1x128xf32>
      %159 = arith.subf %158, %147 : vector<1x128xf32>
      %160 = arith.mulf %159, %152 : vector<1x128xf32>
      %161 = arith.mulf %147, %arg19 : vector<1x128xf32>
      %162 = arith.addf %160, %161 : vector<1x128xf32>
      %163 = arith.select %98, %157, %arg17 : vector<1x128xf32>
      %164 = arith.select %99, %162, %arg19 : vector<1x128xf32>
      %c16_i32 = arith.constant 16 : i32
      %165 = arith.addi %c16_i32, %arg16 : i32
      %166 = arith.index_cast %165 : i32 to index
      %c0_92 = arith.constant 0 : index
      %167 = vector.load %arg15[%166, %c0_92] : memref<32x768xf32, #tpu.memory_space<vmem>>, vector<1x768xf32>
      %168 = tpu.concatenate %arg18, %arg20 in 1 : vector<1x128xf32>, vector<1x128xf32> -> vector<1x256xf32>
      %169 = arith.truncf %168 : vector<1x256xf32> to vector<1x256xbf16>
      %c1_93 = arith.constant 1 : index
      %c0_94 = arith.constant 0 : index
      %c0_95 = arith.constant 0 : index
      %170 = vector.load %arg8[%c1_93, %c0_94, %c0_95] : memref<2x256x768xbf16, #tpu.memory_space<vmem>>, vector<1x256x768xbf16>
      %171 = vector.shape_cast %170 : vector<1x256x768xbf16> to vector<256x768xbf16>
      %cst_96 = arith.constant dense<0.000000e+00> : vector<1x768xf32>
      %172 = tpu.matmul %169, %171, %cst_96 {dimension_numbers = #tpu.dot_dimension_numbers<[1], [0], [0], [1], [0, 0, 1, 1], [], []>} : vector<1x256xbf16>, vector<256x768xbf16>, vector<1x768xf32> -> vector<1x768xf32>
      %c1_97 = arith.constant 1 : index
      %c0_98 = arith.constant 0 : index
      %c0_99 = arith.constant 0 : index
      %173 = vector.load %arg9[%c1_97, %c0_98, %c0_99] : memref<2x1x768xf32, #tpu.memory_space<vmem>>, vector<1x1x768xf32>
      %174 = vector.shape_cast %173 : vector<1x1x768xf32> to vector<1x768xf32>
      %175 = arith.addf %172, %174 : vector<1x768xf32>
      %176 = vector.extract_strided_slice %167 {offsets = [0, 0], sizes = [1, 128], strides = [1, 1]} : vector<1x768xf32> to vector<1x128xf32>
      %177 = vector.extract_strided_slice %175 {offsets = [0, 0], sizes = [1, 128], strides = [1, 1]} : vector<1x768xf32> to vector<1x128xf32>
      %178 = arith.addf %176, %177 : vector<1x128xf32>
      %179 = arith.negf %178 : vector<1x128xf32>
      %180 = math.exp %179 : vector<1x128xf32>
      %cst_100 = arith.constant 1.000000e+00 : f32
      %181 = vector.broadcast %cst_100 : f32 to vector<1x128xf32>
      %182 = arith.addf %181, %180 : vector<1x128xf32>
      %183 = arith.divf %181, %182 : vector<1x128xf32>
      %184 = vector.extract_strided_slice %167 {offsets = [0, 128], sizes = [1, 128], strides = [1, 1]} : vector<1x768xf32> to vector<1x128xf32>
      %185 = vector.extract_strided_slice %175 {offsets = [0, 128], sizes = [1, 128], strides = [1, 1]} : vector<1x768xf32> to vector<1x128xf32>
      %186 = arith.addf %184, %185 : vector<1x128xf32>
      %187 = arith.negf %186 : vector<1x128xf32>
      %188 = math.exp %187 : vector<1x128xf32>
      %cst_101 = arith.constant 1.000000e+00 : f32
      %189 = vector.broadcast %cst_101 : f32 to vector<1x128xf32>
      %190 = arith.addf %189, %188 : vector<1x128xf32>
      %191 = arith.divf %189, %190 : vector<1x128xf32>
      %192 = vector.extract_strided_slice %167 {offsets = [0, 256], sizes = [1, 128], strides = [1, 1]} : vector<1x768xf32> to vector<1x128xf32>
      %193 = vector.extract_strided_slice %175 {offsets = [0, 256], sizes = [1, 128], strides = [1, 1]} : vector<1x768xf32> to vector<1x128xf32>
      %194 = arith.mulf %183, %193 : vector<1x128xf32>
      %195 = arith.addf %192, %194 : vector<1x128xf32>
      %196 = math.tanh %195 : vector<1x128xf32>
      %197 = vector.extract_strided_slice %167 {offsets = [0, 384], sizes = [1, 128], strides = [1, 1]} : vector<1x768xf32> to vector<1x128xf32>
      %198 = vector.extract_strided_slice %175 {offsets = [0, 384], sizes = [1, 128], strides = [1, 1]} : vector<1x768xf32> to vector<1x128xf32>
      %199 = arith.addf %197, %198 : vector<1x128xf32>
      %200 = arith.negf %199 : vector<1x128xf32>
      %201 = math.exp %200 : vector<1x128xf32>
      %cst_102 = arith.constant 1.000000e+00 : f32
      %202 = vector.broadcast %cst_102 : f32 to vector<1x128xf32>
      %203 = arith.addf %202, %201 : vector<1x128xf32>
      %204 = arith.divf %202, %203 : vector<1x128xf32>
      %205 = vector.extract_strided_slice %167 {offsets = [0, 512], sizes = [1, 128], strides = [1, 1]} : vector<1x768xf32> to vector<1x128xf32>
      %206 = vector.extract_strided_slice %175 {offsets = [0, 512], sizes = [1, 128], strides = [1, 1]} : vector<1x768xf32> to vector<1x128xf32>
      %207 = arith.addf %205, %206 : vector<1x128xf32>
      %208 = arith.negf %207 : vector<1x128xf32>
      %209 = math.exp %208 : vector<1x128xf32>
      %cst_103 = arith.constant 1.000000e+00 : f32
      %210 = vector.broadcast %cst_103 : f32 to vector<1x128xf32>
      %211 = arith.addf %210, %209 : vector<1x128xf32>
      %212 = arith.divf %210, %211 : vector<1x128xf32>
      %213 = vector.extract_strided_slice %167 {offsets = [0, 640], sizes = [1, 128], strides = [1, 1]} : vector<1x768xf32> to vector<1x128xf32>
      %214 = vector.extract_strided_slice %175 {offsets = [0, 640], sizes = [1, 128], strides = [1, 1]} : vector<1x768xf32> to vector<1x128xf32>
      %215 = arith.mulf %204, %214 : vector<1x128xf32>
      %216 = arith.addf %213, %215 : vector<1x128xf32>
      %217 = math.tanh %216 : vector<1x128xf32>
      %cst_104 = arith.constant 1.000000e+00 : f32
      %218 = vector.broadcast %cst_104 : f32 to vector<1x128xf32>
      %219 = arith.subf %218, %191 : vector<1x128xf32>
      %220 = arith.mulf %219, %196 : vector<1x128xf32>
      %221 = arith.mulf %191, %arg18 : vector<1x128xf32>
      %222 = arith.addf %220, %221 : vector<1x128xf32>
      %cst_105 = arith.constant 1.000000e+00 : f32
      %223 = vector.broadcast %cst_105 : f32 to vector<1x128xf32>
      %224 = arith.subf %223, %212 : vector<1x128xf32>
      %225 = arith.mulf %224, %217 : vector<1x128xf32>
      %226 = arith.mulf %212, %arg20 : vector<1x128xf32>
      %227 = arith.addf %225, %226 : vector<1x128xf32>
      %228 = arith.select %98, %222, %arg18 : vector<1x128xf32>
      %229 = arith.select %99, %227, %arg20 : vector<1x128xf32>
      scf.yield %163, %228, %164, %229 : vector<1x128xf32>, vector<1x128xf32>, vector<1x128xf32>, vector<1x128xf32>
    }
    %42 = tpu.concatenate %41#0, %41#2 in 1 : vector<1x128xf32>, vector<1x128xf32> -> vector<1x256xf32>
    %43 = arith.truncf %42 : vector<1x256xf32> to vector<1x256xbf16>
    %c0_39 = arith.constant 0 : index
    %c0_40 = arith.constant 0 : index
    %c0_41 = arith.constant 0 : index
    %44 = vector.load %arg10[%c0_39, %c0_40, %c0_41] : memref<2x256x128xbf16, #tpu.memory_space<vmem>>, vector<1x256x128xbf16>
    %45 = vector.shape_cast %44 : vector<1x256x128xbf16> to vector<256x128xbf16>
    %cst_42 = arith.constant dense<0.000000e+00> : vector<1x128xf32>
    %46 = tpu.matmul %43, %45, %cst_42 {dimension_numbers = #tpu.dot_dimension_numbers<[1], [0], [0], [1], [0, 0, 1, 1], [], []>} : vector<1x256xbf16>, vector<256x128xbf16>, vector<1x128xf32> -> vector<1x128xf32>
    %c0_43 = arith.constant 0 : index
    %c0_44 = arith.constant 0 : index
    %c0_45 = arith.constant 0 : index
    %47 = vector.load %arg11[%c0_43, %c0_44, %c0_45] : memref<2x1x128xf32, #tpu.memory_space<vmem>>, vector<1x1x128xf32>
    %48 = vector.shape_cast %47 : vector<1x1x128xf32> to vector<1x128xf32>
    %49 = arith.addf %46, %48 : vector<1x128xf32>
    %cst_46 = arith.constant 0.000000e+00 : f32
    %50 = vector.broadcast %cst_46 : f32 to vector<1x128xf32>
    %51 = arith.maximumf %49, %50 : vector<1x128xf32>
    %52 = arith.truncf %51 : vector<1x128xf32> to vector<1x128xbf16>
    %c0_47 = arith.constant 0 : index
    %c0_48 = arith.constant 0 : index
    %c0_49 = arith.constant 0 : index
    %53 = vector.load %arg12[%c0_47, %c0_48, %c0_49] : memref<2x128x128xbf16, #tpu.memory_space<vmem>>, vector<1x128x128xbf16>
    %54 = vector.shape_cast %53 : vector<1x128x128xbf16> to vector<128x128xbf16>
    %cst_50 = arith.constant dense<0.000000e+00> : vector<1x128xf32>
    %55 = tpu.matmul %52, %54, %cst_50 {dimension_numbers = #tpu.dot_dimension_numbers<[1], [0], [0], [1], [0, 0, 1, 1], [], []>} : vector<1x128xbf16>, vector<128x128xbf16>, vector<1x128xf32> -> vector<1x128xf32>
    %c0_51 = arith.constant 0 : index
    %c0_52 = arith.constant 0 : index
    %c0_53 = arith.constant 0 : index
    %56 = vector.load %arg13[%c0_51, %c0_52, %c0_53] : memref<2x1x128xf32, #tpu.memory_space<vmem>>, vector<1x1x128xf32>
    %57 = vector.shape_cast %56 : vector<1x1x128xf32> to vector<1x128xf32>
    %58 = arith.addf %55, %57 : vector<1x128xf32>
    %cst_54 = arith.constant dense<0xFF800000> : vector<1xf32>
    %59 = vector.multi_reduction <maximumf>, %58, %cst_54 [1] : vector<1x128xf32> to vector<1xf32>
    %60 = vector.shape_cast %59 : vector<1xf32> to vector<1x1xf32>
    %61 = vector.broadcast %60 : vector<1x1xf32> to vector<1x128xf32>
    %62 = arith.subf %58, %61 : vector<1x128xf32>
    %63 = math.exp %62 : vector<1x128xf32>
    %cst_55 = arith.constant dense<0.000000e+00> : vector<1xf32>
    %64 = vector.multi_reduction <add>, %63, %cst_55 [1] : vector<1x128xf32> to vector<1xf32>
    %65 = vector.shape_cast %64 : vector<1xf32> to vector<1x1xf32>
    %66 = tpu.reciprocal %65 {approx = true} : vector<1x1xf32> -> vector<1x1xf32>
    %67 = vector.broadcast %66 : vector<1x1xf32> to vector<1x128xf32>
    %68 = arith.mulf %63, %67 : vector<1x128xf32>
    %c0_56 = arith.constant 0 : index
    %c0_57 = arith.constant 0 : index
    %69 = vector.load %arg14[%c0_56, %c0_57] : memref<2x128xf32, #tpu.memory_space<vmem>>, vector<1x128xf32>
    tpu.vector_store %arg14[%c0_56, %c0_57], %68 {strides = array<i32>} : memref<2x128xf32, #tpu.memory_space<vmem>>, vector<1x128xf32>,
    %70 = tpu.concatenate %41#1, %41#3 in 1 : vector<1x128xf32>, vector<1x128xf32> -> vector<1x256xf32>
    %71 = arith.truncf %70 : vector<1x256xf32> to vector<1x256xbf16>
    %c1_58 = arith.constant 1 : index
    %c0_59 = arith.constant 0 : index
    %c0_60 = arith.constant 0 : index
    %72 = vector.load %arg10[%c1_58, %c0_59, %c0_60] : memref<2x256x128xbf16, #tpu.memory_space<vmem>>, vector<1x256x128xbf16>
    %73 = vector.shape_cast %72 : vector<1x256x128xbf16> to vector<256x128xbf16>
    %cst_61 = arith.constant dense<0.000000e+00> : vector<1x128xf32>
    %74 = tpu.matmul %71, %73, %cst_61 {dimension_numbers = #tpu.dot_dimension_numbers<[1], [0], [0], [1], [0, 0, 1, 1], [], []>} : vector<1x256xbf16>, vector<256x128xbf16>, vector<1x128xf32> -> vector<1x128xf32>
    %c1_62 = arith.constant 1 : index
    %c0_63 = arith.constant 0 : index
    %c0_64 = arith.constant 0 : index
    %75 = vector.load %arg11[%c1_62, %c0_63, %c0_64] : memref<2x1x128xf32, #tpu.memory_space<vmem>>, vector<1x1x128xf32>
    %76 = vector.shape_cast %75 : vector<1x1x128xf32> to vector<1x128xf32>
    %77 = arith.addf %74, %76 : vector<1x128xf32>
    %cst_65 = arith.constant 0.000000e+00 : f32
    %78 = vector.broadcast %cst_65 : f32 to vector<1x128xf32>
    %79 = arith.maximumf %77, %78 : vector<1x128xf32>
    %80 = arith.truncf %79 : vector<1x128xf32> to vector<1x128xbf16>
    %c1_66 = arith.constant 1 : index
    %c0_67 = arith.constant 0 : index
    %c0_68 = arith.constant 0 : index
    %81 = vector.load %arg12[%c1_66, %c0_67, %c0_68] : memref<2x128x128xbf16, #tpu.memory_space<vmem>>, vector<1x128x128xbf16>
    %82 = vector.shape_cast %81 : vector<1x128x128xbf16> to vector<128x128xbf16>
    %cst_69 = arith.constant dense<0.000000e+00> : vector<1x128xf32>
    %83 = tpu.matmul %80, %82, %cst_69 {dimension_numbers = #tpu.dot_dimension_numbers<[1], [0], [0], [1], [0, 0, 1, 1], [], []>} : vector<1x128xbf16>, vector<128x128xbf16>, vector<1x128xf32> -> vector<1x128xf32>
    %c1_70 = arith.constant 1 : index
    %c0_71 = arith.constant 0 : index
    %c0_72 = arith.constant 0 : index
    %84 = vector.load %arg13[%c1_70, %c0_71, %c0_72] : memref<2x1x128xf32, #tpu.memory_space<vmem>>, vector<1x1x128xf32>
    %85 = vector.shape_cast %84 : vector<1x1x128xf32> to vector<1x128xf32>
    %86 = arith.addf %83, %85 : vector<1x128xf32>
    %cst_73 = arith.constant dense<0xFF800000> : vector<1xf32>
    %87 = vector.multi_reduction <maximumf>, %86, %cst_73 [1] : vector<1x128xf32> to vector<1xf32>
    %88 = vector.shape_cast %87 : vector<1xf32> to vector<1x1xf32>
    %89 = vector.broadcast %88 : vector<1x1xf32> to vector<1x128xf32>
    %90 = arith.subf %86, %89 : vector<1x128xf32>
    %91 = math.exp %90 : vector<1x128xf32>
    %cst_74 = arith.constant dense<0.000000e+00> : vector<1xf32>
    %92 = vector.multi_reduction <add>, %91, %cst_74 [1] : vector<1x128xf32> to vector<1xf32>
    %93 = vector.shape_cast %92 : vector<1xf32> to vector<1x1xf32>
    %94 = tpu.reciprocal %93 {approx = true} : vector<1x1xf32> -> vector<1x1xf32>
    %95 = vector.broadcast %94 : vector<1x1xf32> to vector<1x128xf32>
    %96 = arith.mulf %91, %95 : vector<1x128xf32>
    %c1_75 = arith.constant 1 : index
    %c0_76 = arith.constant 0 : index
    %97 = vector.load %arg14[%c1_75, %c0_76] : memref<2x128xf32, #tpu.memory_space<vmem>>, vector<1x128xf32>
    tpu.vector_store %arg14[%c1_75, %c0_76], %96 {strides = array<i32>} : memref<2x128xf32, #tpu.memory_space<vmem>>, vector<1x128xf32>,
    return
  }
  func.func @transform_0(%arg0: i32, %arg1: memref<2xi32, #tpu.memory_space<smem>>) -> (i32, i32) {
    %c0_i32 = arith.constant 0 : i32
    %c0_i32_0 = arith.constant 0 : i32
    %c0_i32_1 = arith.constant 0 : i32
    return %c0_i32, %c0_i32_0 : i32, i32
  }
  func.func @transform_1(%arg0: i32, %arg1: memref<2xi32, #tpu.memory_space<smem>>) -> (i32, i32) {
    %c0_i32 = arith.constant 0 : i32
    %c0_i32_0 = arith.constant 0 : i32
    %c0_i32_1 = arith.constant 0 : i32
    return %c0_i32, %c0_i32_0 : i32, i32
  }
  func.func @transform_2(%arg0: i32, %arg1: memref<2xi32, #tpu.memory_space<smem>>) -> (i32, i32, i32) {
    %c0_i32 = arith.constant 0 : i32
    %c0_i32_0 = arith.constant 0 : i32
    %c0_i32_1 = arith.constant 0 : i32
    return %arg0, %c0_i32, %c0_i32_0 : i32, i32, i32
  }
  func.func @transform_3(%arg0: i32, %arg1: memref<2xi32, #tpu.memory_space<smem>>) -> (i32, i32, i32) {
    %c0_i32 = arith.constant 0 : i32
    %c0_i32_0 = arith.constant 0 : i32
    %c0_i32_1 = arith.constant 0 : i32
    return %arg0, %c0_i32, %c0_i32_0 : i32, i32, i32
  }
  func.func @transform_4(%arg0: i32, %arg1: memref<2xi32, #tpu.memory_space<smem>>) -> (i32, i32, i32) {
    %c0_i32 = arith.constant 0 : i32
    %c0_i32_0 = arith.constant 0 : i32
    %c0_i32_1 = arith.constant 0 : i32
    return %arg0, %c0_i32, %c0_i32_0 : i32, i32, i32
  }
  func.func @transform_5(%arg0: i32, %arg1: memref<2xi32, #tpu.memory_space<smem>>) -> (i32, i32, i32) {
    %c0_i32 = arith.constant 0 : i32
    %c0_i32_0 = arith.constant 0 : i32
    %c0_i32_1 = arith.constant 0 : i32
    return %arg0, %c0_i32, %c0_i32_0 : i32, i32, i32
  }
  func.func @transform_6(%arg0: i32, %arg1: memref<2xi32, #tpu.memory_space<smem>>) -> (i32, i32, i32) {
    %c0_i32 = arith.constant 0 : i32
    %c0_i32_0 = arith.constant 0 : i32
    %c0_i32_1 = arith.constant 0 : i32
    return %arg0, %c0_i32, %c0_i32_0 : i32, i32, i32
  }
  func.func @transform_7(%arg0: i32, %arg1: memref<2xi32, #tpu.memory_space<smem>>) -> (i32, i32, i32) {
    %c0_i32 = arith.constant 0 : i32
    %c0_i32_0 = arith.constant 0 : i32
    %c0_i32_1 = arith.constant 0 : i32
    return %arg0, %c0_i32, %c0_i32_0 : i32, i32, i32
  }
  func.func @transform_8(%arg0: i32, %arg1: memref<2xi32, #tpu.memory_space<smem>>) -> (i32, i32, i32) {
    %c0_i32 = arith.constant 0 : i32
    %c0_i32_0 = arith.constant 0 : i32
    %c0_i32_1 = arith.constant 0 : i32
    return %arg0, %c0_i32, %c0_i32_0 : i32, i32, i32
  }
  func.func @transform_9(%arg0: i32, %arg1: memref<2xi32, #tpu.memory_space<smem>>) -> (i32, i32, i32) {
    %c0_i32 = arith.constant 0 : i32
    %c0_i32_0 = arith.constant 0 : i32
    %c0_i32_1 = arith.constant 0 : i32
    return %arg0, %c0_i32, %c0_i32_0 : i32, i32, i32
  }
  func.func @transform_10(%arg0: i32, %arg1: memref<2xi32, #tpu.memory_space<smem>>) -> (i32, i32, i32) {
    %c0_i32 = arith.constant 0 : i32
    %c0_i32_0 = arith.constant 0 : i32
    %c0_i32_1 = arith.constant 0 : i32
    return %arg0, %c0_i32, %c0_i32_0 : i32, i32, i32
  }
  func.func @transform_11(%arg0: i32, %arg1: memref<2xi32, #tpu.memory_space<smem>>) -> (i32, i32, i32) {
    %c0_i32 = arith.constant 0 : i32
    %c0_i32_0 = arith.constant 0 : i32
    %c0_i32_1 = arith.constant 0 : i32
    return %arg0, %c0_i32, %c0_i32_0 : i32, i32, i32
  }
  func.func @transform_12(%arg0: i32, %arg1: memref<2xi32, #tpu.memory_space<smem>>) -> (i32, i32) {
    %c0_i32 = arith.constant 0 : i32
    %c0_i32_0 = arith.constant 0 : i32
    return %arg0, %c0_i32 : i32, i32
  }
}

</mosaic_0001>

<llo_original>
// kernel: trackers_forward.1
$region0: #{trackers_forward.1}
  #allocation0 [shape = 'u32[]', space=smem, size = 0x4, offset = 0x4, fixed_abs, tag = 'smem constant byte address 0x4 - core index']
  #allocation1 [shape = 'u32[144,128]{1,0:T(1,128)}', space=vmem, size = 0x12000, scoped, tag = 'internal scratch']
  #allocation2 [shape = 'f32[32,768]{1,0:T(8,128)}', space=vmem, size = 0x18000, scoped, tag = 'scratch operand']
  #allocation3 [shape = 's32[1]{0}', space=sflag, size = 0x4, scoped, tag = 'scoped memory for trackers_forward.1']
  #allocation4 [shape = 'u8[512]{0}', space=smem, size = 0x200, scoped, tag = 'prefetched SMEM operand 0']
  %s0 = inlined_call_operand.hbm [shape: s32[2], index: 0, kind: input, shape index: {}]
  %s1 = inlined_call_operand.hbm [shape: bf16[16,384], index: 1, kind: input, shape index: {}]
  %s2 = inlined_call_operand.hbm [shape: bf16[16,384], index: 2, kind: input, shape index: {}]
  %s3 = inlined_call_operand.hbm [shape: bf16[2,384,384], index: 3, kind: input, shape index: {}]
  %s4 = inlined_call_operand.hbm [shape: bf16[2,384,384], index: 4, kind: input, shape index: {}]
  %s5 = inlined_call_operand.vmem [shape: f32[2,1,384], index: 5, kind: input, shape index: {}]
  %s6 = inlined_call_operand.vmem [shape: f32[2,1,384], index: 6, kind: input, shape index: {}]
  %s7 = inlined_call_operand.hbm [shape: bf16[2,256,768], index: 7, kind: input, shape index: {}]
  %s8 = inlined_call_operand.vmem [shape: f32[2,1,768], index: 8, kind: input, shape index: {}]
  %s9 = inlined_call_operand.hbm [shape: bf16[2,256,128], index: 9, kind: input, shape index: {}]
  %s10 = inlined_call_operand.hbm [shape: f32[2,1,128], index: 10, kind: input, shape index: {}]
  %s11 = inlined_call_operand.hbm [shape: bf16[2,128,128], index: 11, kind: input, shape index: {}]
  %s12 = inlined_call_operand.hbm [shape: f32[2,1,128], index: 12, kind: input, shape index: {}]
  %s13 = inlined_call_operand.hbm [shape: f32[2,128], index: 13, kind: output, shape index: {}]
  %s14 = sld [smem:[#allocation0]]
  $region101: #{trackers_forward.1} parent=0
    _
  %s16 = ssub.s32 1, %s14
  %s17 = scalar_select 0, %s16, %s14
  %19 = dma.hbm_to_smem %s0, 16, [#allocation4], [#allocation3]
  %20 = dma.done [#allocation3], 16
  %21 = sfence
  $region1: #{trackers_forward.1} parent=0
    #allocation5 [shape = 'u8[12288]{0}', space=vmem, size = 0x3000, scoped, tag = 'input window, operand 1, single buffered']
    #allocation6 [shape = 's32[1]{0}', space=sflag, size = 0x4, scoped, tag = 'scoped memory for trackers_forward.1']
    #allocation7 [shape = 's32[1]{0}', space=sflag, size = 0x4, scoped, tag = 'scoped memory for trackers_forward.1']
    #allocation8 [shape = 'u8[12288]{0}', space=vmem, size = 0x3000, scoped, tag = 'input window, operand 2, single buffered']
    #allocation9 [shape = 's32[1]{0}', space=sflag, size = 0x4, scoped, tag = 'scoped memory for trackers_forward.1']
    #allocation10 [shape = 'u8[589824]{0}', space=vmem, size = 0x90000, scoped, tag = 'input window, operand 3, single buffered']
    #allocation11 [shape = 'u8[589824]{0}', space=vmem, size = 0x90000, scoped, tag = 'input window, operand 4, single buffered']
    #allocation12 [shape = 's32[1]{0}', space=sflag, size = 0x4, scoped, tag = 'scoped memory for trackers_forward.1']
    #allocation13 [shape = 'u8[786432]{0}', space=vmem, size = 0xc0000, scoped, tag = 'input window, operand 7, single buffered']
    #allocation14 [shape = 'u8[131072]{0}', space=vmem, size = 0x20000, scoped, tag = 'input window, operand 9, single buffered']
    #allocation15 [shape = 's32[1]{0}', space=sflag, size = 0x4, scoped, tag = 'scoped memory for trackers_forward.1']
    #allocation16 [shape = 'u8[1024]{0}', space=vmem, size = 0x400, scoped, tag = 'input window, operand 10, single buffered']
    #allocation17 [shape = 'u8[65536]{0}', space=vmem, size = 0x10000, scoped, tag = 'input window, operand 11, single buffered']
    #allocation18 [shape = 's32[1]{0}', space=sflag, size = 0x4, scoped, tag = 'scoped memory for trackers_forward.1']
    #allocation19 [shape = 'u8[1024]{0}', space=vmem, size = 0x400, scoped, tag = 'input window, operand 12, single buffered']
    #allocation20 [shape = 'u8[1024]{0}', space=vmem, size = 0x400, scoped, tag = 'output window, operand 0, single buffered']
    %22 = vsyncpa [#allocation6], 0
    %23 = vsyncpa [#allocation9], 0
    %24 = vsyncpa [#allocation12], 0
    %25 = vsyncpa [#allocation15], 0
    %26 = vsyncpa [#allocation18], 0
    %27 = vsyncpa [#allocation7], 0
    // Predicated region
    $region2: #{trackers_forward.1} parent=1 // pred_check
      _
    $region3: #{trackers_forward.1} parent=1 // pred_check_branch
      %29 = sbr.rel (0) target = $region5
    $region4: #{trackers_forward.1} parent=1 // pred_region
      %s31 = ssub.s32 384, 384
      %32 = vsyncadd [#allocation6], %s31
      %s33 = sshll.u32 [#allocation5], 4
      %s34 = int_to_ptr.vmem [resolvable:$true] %s33
      %39 = dma.hbm_to_vmem [thread:$0]  %s1, 384, %s34, [#allocation6], 192, 192, 12
    $region5: #{trackers_forward.1} parent=1 // pred_fallthru
      _
    // Predicated region
    $region6: #{trackers_forward.1} parent=1 // pred_check
      _
    $region7: #{trackers_forward.1} parent=1 // pred_check_branch
      %41 = sbr.rel (0) target = $region9
    $region8: #{trackers_forward.1} parent=1 // pred_region
      %s43 = ssub.s32 384, 384
      %44 = vsyncadd [#allocation9], %s43
      %s45 = sshll.u32 [#allocation8], 4
      %s46 = int_to_ptr.vmem [resolvable:$true] %s45
      %51 = dma.hbm_to_vmem [thread:$0]  %s2, 384, %s46, [#allocation9], 192, 192, 12
    $region9: #{trackers_forward.1} parent=1 // pred_fallthru
      _
    // Predicated region
    $region10: #{trackers_forward.1} parent=1 // pred_check
      _
    $region11: #{trackers_forward.1} parent=1 // pred_check_branch
      %53 = sbr.rel (0) target = $region13
    $region12: #{trackers_forward.1} parent=1 // pred_region
      %s55 = ssub.s32 18432, 18432
      %56 = vsyncadd [#allocation9], %s55
      %s57 = sshll.u32 [#allocation10], 4
      %s58 = int_to_ptr.vmem [resolvable:$true] %s57
      %63 = dma.hbm_to_vmem [thread:$0]  %s3, 18432, %s58, [#allocation9], 192, 192, 12
    $region13: #{trackers_forward.1} parent=1 // pred_fallthru
      _
    // Predicated region
    $region14: #{trackers_forward.1} parent=1 // pred_check
      _
    $region15: #{trackers_forward.1} parent=1 // pred_check_branch
      %65 = sbr.rel (0) target = $region17
    $region16: #{trackers_forward.1} parent=1 // pred_region
      %s67 = ssub.s32 18432, 18432
      %68 = vsyncadd [#allocation12], %s67
      %s69 = sshll.u32 [#allocation11], 4
      %s70 = int_to_ptr.vmem [resolvable:$true] %s69
      %75 = dma.hbm_to_vmem [thread:$0]  %s4, 18432, %s70, [#allocation12], 192, 192, 12
    $region17: #{trackers_forward.1} parent=1 // pred_fallthru
      _
    // Predicated region
    $region18: #{trackers_forward.1} parent=1 // pred_check
      _
    $region19: #{trackers_forward.1} parent=1 // pred_check_branch
      %77 = sbr.rel (0) target = $region21
    $region20: #{trackers_forward.1} parent=1 // pred_region
      _
    $region21: #{trackers_forward.1} parent=1 // pred_fallthru
      _
    // Predicated region
    $region22: #{trackers_forward.1} parent=1 // pred_check
      _
    $region23: #{trackers_forward.1} parent=1 // pred_check_branch
      %79 = sbr.rel (0) target = $region25
    $region24: #{trackers_forward.1} parent=1 // pred_region
      _
    $region25: #{trackers_forward.1} parent=1 // pred_fallthru
      _
    // Predicated region
    $region26: #{trackers_forward.1} parent=1 // pred_check
      _
    $region27: #{trackers_forward.1} parent=1 // pred_check_branch
      %81 = sbr.rel (0) target = $region29
    $region28: #{trackers_forward.1} parent=1 // pred_region
      %s83 = ssub.s32 24576, 24576
      %84 = vsyncadd [#allocation12], %s83
      %s85 = sshll.u32 [#allocation13], 4
      %s86 = int_to_ptr.vmem [resolvable:$true] %s85
      %91 = dma.hbm_to_vmem [thread:$0]  %s7, 24576, %s86, [#allocation12], 384, 384, 24
    $region29: #{trackers_forward.1} parent=1 // pred_fallthru
      _
    // Predicated region
    $region30: #{trackers_forward.1} parent=1 // pred_check
      _
    $region31: #{trackers_forward.1} parent=1 // pred_check_branch
      %93 = sbr.rel (0) target = $region33
    $region32: #{trackers_forward.1} parent=1 // pred_region
      _
    $region33: #{trackers_forward.1} parent=1 // pred_fallthru
      _
    // Predicated region
    $region34: #{trackers_forward.1} parent=1 // pred_check
      _
    $region35: #{trackers_forward.1} parent=1 // pred_check_branch
      %95 = sbr.rel (0) target = $region37
    $region36: #{trackers_forward.1} parent=1 // pred_region
      %s97 = ssub.s32 4096, 4096
      %98 = vsyncadd [#allocation15], %s97
      %s99 = sshll.u32 [#allocation14], 4
      %s100 = int_to_ptr.vmem [resolvable:$true] %s99
      %105 = dma.hbm_to_vmem [thread:$0]  %s9, 4096, %s100, [#allocation15], 64, 64, 4
    $region37: #{trackers_forward.1} parent=1 // pred_fallthru
      _
    // Predicated region
    $region38: #{trackers_forward.1} parent=1 // pred_check
      _
    $region39: #{trackers_forward.1} parent=1 // pred_check_branch
      %107 = sbr.rel (0) target = $region41
    $region40: #{trackers_forward.1} parent=1 // pred_region
      %s109 = ssub.s32 32, 32
      %110 = vsyncadd [#allocation15], %s109
      %s111 = sshll.u32 [#allocation16], 4
      %s112 = int_to_ptr.vmem [resolvable:$true] %s111
      %117 = dma.hbm_to_vmem [thread:$0]  %s10, 32, %s112, [#allocation15], 16, 16, 1
    $region41: #{trackers_forward.1} parent=1 // pred_fallthru
      _
    // Predicated region
    $region42: #{trackers_forward.1} parent=1 // pred_check
      _
    $region43: #{trackers_forward.1} parent=1 // pred_check_branch
      %119 = sbr.rel (0) target = $region45
    $region44: #{trackers_forward.1} parent=1 // pred_region
      %s121 = ssub.s32 2048, 2048
      %122 = vsyncadd [#allocation18], %s121
      %s123 = sshll.u32 [#allocation17], 4
      %s124 = int_to_ptr.vmem [resolvable:$true] %s123
      %129 = dma.hbm_to_vmem [thread:$0]  %s11, 2048, %s124, [#allocation18], 64, 64, 4
    $region45: #{trackers_forward.1} parent=1 // pred_fallthru
      _
    // Predicated region
    $region46: #{trackers_forward.1} parent=1 // pred_check
      _
    $region47: #{trackers_forward.1} parent=1 // pred_check_branch
      %131 = sbr.rel (0) target = $region49
    $region48: #{trackers_forward.1} parent=1 // pred_region
      %s133 = ssub.s32 32, 32
      %134 = vsyncadd [#allocation18], %s133
      %s135 = sshll.u32 [#allocation19], 4
      %s136 = int_to_ptr.vmem [resolvable:$true] %s135
      %141 = dma.hbm_to_vmem [thread:$0]  %s12, 32, %s136, [#allocation18], 16, 16, 1
    $region49: #{trackers_forward.1} parent=1 // pred_fallthru
      _
    // Predicated region
    $region50: #{trackers_forward.1} parent=1 // pred_check
      _
    $region51: #{trackers_forward.1} parent=1 // pred_check_branch
      %143 = sbr.rel (0) target = $region53
    $region52: #{trackers_forward.1} parent=1 // pred_region
      %144 = dma.done [#allocation6], 384
    $region53: #{trackers_forward.1} parent=1 // pred_fallthru
      _
    // Predicated region
    $region54: #{trackers_forward.1} parent=1 // pred_check
      _
    $region55: #{trackers_forward.1} parent=1 // pred_check_branch
      %146 = sbr.rel (0) target = $region57
    $region56: #{trackers_forward.1} parent=1 // pred_region
      %147 = dma.done [#allocation9], 384
    $region57: #{trackers_forward.1} parent=1 // pred_fallthru
      _
    // Predicated region
    $region58: #{trackers_forward.1} parent=1 // pred_check
      _
    $region59: #{trackers_forward.1} parent=1 // pred_check_branch
      %149 = sbr.rel (0) target = $region61
    $region60: #{trackers_forward.1} parent=1 // pred_region
      %150 = dma.done [#allocation9], 18432
    $region61: #{trackers_forward.1} parent=1 // pred_fallthru
      _
    // Predicated region
    $region62: #{trackers_forward.1} parent=1 // pred_check
      _
    $region63: #{trackers_forward.1} parent=1 // pred_check_branch
      %152 = sbr.rel (0) target = $region65
    $region64: #{trackers_forward.1} parent=1 // pred_region
      %153 = dma.done [#allocation12], 18432
    $region65: #{trackers_forward.1} parent=1 // pred_fallthru
      _
    // Predicated region
    $region66: #{trackers_forward.1} parent=1 // pred_check
      _
    $region67: #{trackers_forward.1} parent=1 // pred_check_branch
      %155 = sbr.rel (0) target = $region69
    $region68: #{trackers_forward.1} parent=1 // pred_region
      %156 = dma.done [#allocation12], 24576
    $region69: #{trackers_forward.1} parent=1 // pred_fallthru
      _
    // Predicated region
    $region70: #{trackers_forward.1} parent=1 // pred_check
      _
    $region71: #{trackers_forward.1} parent=1 // pred_check_branch
      %158 = sbr.rel (0) target = $region73
    $region72: #{trackers_forward.1} parent=1 // pred_region
      %159 = dma.done [#allocation15], 4096
    $region73: #{trackers_forward.1} parent=1 // pred_fallthru
      _
    // Predicated region
    $region74: #{trackers_forward.1} parent=1 // pred_check
      _
    $region75: #{trackers_forward.1} parent=1 // pred_check_branch
      %161 = sbr.rel (0) target = $region77
    $region76: #{trackers_forward.1} parent=1 // pred_region
      %162 = dma.done [#allocation15], 32
    $region77: #{trackers_forward.1} parent=1 // pred_fallthru
      _
    // Predicated region
    $region78: #{trackers_forward.1} parent=1 // pred_check
      _
    $region79: #{trackers_forward.1} parent=1 // pred_check_branch
      %164 = sbr.rel (0) target = $region81
    $region80: #{trackers_forward.1} parent=1 // pred_region
      %165 = dma.done [#allocation18], 2048
    $region81: #{trackers_forward.1} parent=1 // pred_fallthru
      _
    // Predicated region
    $region82: #{trackers_forward.1} parent=1 // pred_check
      _
    $region83: #{trackers_forward.1} parent=1 // pred_check_branch
      %167 = sbr.rel (0) target = $region85
    $region84: #{trackers_forward.1} parent=1 // pred_region
      %168 = dma.done [#allocation18], 32
    $region85: #{trackers_forward.1} parent=1 // pred_fallthru
      _
    %s170 = sld [smem:[#allocation4]]
    %s171 = sld [smem:[#allocation4 + $0x1]]
    %p172 = scmp.gt.s32.totalorder %s170, %s171
    %s173 = scalar_select %p172, %s170, %s171
    %v174 = vld [vmem:[#allocation5] sm:$0xff]
    %v175 = vld [vmem:[#allocation5 + $0x8] sm:$0xf]
    %v176 = vld [vmem:[#allocation5 + $0xc] sm:$0xff]
    %v177 = vld [vmem:[#allocation5 + $0x14] sm:$0xf]
    %v178 = vld [vmem:[#allocation8] sm:$0xff]
    %v179 = vld [vmem:[#allocation8 + $0x8] sm:$0xf]
    %v180 = vld [vmem:[#allocation8 + $0xc] sm:$0xff]
    %v181 = vld [vmem:[#allocation8 + $0x14] sm:$0xf]
    %v182 = vld [vmem:[#allocation10] sm:$0xff]
    %v183 = vld [vmem:[#allocation10 + $0x8] sm:$0xf]
    %v184 = vld [vmem:[#allocation10 + $0xc] sm:$0xff]
    %v185 = vld [vmem:[#allocation10 + $0x14] sm:$0xf]
    %v186 = vld [vmem:[#allocation10 + $0x18] sm:$0xff]
    %v187 = vld [vmem:[#allocation10 + $0x20] sm:$0xf]
    %v188 = vld [vmem:[#allocation10 + $0x24] sm:$0xff]
    %v189 = vld [vmem:[#allocation10 + $0x2c] sm:$0xf]
    %v190 = vld [vmem:[#allocation10 + $0x30] sm:$0xff]
    %v191 = vld [vmem:[#allocation10 + $0x38] sm:$0xf]
    %v192 = vld [vmem:[#allocation10 + $0x3c] sm:$0xff]
    %v193 = vld [vmem:[#allocation10 + $0x44] sm:$0xf]
    %v194 = vld [vmem:[#allocation10 + $0x48] sm:$0xff]
    %v195 = vld [vmem:[#allocation10 + $0x50] sm:$0xf]
    %v196 = vld [vmem:[#allocation10 + $0x54] sm:$0xff]
    %v197 = vld [vmem:[#allocation10 + $0x5c] sm:$0xf]
    %v198 = vld [vmem:[#allocation10 + $0x60] sm:$0xff]
    %v199 = vld [vmem:[#allocation10 + $0x68] sm:$0xf]
    %v200 = vld [vmem:[#allocation10 + $0x6c] sm:$0xff]
    %v201 = vld [vmem:[#allocation10 + $0x74] sm:$0xf]
    %v202 = vld [vmem:[#allocation10 + $0x78] sm:$0xff]
    %v203 = vld [vmem:[#allocation10 + $0x80] sm:$0xf]
    %v204 = vld [vmem:[#allocation10 + $0x84] sm:$0xff]
    %v205 = vld [vmem:[#allocation10 + $0x8c] sm:$0xf]
    %v206 = vld [vmem:[#allocation10 + $0x90] sm:$0xff]
    %v207 = vld [vmem:[#allocation10 + $0x98] sm:$0xf]
    %v208 = vld [vmem:[#allocation10 + $0x9c] sm:$0xff]
    %v209 = vld [vmem:[#allocation10 + $0xa4] sm:$0xf]
    %v210 = vld [vmem:[#allocation10 + $0xa8] sm:$0xff]
    %v211 = vld [vmem:[#allocation10 + $0xb0] sm:$0xf]
    %v212 = vld [vmem:[#allocation10 + $0xb4] sm:$0xff]
    %v213 = vld [vmem:[#allocation10 + $0xbc] sm:$0xf]
    %v214 = vld [vmem:[#allocation10 + $0xc0] sm:$0xff]
    %v215 = vld [vmem:[#allocation10 + $0xc8] sm:$0xf]
    %v216 = vld [vmem:[#allocation10 + $0xcc] sm:$0xff]
    %v217 = vld [vmem:[#allocation10 + $0xd4] sm:$0xf]
    %v218 = vld [vmem:[#allocation10 + $0xd8] sm:$0xff]
    %v219 = vld [vmem:[#allocation10 + $0xe0] sm:$0xf]
    %v220 = vld [vmem:[#allocation10 + $0xe4] sm:$0xff]
    %v221 = vld [vmem:[#allocation10 + $0xec] sm:$0xf]
    %v222 = vld [vmem:[#allocation10 + $0xf0] sm:$0xff]
    %v223 = vld [vmem:[#allocation10 + $0xf8] sm:$0xf]
    %v224 = vld [vmem:[#allocation10 + $0xfc] sm:$0xff]
    %v225 = vld [vmem:[#allocation10 + $0x104] sm:$0xf]
    %v226 = vld [vmem:[#allocation10 + $0x108] sm:$0xff]
    %v227 = vld [vmem:[#allocation10 + $0x110] sm:$0xf]
    %v228 = vld [vmem:[#allocation10 + $0x114] sm:$0xff]
    %v229 = vld [vmem:[#allocation10 + $0x11c] sm:$0xf]
    %v230 = vld [vmem:[#allocation10 + $0x120] sm:$0xff]
    %v231 = vld [vmem:[#allocation10 + $0x128] sm:$0xf]
    %v232 = vld [vmem:[#allocation10 + $0x12c] sm:$0xff]
    %v233 = vld [vmem:[#allocation10 + $0x134] sm:$0xf]
    %v234 = vld [vmem:[#allocation10 + $0x138] sm:$0xff]
    %v235 = vld [vmem:[#allocation10 + $0x140] sm:$0xf]
    %v236 = vld [vmem:[#allocation10 + $0x144] sm:$0xff]
    %v237 = vld [vmem:[#allocation10 + $0x14c] sm:$0xf]
    %v238 = vld [vmem:[#allocation10 + $0x150] sm:$0xff]
    %v239 = vld [vmem:[#allocation10 + $0x158] sm:$0xf]
    %v240 = vld [vmem:[#allocation10 + $0x15c] sm:$0xff]
    %v241 = vld [vmem:[#allocation10 + $0x164] sm:$0xf]
    %v242 = vld [vmem:[#allocation10 + $0x168] sm:$0xff]
    %v243 = vld [vmem:[#allocation10 + $0x170] sm:$0xf]
    %v244 = vld [vmem:[#allocation10 + $0x174] sm:$0xff]
    %v245 = vld [vmem:[#allocation10 + $0x17c] sm:$0xf]
    %v246 = vld [vmem:[#allocation10 + $0x180] sm:$0xff]
    %v247 = vld [vmem:[#allocation10 + $0x188] sm:$0xf]
    %v248 = vld [vmem:[#allocation10 + $0x18c] sm:$0xff]
    %v249 = vld [vmem:[#allocation10 + $0x194] sm:$0xf]
    %v250 = vld [vmem:[#allocation10 + $0x198] sm:$0xff]
    %v251 = vld [vmem:[#allocation10 + $0x1a0] sm:$0xf]
    %v252 = vld [vmem:[#allocation10 + $0x1a4] sm:$0xff]
    %v253 = vld [vmem:[#allocation10 + $0x1ac] sm:$0xf]
    %v254 = vld [vmem:[#allocation10 + $0x1b0] sm:$0xff]
    %v255 = vld [vmem:[#allocation10 + $0x1b8] sm:$0xf]
    %v256 = vld [vmem:[#allocation10 + $0x1bc] sm:$0xff]
    %v257 = vld [vmem:[#allocation10 + $0x1c4] sm:$0xf]
    %v258 = vld [vmem:[#allocation10 + $0x1c8] sm:$0xff]
    %v259 = vld [vmem:[#allocation10 + $0x1d0] sm:$0xf]
    %v260 = vld [vmem:[#allocation10 + $0x1d4] sm:$0xff]
    %v261 = vld [vmem:[#allocation10 + $0x1dc] sm:$0xf]
    %v262 = vld [vmem:[#allocation10 + $0x1e0] sm:$0xff]
    %v263 = vld [vmem:[#allocation10 + $0x1e8] sm:$0xf]
    %v264 = vld [vmem:[#allocation10 + $0x1ec] sm:$0xff]
    %v265 = vld [vmem:[#allocation10 + $0x1f4] sm:$0xf]
    %v266 = vld [vmem:[#allocation10 + $0x1f8] sm:$0xff]
    %v267 = vld [vmem:[#allocation10 + $0x200] sm:$0xf]
    %v268 = vld [vmem:[#allocation10 + $0x204] sm:$0xff]
    %v269 = vld [vmem:[#allocation10 + $0x20c] sm:$0xf]
    %v270 = vld [vmem:[#allocation10 + $0x210] sm:$0xff]
    %v271 = vld [vmem:[#allocation10 + $0x218] sm:$0xf]
    %v272 = vld [vmem:[#allocation10 + $0x21c] sm:$0xff]
    %v273 = vld [vmem:[#allocation10 + $0x224] sm:$0xf]
    %v274 = vld [vmem:[#allocation10 + $0x228] sm:$0xff]
    %v275 = vld [vmem:[#allocation10 + $0x230] sm:$0xf]
    %v276 = vld [vmem:[#allocation10 + $0x234] sm:$0xff]
    %v277 = vld [vmem:[#allocation10 + $0x23c] sm:$0xf]
    %v278 = vld [vmem:[%s5] sm:$0x7]
    %v280 = vlaneseq
    %v281 = vshrl.u32 %v280, 7
    %v282 = vsub.s32 0, %v281
    %v283 = vrot.slane %v278, %v282
    %v284 = vlaneseq
    %v285 = vshrl.u32 %v284, 7
    %v286 = vsub.s32 1, %v285
    %v287 = vrot.slane %v278, %v286
    %v288 = vlaneseq
    %v289 = vshrl.u32 %v288, 7
    %v290 = vsub.s32 2, %v289
    %v291 = vrot.slane %v278, %v290
    %v299 = vunpack.c.l.b16 %v174
    %v300 = vunpack.c.h.b16 %v174
    %v301 = vunpack.c.l.b16 %v175
    %v302 = vunpack.c.l.b16 %v176
    %v303 = vunpack.c.h.b16 %v176
    %v304 = vunpack.c.l.b16 %v177
    %v305 = vpack.c.b16 %v302, %v299
    %v306 = vpack.c.b16 %v303, %v300
    %v307 = vpack.c.b16 %v304, %v301
    %v407 = vunpack.c.l.b16 %v182
    %v408 = vunpack.c.h.b16 %v182
    %v409 = vunpack.c.l.b16 %v183
    %v410 = vunpack.c.l.b16 %v184
    %v411 = vunpack.c.h.b16 %v184
    %v412 = vunpack.c.l.b16 %v185
    %v413 = vunpack.c.l.b16 %v186
    %v414 = vunpack.c.h.b16 %v186
    %v415 = vunpack.c.l.b16 %v187
    %v416 = vunpack.c.l.b16 %v188
    %v417 = vunpack.c.h.b16 %v188
    %v418 = vunpack.c.l.b16 %v189
    %v419 = vunpack.c.l.b16 %v190
    %v420 = vunpack.c.h.b16 %v190
    %v421 = vunpack.c.l.b16 %v191
    %v422 = vunpack.c.l.b16 %v192
    %v423 = vunpack.c.h.b16 %v192
    %v424 = vunpack.c.l.b16 %v193
    %v425 = vunpack.c.l.b16 %v194
    %v426 = vunpack.c.h.b16 %v194
    %v427 = vunpack.c.l.b16 %v195
    %v428 = vunpack.c.l.b16 %v196
    %v429 = vunpack.c.h.b16 %v196
    %v430 = vunpack.c.l.b16 %v197
    %v431 = vunpack.c.l.b16 %v198
    %v432 = vunpack.c.h.b16 %v198
    %v433 = vunpack.c.l.b16 %v199
    %v434 = vunpack.c.l.b16 %v200
    %v435 = vunpack.c.h.b16 %v200
    %v436 = vunpack.c.l.b16 %v201
    %v437 = vunpack.c.l.b16 %v202
    %v438 = vunpack.c.h.b16 %v202
    %v439 = vunpack.c.l.b16 %v203
    %v440 = vunpack.c.l.b16 %v204
    %v441 = vunpack.c.h.b16 %v204
    %v442 = vunpack.c.l.b16 %v205
    %v443 = vunpack.c.l.b16 %v206
    %v444 = vunpack.c.h.b16 %v206
    %v445 = vunpack.c.l.b16 %v207
    %v446 = vunpack.c.l.b16 %v208
    %v447 = vunpack.c.h.b16 %v208
    %v448 = vunpack.c.l.b16 %v209
    %v449 = vunpack.c.l.b16 %v210
    %v450 = vunpack.c.h.b16 %v210
    %v451 = vunpack.c.l.b16 %v211
    %v452 = vunpack.c.l.b16 %v212
    %v453 = vunpack.c.h.b16 %v212
    %v454 = vunpack.c.l.b16 %v213
    %v455 = vunpack.c.l.b16 %v214
    %v456 = vunpack.c.h.b16 %v214
    %v457 = vunpack.c.l.b16 %v215
    %v458 = vunpack.c.l.b16 %v216
    %v459 = vunpack.c.h.b16 %v216
    %v460 = vunpack.c.l.b16 %v217
    %v461 = vunpack.c.l.b16 %v218
    %v462 = vunpack.c.h.b16 %v218
    %v463 = vunpack.c.l.b16 %v219
    %v464 = vunpack.c.l.b16 %v220
    %v465 = vunpack.c.h.b16 %v220
    %v466 = vunpack.c.l.b16 %v221
    %v467 = vunpack.c.l.b16 %v222
    %v468 = vunpack.c.h.b16 %v222
    %v469 = vunpack.c.l.b16 %v223
    %v470 = vunpack.c.l.b16 %v224
    %v471 = vunpack.c.h.b16 %v224
    %v472 = vunpack.c.l.b16 %v225
    %v473 = vunpack.c.l.b16 %v226
    %v474 = vunpack.c.h.b16 %v226
    %v475 = vunpack.c.l.b16 %v227
    %v476 = vunpack.c.l.b16 %v228
    %v477 = vunpack.c.h.b16 %v228
    %v478 = vunpack.c.l.b16 %v229
    %v479 = vunpack.c.l.b16 %v230
    %v480 = vunpack.c.h.b16 %v230
    %v481 = vunpack.c.l.b16 %v231
    %v482 = vunpack.c.l.b16 %v232
    %v483 = vunpack.c.h.b16 %v232
    %v484 = vunpack.c.l.b16 %v233
    %v485 = vunpack.c.l.b16 %v234
    %v486 = vunpack.c.h.b16 %v234
    %v487 = vunpack.c.l.b16 %v235
    %v488 = vunpack.c.l.b16 %v236
    %v489 = vunpack.c.h.b16 %v236
    %v490 = vunpack.c.l.b16 %v237
    %v491 = vunpack.c.l.b16 %v238
    %v492 = vunpack.c.h.b16 %v238
    %v493 = vunpack.c.l.b16 %v239
    %v494 = vunpack.c.l.b16 %v240
    %v495 = vunpack.c.h.b16 %v240
    %v496 = vunpack.c.l.b16 %v241
    %v497 = vunpack.c.l.b16 %v242
    %v498 = vunpack.c.h.b16 %v242
    %v499 = vunpack.c.l.b16 %v243
    %v500 = vunpack.c.l.b16 %v244
    %v501 = vunpack.c.h.b16 %v244
    %v502 = vunpack.c.l.b16 %v245
    %v503 = vunpack.c.l.b16 %v246
    %v504 = vunpack.c.h.b16 %v246
    %v505 = vunpack.c.l.b16 %v247
    %v506 = vunpack.c.l.b16 %v248
    %v507 = vunpack.c.h.b16 %v248
    %v508 = vunpack.c.l.b16 %v249
    %v509 = vunpack.c.l.b16 %v250
    %v510 = vunpack.c.h.b16 %v250
    %v511 = vunpack.c.l.b16 %v251
    %v512 = vunpack.c.l.b16 %v252
    %v513 = vunpack.c.h.b16 %v252
    %v514 = vunpack.c.l.b16 %v253
    %v515 = vunpack.c.l.b16 %v254
    %v516 = vunpack.c.h.b16 %v254
    %v517 = vunpack.c.l.b16 %v255
    %v518 = vunpack.c.l.b16 %v256
    %v519 = vunpack.c.h.b16 %v256
    %v520 = vunpack.c.l.b16 %v257
    %v521 = vunpack.c.l.b16 %v258
    %v522 = vunpack.c.h.b16 %v258
    %v523 = vunpack.c.l.b16 %v259
    %v524 = vunpack.c.l.b16 %v260
    %v525 = vunpack.c.h.b16 %v260
    %v526 = vunpack.c.l.b16 %v261
    %v527 = vunpack.c.l.b16 %v262
    %v528 = vunpack.c.h.b16 %v262
    %v529 = vunpack.c.l.b16 %v263
    %v530 = vunpack.c.l.b16 %v264
    %v531 = vunpack.c.h.b16 %v264
    %v532 = vunpack.c.l.b16 %v265
    %v533 = vunpack.c.l.b16 %v266
    %v534 = vunpack.c.h.b16 %v266
    %v535 = vunpack.c.l.b16 %v267
    %v536 = vunpack.c.l.b16 %v268
    %v537 = vunpack.c.h.b16 %v268
    %v538 = vunpack.c.l.b16 %v269
    %v539 = vunpack.c.l.b16 %v270
    %v540 = vunpack.c.h.b16 %v270
    %v541 = vunpack.c.l.b16 %v271
    %v542 = vunpack.c.l.b16 %v272
    %v543 = vunpack.c.h.b16 %v272
    %v544 = vunpack.c.l.b16 %v273
    %v545 = vunpack.c.l.b16 %v274
    %v546 = vunpack.c.h.b16 %v274
    %v547 = vunpack.c.l.b16 %v275
    %v548 = vunpack.c.l.b16 %v276
    %v549 = vunpack.c.h.b16 %v276
    %v550 = vunpack.c.l.b16 %v277
    %v551 = vpack.c.b16 %v410, %v407
    %v552 = vpack.c.b16 %v411, %v408
    %v553 = vpack.c.b16 %v412, %v409
    %v554 = vpack.c.b16 %v416, %v413
    %v555 = vpack.c.b16 %v417, %v414
    %v556 = vpack.c.b16 %v418, %v415
    %v557 = vpack.c.b16 %v422, %v419
    %v558 = vpack.c.b16 %v423, %v420
    %v559 = vpack.c.b16 %v424, %v421
    %v560 = vpack.c.b16 %v428, %v425
    %v561 = vpack.c.b16 %v429, %v426
    %v562 = vpack.c.b16 %v430, %v427
    %v563 = vpack.c.b16 %v434, %v431
    %v564 = vpack.c.b16 %v435, %v432
    %v565 = vpack.c.b16 %v436, %v433
    %v566 = vpack.c.b16 %v440, %v437
    %v567 = vpack.c.b16 %v441, %v438
    %v568 = vpack.c.b16 %v442, %v439
    %v569 = vpack.c.b16 %v446, %v443
    %v570 = vpack.c.b16 %v447, %v444
    %v571 = vpack.c.b16 %v448, %v445
    %v572 = vpack.c.b16 %v452, %v449
    %v573 = vpack.c.b16 %v453, %v450
    %v574 = vpack.c.b16 %v454, %v451
    %v575 = vpack.c.b16 %v458, %v455
    %v576 = vpack.c.b16 %v459, %v456
    %v577 = vpack.c.b16 %v460, %v457
    %v578 = vpack.c.b16 %v464, %v461
    %v579 = vpack.c.b16 %v465, %v462
    %v580 = vpack.c.b16 %v466, %v463
    %v581 = vpack.c.b16 %v470, %v467
    %v582 = vpack.c.b16 %v471, %v468
    %v583 = vpack.c.b16 %v472, %v469
    %v584 = vpack.c.b16 %v476, %v473
    %v585 = vpack.c.b16 %v477, %v474
    %v586 = vpack.c.b16 %v478, %v475
    %v587 = vpack.c.b16 %v482, %v479
    %v588 = vpack.c.b16 %v483, %v480
    %v589 = vpack.c.b16 %v484, %v481
    %v590 = vpack.c.b16 %v488, %v485
    %v591 = vpack.c.b16 %v489, %v486
    %v592 = vpack.c.b16 %v490, %v487
    %v593 = vpack.c.b16 %v494, %v491
    %v594 = vpack.c.b16 %v495, %v492
    %v595 = vpack.c.b16 %v496, %v493
    %v596 = vpack.c.b16 %v500, %v497
    %v597 = vpack.c.b16 %v501, %v498
    %v598 = vpack.c.b16 %v502, %v499
    %v599 = vpack.c.b16 %v506, %v503
    %v600 = vpack.c.b16 %v507, %v504
    %v601 = vpack.c.b16 %v508, %v505
    %v602 = vpack.c.b16 %v512, %v509
    %v603 = vpack.c.b16 %v513, %v510
    %v604 = vpack.c.b16 %v514, %v511
    %v605 = vpack.c.b16 %v518, %v515
    %v606 = vpack.c.b16 %v519, %v516
    %v607 = vpack.c.b16 %v520, %v517
    %v608 = vpack.c.b16 %v524, %v521
    %v609 = vpack.c.b16 %v525, %v522
    %v610 = vpack.c.b16 %v526, %v523
    %v611 = vpack.c.b16 %v530, %v527
    %v612 = vpack.c.b16 %v531, %v528
    %v613 = vpack.c.b16 %v532, %v529
    %v614 = vpack.c.b16 %v536, %v533
    %v615 = vpack.c.b16 %v537, %v534
    %v616 = vpack.c.b16 %v538, %v535
    %v617 = vpack.c.b16 %v542, %v539
    %v618 = vpack.c.b16 %v543, %v540
    %v619 = vpack.c.b16 %v544, %v541
    %v620 = vpack.c.b16 %v548, %v545
    %v621 = vpack.c.b16 %v549, %v546
    %v622 = vpack.c.b16 %v550, %v547
    %695 = vmatprep.subr.bf16.mxu0 %v552
    %696 = vmatpush1.bf16.msra.mxu0 %v551
    %697 = vmatprep.subr.bf16.mxu0 %v555
    %698 = vmatpush1.bf16.msra.mxu0 %v554
    %699 = vmatprep.subr.bf16.mxu0 %v558
    %700 = vmatpush1.bf16.msra.mxu0 %v557
    %701 = vmatprep.subr.bf16.mxu0 %v561
    %702 = vmatpush1.bf16.msra.mxu0 %v560
    %703 = vmatprep.subr.bf16.mxu0 %v564
    %704 = vmatpush1.bf16.msra.mxu0 %v563
    %705 = vmatprep.subr.bf16.mxu0 %v567
    %706 = vmatpush1.bf16.msra.mxu0 %v566
    %707 = vmatprep.subr.bf16.mxu0 %v570
    %708 = vmatpush1.bf16.msra.mxu0 %v569
    %709 = vmatprep.subr.bf16.mxu0 %v573
    %710 = vmatpush1.bf16.msra.mxu0 %v572
    %711 = vmatprep.subr.bf16.mxu0 %v576
    %712 = vmatpush1.bf16.msra.mxu0 %v575
    %713 = vmatprep.subr.bf16.mxu0 %v579
    %714 = vmatpush1.bf16.msra.mxu0 %v578
    %715 = vmatprep.subr.bf16.mxu0 %v582
    %716 = vmatpush1.bf16.msra.mxu0 %v581
    %717 = vmatprep.subr.bf16.mxu0 %v585
    %718 = vmatpush1.bf16.msra.mxu0 %v584
    %719 = vmatprep.subr.bf16.mxu0 %v588
    %720 = vmatpush1.bf16.msra.mxu0 %v587
    %721 = vmatprep.subr.bf16.mxu0 %v591
    %722 = vmatpush1.bf16.msra.mxu0 %v590
    %723 = vmatprep.subr.bf16.mxu0 %v594
    %724 = vmatpush1.bf16.msra.mxu0 %v593
    %725 = vmatprep.subr.bf16.mxu0 %v597
    %726 = vmatpush1.bf16.msra.mxu0 %v596
    %727 = vmatprep.mubr.bf16.mxu0 %v306
    %728 = vmatmul.mubr.bf16.gmra.mrb[0].mxu0 %v305
    %v729 = vpop.f32.mrb[0].mxu0
    %v730 = vadd.f32 %v283, %v729
    %v731 = vpop.f32.mrb[0].mxu0
    %v732 = vadd.f32 %v287, %v731
    %v733 = vpop.f32.mrb[0].mxu0
    %v734 = vadd.f32 %v283, %v733
    %v735 = vpop.f32.mrb[0].mxu0
    %v736 = vadd.f32 %v287, %v735
    %737 = vdwg.mxu0
    %738 = vmatprep.subr.bf16.mxu0 %v600
    %739 = vmatpush1.bf16.msra.mxu0 %v599
    %740 = vmatprep.subr.bf16.mxu0 %v603
    %741 = vmatpush1.bf16.msra.mxu0 %v602
    %742 = vmatprep.subr.bf16.mxu0 %v606
    %743 = vmatpush1.bf16.msra.mxu0 %v605
    %744 = vmatprep.subr.bf16.mxu0 %v609
    %745 = vmatpush1.bf16.msra.mxu0 %v608
    %746 = vmatprep.subr.bf16.mxu0 %v612
    %747 = vmatpush1.bf16.msra.mxu0 %v611
    %748 = vmatprep.subr.bf16.mxu0 %v615
    %749 = vmatpush1.bf16.msra.mxu0 %v614
    %750 = vmatprep.subr.bf16.mxu0 %v618
    %751 = vmatpush1.bf16.msra.mxu0 %v617
    %752 = vmatprep.subr.bf16.mxu0 %v621
    %753 = vmatpush1.bf16.msra.mxu0 %v620
    %754 = vmatprep.subr.bf16.mxu0 0
    %755 = vmatpush1.bf16.msra.mxu0 0
    %756 = vmatprep.subr.bf16.mxu0 0
    %757 = vmatpush1.bf16.msra.mxu0 0
    %758 = vmatprep.subr.bf16.mxu0 0
    %759 = vmatpush1.bf16.msra.mxu0 0
    %760 = vmatprep.subr.bf16.mxu0 0
    %761 = vmatpush1.bf16.msra.mxu0 0
    %762 = vmatprep.subr.bf16.mxu0 0
    %763 = vmatpush1.bf16.msra.mxu0 0
    %764 = vmatprep.subr.bf16.mxu0 0
    %765 = vmatpush1.bf16.msra.mxu0 0
    %766 = vmatprep.subr.bf16.mxu0 0
    %767 = vmatpush1.bf16.msra.mxu0 0
    %768 = vmatprep.subr.bf16.mxu0 0
    %769 = vmatpush1.bf16.msra.mxu0 0
    %770 = vmatprep.mubr.bf16.mxu0 0
    %771 = vmatmul.mubr.bf16.gmra.mrb[0].mxu0 %v307
    %v772 = vpop.f32.mrb[0].mxu0
    %v773 = vadd.f32 %v730, %v772
    %v774 = vpop.f32.mrb[0].mxu0
    %v775 = vadd.f32 %v732, %v774
    %v776 = vpop.f32.mrb[0].mxu0
    %v777 = vadd.f32 %v734, %v776
    %v778 = vpop.f32.mrb[0].mxu0
    %v779 = vadd.f32 %v736, %v778
    %780 = vdwg.mxu0
    %781 = vmatprep.subr.bf16.mxu0 0
    %782 = vmatpush1.bf16.msra.mxu0 %v553
    %783 = vmatprep.subr.bf16.mxu0 0
    %784 = vmatpush1.bf16.msra.mxu0 %v556
    %785 = vmatprep.subr.bf16.mxu0 0
    %786 = vmatpush1.bf16.msra.mxu0 %v559
    %787 = vmatprep.subr.bf16.mxu0 0
    %788 = vmatpush1.bf16.msra.mxu0 %v562
    %789 = vmatprep.subr.bf16.mxu0 0
    %790 = vmatpush1.bf16.msra.mxu0 %v565
    %791 = vmatprep.subr.bf16.mxu0 0
    %792 = vmatpush1.bf16.msra.mxu0 %v568
    %793 = vmatprep.subr.bf16.mxu0 0
    %794 = vmatpush1.bf16.msra.mxu0 %v571
    %795 = vmatprep.subr.bf16.mxu0 0
    %796 = vmatpush1.bf16.msra.mxu0 %v574
    %797 = vmatprep.subr.bf16.mxu0 0
    %798 = vmatpush1.bf16.msra.mxu0 %v577
    %799 = vmatprep.subr.bf16.mxu0 0
    %800 = vmatpush1.bf16.msra.mxu0 %v580
    %801 = vmatprep.subr.bf16.mxu0 0
    %802 = vmatpush1.bf16.msra.mxu0 %v583
    %803 = vmatprep.subr.bf16.mxu0 0
    %804 = vmatpush1.bf16.msra.mxu0 %v586
    %805 = vmatprep.subr.bf16.mxu0 0
    %806 = vmatpush1.bf16.msra.mxu0 %v589
    %807 = vmatprep.subr.bf16.mxu0 0
    %808 = vmatpush1.bf16.msra.mxu0 %v592
    %809 = vmatprep.subr.bf16.mxu0 0
    %810 = vmatpush1.bf16.msra.mxu0 %v595
    %811 = vmatprep.subr.bf16.mxu0 0
    %812 = vmatpush1.bf16.msra.mxu0 %v598
    %813 = vmatprep.mubr.bf16.mxu0 %v306
    %814 = vmatmul.mubr.bf16.gmra.mrb[0].mxu0 %v305
    %v815 = vpop.f32.mrb[0].mxu0
    %v816 = vadd.f32 %v291, %v815
    %v817 = vpop.f32.mrb[0].mxu0
    %v818 = vpop.f32.mrb[0].mxu0
    %v819 = vadd.f32 %v291, %v818
    %v820 = vpop.f32.mrb[0].mxu0
    %821 = vdwg.mxu0
    %822 = vmatprep.subr.bf16.mxu0 0
    %823 = vmatpush1.bf16.msra.mxu0 %v601
    %824 = vmatprep.subr.bf16.mxu0 0
    %825 = vmatpush1.bf16.msra.mxu0 %v604
    %826 = vmatprep.subr.bf16.mxu0 0
    %827 = vmatpush1.bf16.msra.mxu0 %v607
    %828 = vmatprep.subr.bf16.mxu0 0
    %829 = vmatpush1.bf16.msra.mxu0 %v610
    %830 = vmatprep.subr.bf16.mxu0 0
    %831 = vmatpush1.bf16.msra.mxu0 %v613
    %832 = vmatprep.subr.bf16.mxu0 0
    %833 = vmatpush1.bf16.msra.mxu0 %v616
    %834 = vmatprep.subr.bf16.mxu0 0
    %835 = vmatpush1.bf16.msra.mxu0 %v619
    %836 = vmatprep.subr.bf16.mxu0 0
    %837 = vmatpush1.bf16.msra.mxu0 %v622
    %838 = vmatprep.subr.bf16.mxu0 0
    %839 = vmatpush1.bf16.msra.mxu0 0
    %840 = vmatprep.subr.bf16.mxu0 0
    %841 = vmatpush1.bf16.msra.mxu0 0
    %842 = vmatprep.subr.bf16.mxu0 0
    %843 = vmatpush1.bf16.msra.mxu0 0
    %844 = vmatprep.subr.bf16.mxu0 0
    %845 = vmatpush1.bf16.msra.mxu0 0
    %846 = vmatprep.subr.bf16.mxu0 0
    %847 = vmatpush1.bf16.msra.mxu0 0
    %848 = vmatprep.subr.bf16.mxu0 0
    %849 = vmatpush1.bf16.msra.mxu0 0
    %850 = vmatprep.subr.bf16.mxu0 0
    %851 = vmatpush1.bf16.msra.mxu0 0
    %852 = vmatprep.subr.bf16.mxu0 0
    %853 = vmatpush1.bf16.msra.mxu0 0
    %854 = vmatprep.mubr.bf16.mxu0 0
    %855 = vmatmul.mubr.bf16.gmra.mrb[0].mxu0 %v307
    %v856 = vpop.f32.mrb[0].mxu0
    %v857 = vadd.f32 %v816, %v856
    %v858 = vpop.f32.mrb[0].mxu0
    %v859 = vpop.f32.mrb[0].mxu0
    %v860 = vadd.f32 %v819, %v859
    %v861 = vpop.f32.mrb[0].mxu0
    %862 = vdwg.mxu0
    %863 = vst [vmem:[#allocation2] sm:$0xff] %v773
    %864 = vst [vmem:[#allocation2 + $0x8] sm:$0xff] %v775
    %865 = vst [vmem:[#allocation2 + $0x10] sm:$0xff] %v857
    %866 = vst [vmem:[#allocation2 + $0x30] sm:$0xff] %v777
    %867 = vst [vmem:[#allocation2 + $0x38] sm:$0xff] %v779
    %868 = vst [vmem:[#allocation2 + $0x40] sm:$0xff] %v860
    %v869 = vld [vmem:[#allocation11] sm:$0xff]
    %v870 = vld [vmem:[#allocation11 + $0x8] sm:$0xf]
    %v871 = vld [vmem:[#allocation11 + $0xc] sm:$0xff]
    %v872 = vld [vmem:[#allocation11 + $0x14] sm:$0xf]
    %v873 = vld [vmem:[#allocation11 + $0x18] sm:$0xff]
    %v874 = vld [vmem:[#allocation11 + $0x20] sm:$0xf]
    %v875 = vld [vmem:[#allocation11 + $0x24] sm:$0xff]
    %v876 = vld [vmem:[#allocation11 + $0x2c] sm:$0xf]
    %v877 = vld [vmem:[#allocation11 + $0x30] sm:$0xff]
    %v878 = vld [vmem:[#allocation11 + $0x38] sm:$0xf]
    %v879 = vld [vmem:[#allocation11 + $0x3c] sm:$0xff]
    %v880 = vld [vmem:[#allocation11 + $0x44] sm:$0xf]
    %v881 = vld [vmem:[#allocation11 + $0x48] sm:$0xff]
    %v882 = vld [vmem:[#allocation11 + $0x50] sm:$0xf]
    %v883 = vld [vmem:[#allocation11 + $0x54] sm:$0xff]
    %v884 = vld [vmem:[#allocation11 + $0x5c] sm:$0xf]
    %v885 = vld [vmem:[#allocation11 + $0x60] sm:$0xff]
    %v886 = vld [vmem:[#allocation11 + $0x68] sm:$0xf]
    %v887 = vld [vmem:[#allocation11 + $0x6c] sm:$0xff]
    %v888 = vld [vmem:[#allocation11 + $0x74] sm:$0xf]
    %v889 = vld [vmem:[#allocation11 + $0x78] sm:$0xff]
    %v890 = vld [vmem:[#allocation11 + $0x80] sm:$0xf]
    %v891 = vld [vmem:[#allocation11 + $0x84] sm:$0xff]
    %v892 = vld [vmem:[#allocation11 + $0x8c] sm:$0xf]
    %v893 = vld [vmem:[#allocation11 + $0x90] sm:$0xff]
    %v894 = vld [vmem:[#allocation11 + $0x98] sm:$0xf]
    %v895 = vld [vmem:[#allocation11 + $0x9c] sm:$0xff]
    %v896 = vld [vmem:[#allocation11 + $0xa4] sm:$0xf]
    %v897 = vld [vmem:[#allocation11 + $0xa8] sm:$0xff]
    %v898 = vld [vmem:[#allocation11 + $0xb0] sm:$0xf]
    %v899 = vld [vmem:[#allocation11 + $0xb4] sm:$0xff]
    %v900 = vld [vmem:[#allocation11 + $0xbc] sm:$0xf]
    %v901 = vld [vmem:[#allocation11 + $0xc0] sm:$0xff]
    %v902 = vld [vmem:[#allocation11 + $0xc8] sm:$0xf]
    %v903 = vld [vmem:[#allocation11 + $0xcc] sm:$0xff]
    %v904 = vld [vmem:[#allocation11 + $0xd4] sm:$0xf]
    %v905 = vld [vmem:[#allocation11 + $0xd8] sm:$0xff]
    %v906 = vld [vmem:[#allocation11 + $0xe0] sm:$0xf]
    %v907 = vld [vmem:[#allocation11 + $0xe4] sm:$0xff]
    %v908 = vld [vmem:[#allocation11 + $0xec] sm:$0xf]
    %v909 = vld [vmem:[#allocation11 + $0xf0] sm:$0xff]
    %v910 = vld [vmem:[#allocation11 + $0xf8] sm:$0xf]
    %v911 = vld [vmem:[#allocation11 + $0xfc] sm:$0xff]
    %v912 = vld [vmem:[#allocation11 + $0x104] sm:$0xf]
    %v913 = vld [vmem:[#allocation11 + $0x108] sm:$0xff]
    %v914 = vld [vmem:[#allocation11 + $0x110] sm:$0xf]
    %v915 = vld [vmem:[#allocation11 + $0x114] sm:$0xff]
    %v916 = vld [vmem:[#allocation11 + $0x11c] sm:$0xf]
    %v917 = vld [vmem:[#allocation11 + $0x120] sm:$0xff]
    %v918 = vld [vmem:[#allocation11 + $0x128] sm:$0xf]
    %v919 = vld [vmem:[#allocation11 + $0x12c] sm:$0xff]
    %v920 = vld [vmem:[#allocation11 + $0x134] sm:$0xf]
    %v921 = vld [vmem:[#allocation11 + $0x138] sm:$0xff]
    %v922 = vld [vmem:[#allocation11 + $0x140] sm:$0xf]
    %v923 = vld [vmem:[#allocation11 + $0x144] sm:$0xff]
    %v924 = vld [vmem:[#allocation11 + $0x14c] sm:$0xf]
    %v925 = vld [vmem:[#allocation11 + $0x150] sm:$0xff]
    %v926 = vld [vmem:[#allocation11 + $0x158] sm:$0xf]
    %v927 = vld [vmem:[#allocation11 + $0x15c] sm:$0xff]
    %v928 = vld [vmem:[#allocation11 + $0x164] sm:$0xf]
    %v929 = vld [vmem:[#allocation11 + $0x168] sm:$0xff]
    %v930 = vld [vmem:[#allocation11 + $0x170] sm:$0xf]
    %v931 = vld [vmem:[#allocation11 + $0x174] sm:$0xff]
    %v932 = vld [vmem:[#allocation11 + $0x17c] sm:$0xf]
    %v933 = vld [vmem:[#allocation11 + $0x180] sm:$0xff]
    %v934 = vld [vmem:[#allocation11 + $0x188] sm:$0xf]
    %v935 = vld [vmem:[#allocation11 + $0x18c] sm:$0xff]
    %v936 = vld [vmem:[#allocation11 + $0x194] sm:$0xf]
    %v937 = vld [vmem:[#allocation11 + $0x198] sm:$0xff]
    %v938 = vld [vmem:[#allocation11 + $0x1a0] sm:$0xf]
    %v939 = vld [vmem:[#allocation11 + $0x1a4] sm:$0xff]
    %v940 = vld [vmem:[#allocation11 + $0x1ac] sm:$0xf]
    %v941 = vld [vmem:[#allocation11 + $0x1b0] sm:$0xff]
    %v942 = vld [vmem:[#allocation11 + $0x1b8] sm:$0xf]
    %v943 = vld [vmem:[#allocation11 + $0x1bc] sm:$0xff]
    %v944 = vld [vmem:[#allocation11 + $0x1c4] sm:$0xf]
    %v945 = vld [vmem:[#allocation11 + $0x1c8] sm:$0xff]
    %v946 = vld [vmem:[#allocation11 + $0x1d0] sm:$0xf]
    %v947 = vld [vmem:[#allocation11 + $0x1d4] sm:$0xff]
    %v948 = vld [vmem:[#allocation11 + $0x1dc] sm:$0xf]
    %v949 = vld [vmem:[#allocation11 + $0x1e0] sm:$0xff]
    %v950 = vld [vmem:[#allocation11 + $0x1e8] sm:$0xf]
    %v951 = vld [vmem:[#allocation11 + $0x1ec] sm:$0xff]
    %v952 = vld [vmem:[#allocation11 + $0x1f4] sm:$0xf]
    %v953 = vld [vmem:[#allocation11 + $0x1f8] sm:$0xff]
    %v954 = vld [vmem:[#allocation11 + $0x200] sm:$0xf]
    %v955 = vld [vmem:[#allocation11 + $0x204] sm:$0xff]
    %v956 = vld [vmem:[#allocation11 + $0x20c] sm:$0xf]
    %v957 = vld [vmem:[#allocation11 + $0x210] sm:$0xff]
    %v958 = vld [vmem:[#allocation11 + $0x218] sm:$0xf]
    %v959 = vld [vmem:[#allocation11 + $0x21c] sm:$0xff]
    %v960 = vld [vmem:[#allocation11 + $0x224] sm:$0xf]
    %v961 = vld [vmem:[#allocation11 + $0x228] sm:$0xff]
    %v962 = vld [vmem:[#allocation11 + $0x230] sm:$0xf]
    %v963 = vld [vmem:[#allocation11 + $0x234] sm:$0xff]
    %v964 = vld [vmem:[#allocation11 + $0x23c] sm:$0xf]
    %v965 = vld [vmem:[%s6] sm:$0x7]
    %v967 = vlaneseq
    %v968 = vshrl.u32 %v967, 7
    %v969 = vsub.s32 0, %v968
    %v970 = vrot.slane %v965, %v969
    %v971 = vlaneseq
    %v972 = vshrl.u32 %v971, 7
    %v973 = vsub.s32 1, %v972
    %v974 = vrot.slane %v965, %v973
    %v975 = vlaneseq
    %v976 = vshrl.u32 %v975, 7
    %v977 = vsub.s32 2, %v976
    %v978 = vrot.slane %v965, %v977
    %v986 = vunpack.c.l.b16 %v178
    %v987 = vunpack.c.h.b16 %v178
    %v988 = vunpack.c.l.b16 %v179
    %v989 = vunpack.c.l.b16 %v180
    %v990 = vunpack.c.h.b16 %v180
    %v991 = vunpack.c.l.b16 %v181
    %v992 = vpack.c.b16 %v989, %v986
    %v993 = vpack.c.b16 %v990, %v987
    %v994 = vpack.c.b16 %v991, %v988
    %v1094 = vunpack.c.l.b16 %v869
    %v1095 = vunpack.c.h.b16 %v869
    %v1096 = vunpack.c.l.b16 %v870
    %v1097 = vunpack.c.l.b16 %v871
    %v1098 = vunpack.c.h.b16 %v871
    %v1099 = vunpack.c.l.b16 %v872
    %v1100 = vunpack.c.l.b16 %v873
    %v1101 = vunpack.c.h.b16 %v873
    %v1102 = vunpack.c.l.b16 %v874
    %v1103 = vunpack.c.l.b16 %v875
    %v1104 = vunpack.c.h.b16 %v875
    %v1105 = vunpack.c.l.b16 %v876
    %v1106 = vunpack.c.l.b16 %v877
    %v1107 = vunpack.c.h.b16 %v877
    %v1108 = vunpack.c.l.b16 %v878
    %v1109 = vunpack.c.l.b16 %v879
    %v1110 = vunpack.c.h.b16 %v879
    %v1111 = vunpack.c.l.b16 %v880
    %v1112 = vunpack.c.l.b16 %v881
    %v1113 = vunpack.c.h.b16 %v881
    %v1114 = vunpack.c.l.b16 %v882
    %v1115 = vunpack.c.l.b16 %v883
    %v1116 = vunpack.c.h.b16 %v883
    %v1117 = vunpack.c.l.b16 %v884
    %v1118 = vunpack.c.l.b16 %v885
    %v1119 = vunpack.c.h.b16 %v885
    %v1120 = vunpack.c.l.b16 %v886
    %v1121 = vunpack.c.l.b16 %v887
    %v1122 = vunpack.c.h.b16 %v887
    %v1123 = vunpack.c.l.b16 %v888
    %v1124 = vunpack.c.l.b16 %v889
    %v1125 = vunpack.c.h.b16 %v889
    %v1126 = vunpack.c.l.b16 %v890
    %v1127 = vunpack.c.l.b16 %v891
    %v1128 = vunpack.c.h.b16 %v891
    %v1129 = vunpack.c.l.b16 %v892
    %v1130 = vunpack.c.l.b16 %v893
    %v1131 = vunpack.c.h.b16 %v893
    %v1132 = vunpack.c.l.b16 %v894
    %v1133 = vunpack.c.l.b16 %v895
    %v1134 = vunpack.c.h.b16 %v895
    %v1135 = vunpack.c.l.b16 %v896
    %v1136 = vunpack.c.l.b16 %v897
    %v1137 = vunpack.c.h.b16 %v897
    %v1138 = vunpack.c.l.b16 %v898
    %v1139 = vunpack.c.l.b16 %v899
    %v1140 = vunpack.c.h.b16 %v899
    %v1141 = vunpack.c.l.b16 %v900
    %v1142 = vunpack.c.l.b16 %v901
    %v1143 = vunpack.c.h.b16 %v901
    %v1144 = vunpack.c.l.b16 %v902
    %v1145 = vunpack.c.l.b16 %v903
    %v1146 = vunpack.c.h.b16 %v903
    %v1147 = vunpack.c.l.b16 %v904
    %v1148 = vunpack.c.l.b16 %v905
    %v1149 = vunpack.c.h.b16 %v905
    %v1150 = vunpack.c.l.b16 %v906
    %v1151 = vunpack.c.l.b16 %v907
    %v1152 = vunpack.c.h.b16 %v907
    %v1153 = vunpack.c.l.b16 %v908
    %v1154 = vunpack.c.l.b16 %v909
    %v1155 = vunpack.c.h.b16 %v909
    %v1156 = vunpack.c.l.b16 %v910
    %v1157 = vunpack.c.l.b16 %v911
    %v1158 = vunpack.c.h.b16 %v911
    %v1159 = vunpack.c.l.b16 %v912
    %v1160 = vunpack.c.l.b16 %v913
    %v1161 = vunpack.c.h.b16 %v913
    %v1162 = vunpack.c.l.b16 %v914
    %v1163 = vunpack.c.l.b16 %v915
    %v1164 = vunpack.c.h.b16 %v915
    %v1165 = vunpack.c.l.b16 %v916
    %v1166 = vunpack.c.l.b16 %v917
    %v1167 = vunpack.c.h.b16 %v917
    %v1168 = vunpack.c.l.b16 %v918
    %v1169 = vunpack.c.l.b16 %v919
    %v1170 = vunpack.c.h.b16 %v919
    %v1171 = vunpack.c.l.b16 %v920
    %v1172 = vunpack.c.l.b16 %v921
    %v1173 = vunpack.c.h.b16 %v921
    %v1174 = vunpack.c.l.b16 %v922
    %v1175 = vunpack.c.l.b16 %v923
    %v1176 = vunpack.c.h.b16 %v923
    %v1177 = vunpack.c.l.b16 %v924
    %v1178 = vunpack.c.l.b16 %v925
    %v1179 = vunpack.c.h.b16 %v925
    %v1180 = vunpack.c.l.b16 %v926
    %v1181 = vunpack.c.l.b16 %v927
    %v1182 = vunpack.c.h.b16 %v927
    %v1183 = vunpack.c.l.b16 %v928
    %v1184 = vunpack.c.l.b16 %v929
    %v1185 = vunpack.c.h.b16 %v929
    %v1186 = vunpack.c.l.b16 %v930
    %v1187 = vunpack.c.l.b16 %v931
    %v1188 = vunpack.c.h.b16 %v931
    %v1189 = vunpack.c.l.b16 %v932
    %v1190 = vunpack.c.l.b16 %v933
    %v1191 = vunpack.c.h.b16 %v933
    %v1192 = vunpack.c.l.b16 %v934
    %v1193 = vunpack.c.l.b16 %v935
    %v1194 = vunpack.c.h.b16 %v935
    %v1195 = vunpack.c.l.b16 %v936
    %v1196 = vunpack.c.l.b16 %v937
    %v1197 = vunpack.c.h.b16 %v937
    %v1198 = vunpack.c.l.b16 %v938
    %v1199 = vunpack.c.l.b16 %v939
    %v1200 = vunpack.c.h.b16 %v939
    %v1201 = vunpack.c.l.b16 %v940
    %v1202 = vunpack.c.l.b16 %v941
    %v1203 = vunpack.c.h.b16 %v941
    %v1204 = vunpack.c.l.b16 %v942
    %v1205 = vunpack.c.l.b16 %v943
    %v1206 = vunpack.c.h.b16 %v943
    %v1207 = vunpack.c.l.b16 %v944
    %v1208 = vunpack.c.l.b16 %v945
    %v1209 = vunpack.c.h.b16 %v945
    %v1210 = vunpack.c.l.b16 %v946
    %v1211 = vunpack.c.l.b16 %v947
    %v1212 = vunpack.c.h.b16 %v947
    %v1213 = vunpack.c.l.b16 %v948
    %v1214 = vunpack.c.l.b16 %v949
    %v1215 = vunpack.c.h.b16 %v949
    %v1216 = vunpack.c.l.b16 %v950
    %v1217 = vunpack.c.l.b16 %v951
    %v1218 = vunpack.c.h.b16 %v951
    %v1219 = vunpack.c.l.b16 %v952
    %v1220 = vunpack.c.l.b16 %v953
    %v1221 = vunpack.c.h.b16 %v953
    %v1222 = vunpack.c.l.b16 %v954
    %v1223 = vunpack.c.l.b16 %v955
    %v1224 = vunpack.c.h.b16 %v955
    %v1225 = vunpack.c.l.b16 %v956
    %v1226 = vunpack.c.l.b16 %v957
    %v1227 = vunpack.c.h.b16 %v957
    %v1228 = vunpack.c.l.b16 %v958
    %v1229 = vunpack.c.l.b16 %v959
    %v1230 = vunpack.c.h.b16 %v959
    %v1231 = vunpack.c.l.b16 %v960
    %v1232 = vunpack.c.l.b16 %v961
    %v1233 = vunpack.c.h.b16 %v961
    %v1234 = vunpack.c.l.b16 %v962
    %v1235 = vunpack.c.l.b16 %v963
    %v1236 = vunpack.c.h.b16 %v963
    %v1237 = vunpack.c.l.b16 %v964
    %v1238 = vpack.c.b16 %v1097, %v1094
    %v1239 = vpack.c.b16 %v1098, %v1095
    %v1240 = vpack.c.b16 %v1099, %v1096
    %v1241 = vpack.c.b16 %v1103, %v1100
    %v1242 = vpack.c.b16 %v1104, %v1101
    %v1243 = vpack.c.b16 %v1105, %v1102
    %v1244 = vpack.c.b16 %v1109, %v1106
    %v1245 = vpack.c.b16 %v1110, %v1107
    %v1246 = vpack.c.b16 %v1111, %v1108
    %v1247 = vpack.c.b16 %v1115, %v1112
    %v1248 = vpack.c.b16 %v1116, %v1113
    %v1249 = vpack.c.b16 %v1117, %v1114
    %v1250 = vpack.c.b16 %v1121, %v1118
    %v1251 = vpack.c.b16 %v1122, %v1119
    %v1252 = vpack.c.b16 %v1123, %v1120
    %v1253 = vpack.c.b16 %v1127, %v1124
    %v1254 = vpack.c.b16 %v1128, %v1125
    %v1255 = vpack.c.b16 %v1129, %v1126
    %v1256 = vpack.c.b16 %v1133, %v1130
    %v1257 = vpack.c.b16 %v1134, %v1131
    %v1258 = vpack.c.b16 %v1135, %v1132
    %v1259 = vpack.c.b16 %v1139, %v1136
    %v1260 = vpack.c.b16 %v1140, %v1137
    %v1261 = vpack.c.b16 %v1141, %v1138
    %v1262 = vpack.c.b16 %v1145, %v1142
    %v1263 = vpack.c.b16 %v1146, %v1143
    %v1264 = vpack.c.b16 %v1147, %v1144
    %v1265 = vpack.c.b16 %v1151, %v1148
    %v1266 = vpack.c.b16 %v1152, %v1149
    %v1267 = vpack.c.b16 %v1153, %v1150
    %v1268 = vpack.c.b16 %v1157, %v1154
    %v1269 = vpack.c.b16 %v1158, %v1155
    %v1270 = vpack.c.b16 %v1159, %v1156
    %v1271 = vpack.c.b16 %v1163, %v1160
    %v1272 = vpack.c.b16 %v1164, %v1161
    %v1273 = vpack.c.b16 %v1165, %v1162
    %v1274 = vpack.c.b16 %v1169, %v1166
    %v1275 = vpack.c.b16 %v1170, %v1167
    %v1276 = vpack.c.b16 %v1171, %v1168
    %v1277 = vpack.c.b16 %v1175, %v1172
    %v1278 = vpack.c.b16 %v1176, %v1173
    %v1279 = vpack.c.b16 %v1177, %v1174
    %v1280 = vpack.c.b16 %v1181, %v1178
    %v1281 = vpack.c.b16 %v1182, %v1179
    %v1282 = vpack.c.b16 %v1183, %v1180
    %v1283 = vpack.c.b16 %v1187, %v1184
    %v1284 = vpack.c.b16 %v1188, %v1185
    %v1285 = vpack.c.b16 %v1189, %v1186
    %v1286 = vpack.c.b16 %v1193, %v1190
    %v1287 = vpack.c.b16 %v1194, %v1191
    %v1288 = vpack.c.b16 %v1195, %v1192
    %v1289 = vpack.c.b16 %v1199, %v1196
    %v1290 = vpack.c.b16 %v1200, %v1197
    %v1291 = vpack.c.b16 %v1201, %v1198
    %v1292 = vpack.c.b16 %v1205, %v1202
    %v1293 = vpack.c.b16 %v1206, %v1203
    %v1294 = vpack.c.b16 %v1207, %v1204
    %v1295 = vpack.c.b16 %v1211, %v1208
    %v1296 = vpack.c.b16 %v1212, %v1209
    %v1297 = vpack.c.b16 %v1213, %v1210
    %v1298 = vpack.c.b16 %v1217, %v1214
    %v1299 = vpack.c.b16 %v1218, %v1215
    %v1300 = vpack.c.b16 %v1219, %v1216
    %v1301 = vpack.c.b16 %v1223, %v1220
    %v1302 = vpack.c.b16 %v1224, %v1221
    %v1303 = vpack.c.b16 %v1225, %v1222
    %v1304 = vpack.c.b16 %v1229, %v1226
    %v1305 = vpack.c.b16 %v1230, %v1227
    %v1306 = vpack.c.b16 %v1231, %v1228
    %v1307 = vpack.c.b16 %v1235, %v1232
    %v1308 = vpack.c.b16 %v1236, %v1233
    %v1309 = vpack.c.b16 %v1237, %v1234
    %1382 = vmatprep.subr.bf16.mxu0 %v1239
    %1383 = vmatpush1.bf16.msra.mxu0 %v1238
    %1384 = vmatprep.subr.bf16.mxu0 %v1242
    %1385 = vmatpush1.bf16.msra.mxu0 %v1241
    %1386 = vmatprep.subr.bf16.mxu0 %v1245
    %1387 = vmatpush1.bf16.msra.mxu0 %v1244
    %1388 = vmatprep.subr.bf16.mxu0 %v1248
    %1389 = vmatpush1.bf16.msra.mxu0 %v1247
    %1390 = vmatprep.subr.bf16.mxu0 %v1251
    %1391 = vmatpush1.bf16.msra.mxu0 %v1250
    %1392 = vmatprep.subr.bf16.mxu0 %v1254
    %1393 = vmatpush1.bf16.msra.mxu0 %v1253
    %1394 = vmatprep.subr.bf16.mxu0 %v1257
    %1395 = vmatpush1.bf16.msra.mxu0 %v1256
    %1396 = vmatprep.subr.bf16.mxu0 %v1260
    %1397 = vmatpush1.bf16.msra.mxu0 %v1259
    %1398 = vmatprep.subr.bf16.mxu0 %v1263
    %1399 = vmatpush1.bf16.msra.mxu0 %v1262
    %1400 = vmatprep.subr.bf16.mxu0 %v1266
    %1401 = vmatpush1.bf16.msra.mxu0 %v1265
    %1402 = vmatprep.subr.bf16.mxu0 %v1269
    %1403 = vmatpush1.bf16.msra.mxu0 %v1268
    %1404 = vmatprep.subr.bf16.mxu0 %v1272
    %1405 = vmatpush1.bf16.msra.mxu0 %v1271
    %1406 = vmatprep.subr.bf16.mxu0 %v1275
    %1407 = vmatpush1.bf16.msra.mxu0 %v1274
    %1408 = vmatprep.subr.bf16.mxu0 %v1278
    %1409 = vmatpush1.bf16.msra.mxu0 %v1277
    %1410 = vmatprep.subr.bf16.mxu0 %v1281
    %1411 = vmatpush1.bf16.msra.mxu0 %v1280
    %1412 = vmatprep.subr.bf16.mxu0 %v1284
    %1413 = vmatpush1.bf16.msra.mxu0 %v1283
    %1414 = vmatprep.mubr.bf16.mxu0 %v993
    %1415 = vmatmul.mubr.bf16.gmra.mrb[0].mxu0 %v992
    %v1416 = vpop.f32.mrb[0].mxu0
    %v1417 = vadd.f32 %v970, %v1416
    %v1418 = vpop.f32.mrb[0].mxu0
    %v1419 = vadd.f32 %v974, %v1418
    %v1420 = vpop.f32.mrb[0].mxu0
    %v1421 = vadd.f32 %v970, %v1420
    %v1422 = vpop.f32.mrb[0].mxu0
    %v1423 = vadd.f32 %v974, %v1422
    %1424 = vdwg.mxu0
    %1425 = vmatprep.subr.bf16.mxu0 %v1287
    %1426 = vmatpush1.bf16.msra.mxu0 %v1286
    %1427 = vmatprep.subr.bf16.mxu0 %v1290
    %1428 = vmatpush1.bf16.msra.mxu0 %v1289
    %1429 = vmatprep.subr.bf16.mxu0 %v1293
    %1430 = vmatpush1.bf16.msra.mxu0 %v1292
    %1431 = vmatprep.subr.bf16.mxu0 %v1296
    %1432 = vmatpush1.bf16.msra.mxu0 %v1295
    %1433 = vmatprep.subr.bf16.mxu0 %v1299
    %1434 = vmatpush1.bf16.msra.mxu0 %v1298
    %1435 = vmatprep.subr.bf16.mxu0 %v1302
    %1436 = vmatpush1.bf16.msra.mxu0 %v1301
    %1437 = vmatprep.subr.bf16.mxu0 %v1305
    %1438 = vmatpush1.bf16.msra.mxu0 %v1304
    %1439 = vmatprep.subr.bf16.mxu0 %v1308
    %1440 = vmatpush1.bf16.msra.mxu0 %v1307
    %1441 = vmatprep.subr.bf16.mxu0 0
    %1442 = vmatpush1.bf16.msra.mxu0 0
    %1443 = vmatprep.subr.bf16.mxu0 0
    %1444 = vmatpush1.bf16.msra.mxu0 0
    %1445 = vmatprep.subr.bf16.mxu0 0
    %1446 = vmatpush1.bf16.msra.mxu0 0
    %1447 = vmatprep.subr.bf16.mxu0 0
    %1448 = vmatpush1.bf16.msra.mxu0 0
    %1449 = vmatprep.subr.bf16.mxu0 0
    %1450 = vmatpush1.bf16.msra.mxu0 0
    %1451 = vmatprep.subr.bf16.mxu0 0
    %1452 = vmatpush1.bf16.msra.mxu0 0
    %1453 = vmatprep.subr.bf16.mxu0 0
    %1454 = vmatpush1.bf16.msra.mxu0 0
    %1455 = vmatprep.subr.bf16.mxu0 0
    %1456 = vmatpush1.bf16.msra.mxu0 0
    %1457 = vmatprep.mubr.bf16.mxu0 0
    %1458 = vmatmul.mubr.bf16.gmra.mrb[0].mxu0 %v994
    %v1459 = vpop.f32.mrb[0].mxu0
    %v1460 = vadd.f32 %v1417, %v1459
    %v1461 = vpop.f32.mrb[0].mxu0
    %v1462 = vadd.f32 %v1419, %v1461
    %v1463 = vpop.f32.mrb[0].mxu0
    %v1464 = vadd.f32 %v1421, %v1463
    %v1465 = vpop.f32.mrb[0].mxu0
    %v1466 = vadd.f32 %v1423, %v1465
    %1467 = vdwg.mxu0
    %1468 = vmatprep.subr.bf16.mxu0 0
    %1469 = vmatpush1.bf16.msra.mxu0 %v1240
    %1470 = vmatprep.subr.bf16.mxu0 0
    %1471 = vmatpush1.bf16.msra.mxu0 %v1243
    %1472 = vmatprep.subr.bf16.mxu0 0
    %1473 = vmatpush1.bf16.msra.mxu0 %v1246
    %1474 = vmatprep.subr.bf16.mxu0 0
    %1475 = vmatpush1.bf16.msra.mxu0 %v1249
    %1476 = vmatprep.subr.bf16.mxu0 0
    %1477 = vmatpush1.bf16.msra.mxu0 %v1252
    %1478 = vmatprep.subr.bf16.mxu0 0
    %1479 = vmatpush1.bf16.msra.mxu0 %v1255
    %1480 = vmatprep.subr.bf16.mxu0 0
    %1481 = vmatpush1.bf16.msra.mxu0 %v1258
    %1482 = vmatprep.subr.bf16.mxu0 0
    %1483 = vmatpush1.bf16.msra.mxu0 %v1261
    %1484 = vmatprep.subr.bf16.mxu0 0
    %1485 = vmatpush1.bf16.msra.mxu0 %v1264
    %1486 = vmatprep.subr.bf16.mxu0 0
    %1487 = vmatpush1.bf16.msra.mxu0 %v1267
    %1488 = vmatprep.subr.bf16.mxu0 0
    %1489 = vmatpush1.bf16.msra.mxu0 %v1270
    %1490 = vmatprep.subr.bf16.mxu0 0
    %1491 = vmatpush1.bf16.msra.mxu0 %v1273
    %1492 = vmatprep.subr.bf16.mxu0 0
    %1493 = vmatpush1.bf16.msra.mxu0 %v1276
    %1494 = vmatprep.subr.bf16.mxu0 0
    %1495 = vmatpush1.bf16.msra.mxu0 %v1279
    %1496 = vmatprep.subr.bf16.mxu0 0
    %1497 = vmatpush1.bf16.msra.mxu0 %v1282
    %1498 = vmatprep.subr.bf16.mxu0 0
    %1499 = vmatpush1.bf16.msra.mxu0 %v1285
    %1500 = vmatprep.mubr.bf16.mxu0 %v993
    %1501 = vmatmul.mubr.bf16.gmra.mrb[0].mxu0 %v992
    %v1502 = vpop.f32.mrb[0].mxu0
    %v1503 = vadd.f32 %v978, %v1502
    %v1504 = vpop.f32.mrb[0].mxu0
    %v1505 = vpop.f32.mrb[0].mxu0
    %v1506 = vadd.f32 %v978, %v1505
    %v1507 = vpop.f32.mrb[0].mxu0
    %1508 = vdwg.mxu0
    %1509 = vmatprep.subr.bf16.mxu0 0
    %1510 = vmatpush1.bf16.msra.mxu0 %v1288
    %1511 = vmatprep.subr.bf16.mxu0 0
    %1512 = vmatpush1.bf16.msra.mxu0 %v1291
    %1513 = vmatprep.subr.bf16.mxu0 0
    %1514 = vmatpush1.bf16.msra.mxu0 %v1294
    %1515 = vmatprep.subr.bf16.mxu0 0
    %1516 = vmatpush1.bf16.msra.mxu0 %v1297
    %1517 = vmatprep.subr.bf16.mxu0 0
    %1518 = vmatpush1.bf16.msra.mxu0 %v1300
    %1519 = vmatprep.subr.bf16.mxu0 0
    %1520 = vmatpush1.bf16.msra.mxu0 %v1303
    %1521 = vmatprep.subr.bf16.mxu0 0
    %1522 = vmatpush1.bf16.msra.mxu0 %v1306
    %1523 = vmatprep.subr.bf16.mxu0 0
    %1524 = vmatpush1.bf16.msra.mxu0 %v1309
    %1525 = vmatprep.subr.bf16.mxu0 0
    %1526 = vmatpush1.bf16.msra.mxu0 0
    %1527 = vmatprep.subr.bf16.mxu0 0
    %1528 = vmatpush1.bf16.msra.mxu0 0
    %1529 = vmatprep.subr.bf16.mxu0 0
    %1530 = vmatpush1.bf16.msra.mxu0 0
    %1531 = vmatprep.subr.bf16.mxu0 0
    %1532 = vmatpush1.bf16.msra.mxu0 0
    %1533 = vmatprep.subr.bf16.mxu0 0
    %1534 = vmatpush1.bf16.msra.mxu0 0
    %1535 = vmatprep.subr.bf16.mxu0 0
    %1536 = vmatpush1.bf16.msra.mxu0 0
    %1537 = vmatprep.subr.bf16.mxu0 0
    %1538 = vmatpush1.bf16.msra.mxu0 0
    %1539 = vmatprep.subr.bf16.mxu0 0
    %1540 = vmatpush1.bf16.msra.mxu0 0
    %1541 = vmatprep.mubr.bf16.mxu0 0
    %1542 = vmatmul.mubr.bf16.gmra.mrb[0].mxu0 %v994
    %v1543 = vpop.f32.mrb[0].mxu0
    %v1544 = vadd.f32 %v1503, %v1543
    %v1545 = vpop.f32.mrb[0].mxu0
    %v1546 = vpop.f32.mrb[0].mxu0
    %v1547 = vadd.f32 %v1506, %v1546
    %v1548 = vpop.f32.mrb[0].mxu0
    %1549 = vdwg.mxu0
    %1550 = vst [vmem:[#allocation2 + $0x18] sm:$0xff] %v1460
    %1551 = vst [vmem:[#allocation2 + $0x20] sm:$0xff] %v1462
    %1552 = vst [vmem:[#allocation2 + $0x28] sm:$0xff] %v1544
    %1553 = vst [vmem:[#allocation2 + $0x48] sm:$0xff] %v1464
    %1554 = vst [vmem:[#allocation2 + $0x50] sm:$0xff] %v1466
    %1555 = vst [vmem:[#allocation2 + $0x58] sm:$0xff] %v1547
    %s1556 = scalar_lea.vmem [#allocation10], 576
    %v1557 = vld [vmem:[%s1556] sm:$0xff]
    %v1558 = vld [vmem:[%s1556 + $0x8] sm:$0xf]
    %v1559 = vld [vmem:[%s1556 + $0xc] sm:$0xff]
    %v1560 = vld [vmem:[%s1556 + $0x14] sm:$0xf]
    %v1561 = vld [vmem:[%s1556 + $0x18] sm:$0xff]
    %v1562 = vld [vmem:[%s1556 + $0x20] sm:$0xf]
    %v1563 = vld [vmem:[%s1556 + $0x24] sm:$0xff]
    %v1564 = vld [vmem:[%s1556 + $0x2c] sm:$0xf]
    %v1565 = vld [vmem:[%s1556 + $0x30] sm:$0xff]
    %v1566 = vld [vmem:[%s1556 + $0x38] sm:$0xf]
    %v1567 = vld [vmem:[%s1556 + $0x3c] sm:$0xff]
    %v1568 = vld [vmem:[%s1556 + $0x44] sm:$0xf]
    %v1569 = vld [vmem:[%s1556 + $0x48] sm:$0xff]
    %v1570 = vld [vmem:[%s1556 + $0x50] sm:$0xf]
    %v1571 = vld [vmem:[%s1556 + $0x54] sm:$0xff]
    %v1572 = vld [vmem:[%s1556 + $0x5c] sm:$0xf]
    %v1573 = vld [vmem:[%s1556 + $0x60] sm:$0xff]
    %v1574 = vld [vmem:[%s1556 + $0x68] sm:$0xf]
    %v1575 = vld [vmem:[%s1556 + $0x6c] sm:$0xff]
    %v1576 = vld [vmem:[%s1556 + $0x74] sm:$0xf]
    %v1577 = vld [vmem:[%s1556 + $0x78] sm:$0xff]
    %v1578 = vld [vmem:[%s1556 + $0x80] sm:$0xf]
    %v1579 = vld [vmem:[%s1556 + $0x84] sm:$0xff]
    %v1580 = vld [vmem:[%s1556 + $0x8c] sm:$0xf]
    %v1581 = vld [vmem:[%s1556 + $0x90] sm:$0xff]
    %v1582 = vld [vmem:[%s1556 + $0x98] sm:$0xf]
    %v1583 = vld [vmem:[%s1556 + $0x9c] sm:$0xff]
    %v1584 = vld [vmem:[%s1556 + $0xa4] sm:$0xf]
    %v1585 = vld [vmem:[%s1556 + $0xa8] sm:$0xff]
    %v1586 = vld [vmem:[%s1556 + $0xb0] sm:$0xf]
    %v1587 = vld [vmem:[%s1556 + $0xb4] sm:$0xff]
    %v1588 = vld [vmem:[%s1556 + $0xbc] sm:$0xf]
    %v1589 = vld [vmem:[%s1556 + $0xc0] sm:$0xff]
    %v1590 = vld [vmem:[%s1556 + $0xc8] sm:$0xf]
    %v1591 = vld [vmem:[%s1556 + $0xcc] sm:$0xff]
    %v1592 = vld [vmem:[%s1556 + $0xd4] sm:$0xf]
    %v1593 = vld [vmem:[%s1556 + $0xd8] sm:$0xff]
    %v1594 = vld [vmem:[%s1556 + $0xe0] sm:$0xf]
    %v1595 = vld [vmem:[%s1556 + $0xe4] sm:$0xff]
    %v1596 = vld [vmem:[%s1556 + $0xec] sm:$0xf]
    %v1597 = vld [vmem:[%s1556 + $0xf0] sm:$0xff]
    %v1598 = vld [vmem:[%s1556 + $0xf8] sm:$0xf]
    %v1599 = vld [vmem:[%s1556 + $0xfc] sm:$0xff]
    %v1600 = vld [vmem:[%s1556 + $0x104] sm:$0xf]
    %v1601 = vld [vmem:[%s1556 + $0x108] sm:$0xff]
    %v1602 = vld [vmem:[%s1556 + $0x110] sm:$0xf]
    %v1603 = vld [vmem:[%s1556 + $0x114] sm:$0xff]
    %v1604 = vld [vmem:[%s1556 + $0x11c] sm:$0xf]
    %v1605 = vld [vmem:[%s1556 + $0x120] sm:$0xff]
    %v1606 = vld [vmem:[%s1556 + $0x128] sm:$0xf]
    %v1607 = vld [vmem:[%s1556 + $0x12c] sm:$0xff]
    %v1608 = vld [vmem:[%s1556 + $0x134] sm:$0xf]
    %v1609 = vld [vmem:[%s1556 + $0x138] sm:$0xff]
    %v1610 = vld [vmem:[%s1556 + $0x140] sm:$0xf]
    %v1611 = vld [vmem:[%s1556 + $0x144] sm:$0xff]
    %v1612 = vld [vmem:[%s1556 + $0x14c] sm:$0xf]
    %v1613 = vld [vmem:[%s1556 + $0x150] sm:$0xff]
    %v1614 = vld [vmem:[%s1556 + $0x158] sm:$0xf]
    %v1615 = vld [vmem:[%s1556 + $0x15c] sm:$0xff]
    %v1616 = vld [vmem:[%s1556 + $0x164] sm:$0xf]
    %v1617 = vld [vmem:[%s1556 + $0x168] sm:$0xff]
    %v1618 = vld [vmem:[%s1556 + $0x170] sm:$0xf]
    %v1619 = vld [vmem:[%s1556 + $0x174] sm:$0xff]
    %v1620 = vld [vmem:[%s1556 + $0x17c] sm:$0xf]
    %v1621 = vld [vmem:[%s1556 + $0x180] sm:$0xff]
    %v1622 = vld [vmem:[%s1556 + $0x188] sm:$0xf]
    %v1623 = vld [vmem:[%s1556 + $0x18c] sm:$0xff]
    %v1624 = vld [vmem:[%s1556 + $0x194] sm:$0xf]
    %v1625 = vld [vmem:[%s1556 + $0x198] sm:$0xff]
    %v1626 = vld [vmem:[%s1556 + $0x1a0] sm:$0xf]
    %v1627 = vld [vmem:[%s1556 + $0x1a4] sm:$0xff]
    %v1628 = vld [vmem:[%s1556 + $0x1ac] sm:$0xf]
    %v1629 = vld [vmem:[%s1556 + $0x1b0] sm:$0xff]
    %v1630 = vld [vmem:[%s1556 + $0x1b8] sm:$0xf]
    %v1631 = vld [vmem:[%s1556 + $0x1bc] sm:$0xff]
    %v1632 = vld [vmem:[%s1556 + $0x1c4] sm:$0xf]
    %v1633 = vld [vmem:[%s1556 + $0x1c8] sm:$0xff]
    %v1634 = vld [vmem:[%s1556 + $0x1d0] sm:$0xf]
    %v1635 = vld [vmem:[%s1556 + $0x1d4] sm:$0xff]
    %v1636 = vld [vmem:[%s1556 + $0x1dc] sm:$0xf]
    %v1637 = vld [vmem:[%s1556 + $0x1e0] sm:$0xff]
    %v1638 = vld [vmem:[%s1556 + $0x1e8] sm:$0xf]
    %v1639 = vld [vmem:[%s1556 + $0x1ec] sm:$0xff]
    %v1640 = vld [vmem:[%s1556 + $0x1f4] sm:$0xf]
    %v1641 = vld [vmem:[%s1556 + $0x1f8] sm:$0xff]
    %v1642 = vld [vmem:[%s1556 + $0x200] sm:$0xf]
    %v1643 = vld [vmem:[%s1556 + $0x204] sm:$0xff]
    %v1644 = vld [vmem:[%s1556 + $0x20c] sm:$0xf]
    %v1645 = vld [vmem:[%s1556 + $0x210] sm:$0xff]
    %v1646 = vld [vmem:[%s1556 + $0x218] sm:$0xf]
    %v1647 = vld [vmem:[%s1556 + $0x21c] sm:$0xff]
    %v1648 = vld [vmem:[%s1556 + $0x224] sm:$0xf]
    %v1649 = vld [vmem:[%s1556 + $0x228] sm:$0xff]
    %v1650 = vld [vmem:[%s1556 + $0x230] sm:$0xf]
    %v1651 = vld [vmem:[%s1556 + $0x234] sm:$0xff]
    %v1652 = vld [vmem:[%s1556 + $0x23c] sm:$0xf]
    %s1653 = scalar_lea.vmem %s5, 3
    %v1654 = vld [vmem:[%s1653] sm:$0x7]
    %v1656 = vlaneseq
    %v1657 = vshrl.u32 %v1656, 7
    %v1658 = vsub.s32 0, %v1657
    %v1659 = vrot.slane %v1654, %v1658
    %v1660 = vlaneseq
    %v1661 = vshrl.u32 %v1660, 7
    %v1662 = vsub.s32 1, %v1661
    %v1663 = vrot.slane %v1654, %v1662
    %v1664 = vlaneseq
    %v1665 = vshrl.u32 %v1664, 7
    %v1666 = vsub.s32 2, %v1665
    %v1667 = vrot.slane %v1654, %v1666
    %v1767 = vunpack.c.l.b16 %v1557
    %v1768 = vunpack.c.h.b16 %v1557
    %v1769 = vunpack.c.l.b16 %v1558
    %v1770 = vunpack.c.l.b16 %v1559
    %v1771 = vunpack.c.h.b16 %v1559
    %v1772 = vunpack.c.l.b16 %v1560
    %v1773 = vunpack.c.l.b16 %v1561
    %v1774 = vunpack.c.h.b16 %v1561
    %v1775 = vunpack.c.l.b16 %v1562
    %v1776 = vunpack.c.l.b16 %v1563
    %v1777 = vunpack.c.h.b16 %v1563
    %v1778 = vunpack.c.l.b16 %v1564
    %v1779 = vunpack.c.l.b16 %v1565
    %v1780 = vunpack.c.h.b16 %v1565
    %v1781 = vunpack.c.l.b16 %v1566
    %v1782 = vunpack.c.l.b16 %v1567
    %v1783 = vunpack.c.h.b16 %v1567
    %v1784 = vunpack.c.l.b16 %v1568
    %v1785 = vunpack.c.l.b16 %v1569
    %v1786 = vunpack.c.h.b16 %v1569
    %v1787 = vunpack.c.l.b16 %v1570
    %v1788 = vunpack.c.l.b16 %v1571
    %v1789 = vunpack.c.h.b16 %v1571
    %v1790 = vunpack.c.l.b16 %v1572
    %v1791 = vunpack.c.l.b16 %v1573
    %v1792 = vunpack.c.h.b16 %v1573
    %v1793 = vunpack.c.l.b16 %v1574
    %v1794 = vunpack.c.l.b16 %v1575
    %v1795 = vunpack.c.h.b16 %v1575
    %v1796 = vunpack.c.l.b16 %v1576
    %v1797 = vunpack.c.l.b16 %v1577
    %v1798 = vunpack.c.h.b16 %v1577
    %v1799 = vunpack.c.l.b16 %v1578
    %v1800 = vunpack.c.l.b16 %v1579
    %v1801 = vunpack.c.h.b16 %v1579
    %v1802 = vunpack.c.l.b16 %v1580
    %v1803 = vunpack.c.l.b16 %v1581
    %v1804 = vunpack.c.h.b16 %v1581
    %v1805 = vunpack.c.l.b16 %v1582
    %v1806 = vunpack.c.l.b16 %v1583
    %v1807 = vunpack.c.h.b16 %v1583
    %v1808 = vunpack.c.l.b16 %v1584
    %v1809 = vunpack.c.l.b16 %v1585
    %v1810 = vunpack.c.h.b16 %v1585
    %v1811 = vunpack.c.l.b16 %v1586
    %v1812 = vunpack.c.l.b16 %v1587
    %v1813 = vunpack.c.h.b16 %v1587
    %v1814 = vunpack.c.l.b16 %v1588
    %v1815 = vunpack.c.l.b16 %v1589
    %v1816 = vunpack.c.h.b16 %v1589
    %v1817 = vunpack.c.l.b16 %v1590
    %v1818 = vunpack.c.l.b16 %v1591
    %v1819 = vunpack.c.h.b16 %v1591
    %v1820 = vunpack.c.l.b16 %v1592
    %v1821 = vunpack.c.l.b16 %v1593
    %v1822 = vunpack.c.h.b16 %v1593
    %v1823 = vunpack.c.l.b16 %v1594
    %v1824 = vunpack.c.l.b16 %v1595
    %v1825 = vunpack.c.h.b16 %v1595
    %v1826 = vunpack.c.l.b16 %v1596
    %v1827 = vunpack.c.l.b16 %v1597
    %v1828 = vunpack.c.h.b16 %v1597
    %v1829 = vunpack.c.l.b16 %v1598
    %v1830 = vunpack.c.l.b16 %v1599
    %v1831 = vunpack.c.h.b16 %v1599
    %v1832 = vunpack.c.l.b16 %v1600
    %v1833 = vunpack.c.l.b16 %v1601
    %v1834 = vunpack.c.h.b16 %v1601
    %v1835 = vunpack.c.l.b16 %v1602
    %v1836 = vunpack.c.l.b16 %v1603
    %v1837 = vunpack.c.h.b16 %v1603
    %v1838 = vunpack.c.l.b16 %v1604
    %v1839 = vunpack.c.l.b16 %v1605
    %v1840 = vunpack.c.h.b16 %v1605
    %v1841 = vunpack.c.l.b16 %v1606
    %v1842 = vunpack.c.l.b16 %v1607
    %v1843 = vunpack.c.h.b16 %v1607
    %v1844 = vunpack.c.l.b16 %v1608
    %v1845 = vunpack.c.l.b16 %v1609
    %v1846 = vunpack.c.h.b16 %v1609
    %v1847 = vunpack.c.l.b16 %v1610
    %v1848 = vunpack.c.l.b16 %v1611
    %v1849 = vunpack.c.h.b16 %v1611
    %v1850 = vunpack.c.l.b16 %v1612
    %v1851 = vunpack.c.l.b16 %v1613
    %v1852 = vunpack.c.h.b16 %v1613
    %v1853 = vunpack.c.l.b16 %v1614
    %v1854 = vunpack.c.l.b16 %v1615
    %v1855 = vunpack.c.h.b16 %v1615
    %v1856 = vunpack.c.l.b16 %v1616
    %v1857 = vunpack.c.l.b16 %v1617
    %v1858 = vunpack.c.h.b16 %v1617
    %v1859 = vunpack.c.l.b16 %v1618
    %v1860 = vunpack.c.l.b16 %v1619
    %v1861 = vunpack.c.h.b16 %v1619
    %v1862 = vunpack.c.l.b16 %v1620
    %v1863 = vunpack.c.l.b16 %v1621
    %v1864 = vunpack.c.h.b16 %v1621
    %v1865 = vunpack.c.l.b16 %v1622
    %v1866 = vunpack.c.l.b16 %v1623
    %v1867 = vunpack.c.h.b16 %v1623
    %v1868 = vunpack.c.l.b16 %v1624
    %v1869 = vunpack.c.l.b16 %v1625
    %v1870 = vunpack.c.h.b16 %v1625
    %v1871 = vunpack.c.l.b16 %v1626
    %v1872 = vunpack.c.l.b16 %v1627
    %v1873 = vunpack.c.h.b16 %v1627
    %v1874 = vunpack.c.l.b16 %v1628
    %v1875 = vunpack.c.l.b16 %v1629
    %v1876 = vunpack.c.h.b16 %v1629
    %v1877 = vunpack.c.l.b16 %v1630
    %v1878 = vunpack.c.l.b16 %v1631
    %v1879 = vunpack.c.h.b16 %v1631
    %v1880 = vunpack.c.l.b16 %v1632
    %v1881 = vunpack.c.l.b16 %v1633
    %v1882 = vunpack.c.h.b16 %v1633
    %v1883 = vunpack.c.l.b16 %v1634
    %v1884 = vunpack.c.l.b16 %v1635
    %v1885 = vunpack.c.h.b16 %v1635
    %v1886 = vunpack.c.l.b16 %v1636
    %v1887 = vunpack.c.l.b16 %v1637
    %v1888 = vunpack.c.h.b16 %v1637
    %v1889 = vunpack.c.l.b16 %v1638
    %v1890 = vunpack.c.l.b16 %v1639
    %v1891 = vunpack.c.h.b16 %v1639
    %v1892 = vunpack.c.l.b16 %v1640
    %v1893 = vunpack.c.l.b16 %v1641
    %v1894 = vunpack.c.h.b16 %v1641
    %v1895 = vunpack.c.l.b16 %v1642
    %v1896 = vunpack.c.l.b16 %v1643
    %v1897 = vunpack.c.h.b16 %v1643
    %v1898 = vunpack.c.l.b16 %v1644
    %v1899 = vunpack.c.l.b16 %v1645
    %v1900 = vunpack.c.h.b16 %v1645
    %v1901 = vunpack.c.l.b16 %v1646
    %v1902 = vunpack.c.l.b16 %v1647
    %v1903 = vunpack.c.h.b16 %v1647
    %v1904 = vunpack.c.l.b16 %v1648
    %v1905 = vunpack.c.l.b16 %v1649
    %v1906 = vunpack.c.h.b16 %v1649
    %v1907 = vunpack.c.l.b16 %v1650
    %v1908 = vunpack.c.l.b16 %v1651
    %v1909 = vunpack.c.h.b16 %v1651
    %v1910 = vunpack.c.l.b16 %v1652
    %v1911 = vpack.c.b16 %v1770, %v1767
    %v1912 = vpack.c.b16 %v1771, %v1768
    %v1913 = vpack.c.b16 %v1772, %v1769
    %v1914 = vpack.c.b16 %v1776, %v1773
    %v1915 = vpack.c.b16 %v1777, %v1774
    %v1916 = vpack.c.b16 %v1778, %v1775
    %v1917 = vpack.c.b16 %v1782, %v1779
    %v1918 = vpack.c.b16 %v1783, %v1780
    %v1919 = vpack.c.b16 %v1784, %v1781
    %v1920 = vpack.c.b16 %v1788, %v1785
    %v1921 = vpack.c.b16 %v1789, %v1786
    %v1922 = vpack.c.b16 %v1790, %v1787
    %v1923 = vpack.c.b16 %v1794, %v1791
    %v1924 = vpack.c.b16 %v1795, %v1792
    %v1925 = vpack.c.b16 %v1796, %v1793
    %v1926 = vpack.c.b16 %v1800, %v1797
    %v1927 = vpack.c.b16 %v1801, %v1798
    %v1928 = vpack.c.b16 %v1802, %v1799
    %v1929 = vpack.c.b16 %v1806, %v1803
    %v1930 = vpack.c.b16 %v1807, %v1804
    %v1931 = vpack.c.b16 %v1808, %v1805
    %v1932 = vpack.c.b16 %v1812, %v1809
    %v1933 = vpack.c.b16 %v1813, %v1810
    %v1934 = vpack.c.b16 %v1814, %v1811
    %v1935 = vpack.c.b16 %v1818, %v1815
    %v1936 = vpack.c.b16 %v1819, %v1816
    %v1937 = vpack.c.b16 %v1820, %v1817
    %v1938 = vpack.c.b16 %v1824, %v1821
    %v1939 = vpack.c.b16 %v1825, %v1822
    %v1940 = vpack.c.b16 %v1826, %v1823
    %v1941 = vpack.c.b16 %v1830, %v1827
    %v1942 = vpack.c.b16 %v1831, %v1828
    %v1943 = vpack.c.b16 %v1832, %v1829
    %v1944 = vpack.c.b16 %v1836, %v1833
    %v1945 = vpack.c.b16 %v1837, %v1834
    %v1946 = vpack.c.b16 %v1838, %v1835
    %v1947 = vpack.c.b16 %v1842, %v1839
    %v1948 = vpack.c.b16 %v1843, %v1840
    %v1949 = vpack.c.b16 %v1844, %v1841
    %v1950 = vpack.c.b16 %v1848, %v1845
    %v1951 = vpack.c.b16 %v1849, %v1846
    %v1952 = vpack.c.b16 %v1850, %v1847
    %v1953 = vpack.c.b16 %v1854, %v1851
    %v1954 = vpack.c.b16 %v1855, %v1852
    %v1955 = vpack.c.b16 %v1856, %v1853
    %v1956 = vpack.c.b16 %v1860, %v1857
    %v1957 = vpack.c.b16 %v1861, %v1858
    %v1958 = vpack.c.b16 %v1862, %v1859
    %v1959 = vpack.c.b16 %v1866, %v1863
    %v1960 = vpack.c.b16 %v1867, %v1864
    %v1961 = vpack.c.b16 %v1868, %v1865
    %v1962 = vpack.c.b16 %v1872, %v1869
    %v1963 = vpack.c.b16 %v1873, %v1870
    %v1964 = vpack.c.b16 %v1874, %v1871
    %v1965 = vpack.c.b16 %v1878, %v1875
    %v1966 = vpack.c.b16 %v1879, %v1876
    %v1967 = vpack.c.b16 %v1880, %v1877
    %v1968 = vpack.c.b16 %v1884, %v1881
    %v1969 = vpack.c.b16 %v1885, %v1882
    %v1970 = vpack.c.b16 %v1886, %v1883
    %v1971 = vpack.c.b16 %v1890, %v1887
    %v1972 = vpack.c.b16 %v1891, %v1888
    %v1973 = vpack.c.b16 %v1892, %v1889
    %v1974 = vpack.c.b16 %v1896, %v1893
    %v1975 = vpack.c.b16 %v1897, %v1894
    %v1976 = vpack.c.b16 %v1898, %v1895
    %v1977 = vpack.c.b16 %v1902, %v1899
    %v1978 = vpack.c.b16 %v1903, %v1900
    %v1979 = vpack.c.b16 %v1904, %v1901
    %v1980 = vpack.c.b16 %v1908, %v1905
    %v1981 = vpack.c.b16 %v1909, %v1906
    %v1982 = vpack.c.b16 %v1910, %v1907
    %2055 = vmatprep.subr.bf16.mxu0 %v1912
    %2056 = vmatpush1.bf16.msra.mxu0 %v1911
    %2057 = vmatprep.subr.bf16.mxu0 %v1915
    %2058 = vmatpush1.bf16.msra.mxu0 %v1914
    %2059 = vmatprep.subr.bf16.mxu0 %v1918
    %2060 = vmatpush1.bf16.msra.mxu0 %v1917
    %2061 = vmatprep.subr.bf16.mxu0 %v1921
    %2062 = vmatpush1.bf16.msra.mxu0 %v1920
    %2063 = vmatprep.subr.bf16.mxu0 %v1924
    %2064 = vmatpush1.bf16.msra.mxu0 %v1923
    %2065 = vmatprep.subr.bf16.mxu0 %v1927
    %2066 = vmatpush1.bf16.msra.mxu0 %v1926
    %2067 = vmatprep.subr.bf16.mxu0 %v1930
    %2068 = vmatpush1.bf16.msra.mxu0 %v1929
    %2069 = vmatprep.subr.bf16.mxu0 %v1933
    %2070 = vmatpush1.bf16.msra.mxu0 %v1932
    %2071 = vmatprep.subr.bf16.mxu0 %v1936
    %2072 = vmatpush1.bf16.msra.mxu0 %v1935
    %2073 = vmatprep.subr.bf16.mxu0 %v1939
    %2074 = vmatpush1.bf16.msra.mxu0 %v1938
    %2075 = vmatprep.subr.bf16.mxu0 %v1942
    %2076 = vmatpush1.bf16.msra.mxu0 %v1941
    %2077 = vmatprep.subr.bf16.mxu0 %v1945
    %2078 = vmatpush1.bf16.msra.mxu0 %v1944
    %2079 = vmatprep.subr.bf16.mxu0 %v1948
    %2080 = vmatpush1.bf16.msra.mxu0 %v1947
    %2081 = vmatprep.subr.bf16.mxu0 %v1951
    %2082 = vmatpush1.bf16.msra.mxu0 %v1950
    %2083 = vmatprep.subr.bf16.mxu0 %v1954
    %2084 = vmatpush1.bf16.msra.mxu0 %v1953
    %2085 = vmatprep.subr.bf16.mxu0 %v1957
    %2086 = vmatpush1.bf16.msra.mxu0 %v1956
    %2087 = vmatprep.mubr.bf16.mxu0 %v306
    %2088 = vmatmul.mubr.bf16.gmra.mrb[0].mxu0 %v305
    %v2089 = vpop.f32.mrb[0].mxu0
    %v2090 = vadd.f32 %v1659, %v2089
    %v2091 = vpop.f32.mrb[0].mxu0
    %v2092 = vadd.f32 %v1663, %v2091
    %v2093 = vpop.f32.mrb[0].mxu0
    %v2094 = vadd.f32 %v1659, %v2093
    %v2095 = vpop.f32.mrb[0].mxu0
    %v2096 = vadd.f32 %v1663, %v2095
    %2097 = vdwg.mxu0
    %2098 = vmatprep.subr.bf16.mxu0 %v1960
    %2099 = vmatpush1.bf16.msra.mxu0 %v1959
    %2100 = vmatprep.subr.bf16.mxu0 %v1963
    %2101 = vmatpush1.bf16.msra.mxu0 %v1962
    %2102 = vmatprep.subr.bf16.mxu0 %v1966
    %2103 = vmatpush1.bf16.msra.mxu0 %v1965
    %2104 = vmatprep.subr.bf16.mxu0 %v1969
    %2105 = vmatpush1.bf16.msra.mxu0 %v1968
    %2106 = vmatprep.subr.bf16.mxu0 %v1972
    %2107 = vmatpush1.bf16.msra.mxu0 %v1971
    %2108 = vmatprep.subr.bf16.mxu0 %v1975
    %2109 = vmatpush1.bf16.msra.mxu0 %v1974
    %2110 = vmatprep.subr.bf16.mxu0 %v1978
    %2111 = vmatpush1.bf16.msra.mxu0 %v1977
    %2112 = vmatprep.subr.bf16.mxu0 %v1981
    %2113 = vmatpush1.bf16.msra.mxu0 %v1980
    %2114 = vmatprep.subr.bf16.mxu0 0
    %2115 = vmatpush1.bf16.msra.mxu0 0
    %2116 = vmatprep.subr.bf16.mxu0 0
    %2117 = vmatpush1.bf16.msra.mxu0 0
    %2118 = vmatprep.subr.bf16.mxu0 0
    %2119 = vmatpush1.bf16.msra.mxu0 0
    %2120 = vmatprep.subr.bf16.mxu0 0
    %2121 = vmatpush1.bf16.msra.mxu0 0
    %2122 = vmatprep.subr.bf16.mxu0 0
    %2123 = vmatpush1.bf16.msra.mxu0 0
    %2124 = vmatprep.subr.bf16.mxu0 0
    %2125 = vmatpush1.bf16.msra.mxu0 0
    %2126 = vmatprep.subr.bf16.mxu0 0
    %2127 = vmatpush1.bf16.msra.mxu0 0
    %2128 = vmatprep.subr.bf16.mxu0 0
    %2129 = vmatpush1.bf16.msra.mxu0 0
    %2130 = vmatprep.mubr.bf16.mxu0 0
    %2131 = vmatmul.mubr.bf16.gmra.mrb[0].mxu0 %v307
    %v2132 = vpop.f32.mrb[0].mxu0
    %v2133 = vadd.f32 %v2090, %v2132
    %v2134 = vpop.f32.mrb[0].mxu0
    %v2135 = vadd.f32 %v2092, %v2134
    %v2136 = vpop.f32.mrb[0].mxu0
    %v2137 = vadd.f32 %v2094, %v2136
    %v2138 = vpop.f32.mrb[0].mxu0
    %v2139 = vadd.f32 %v2096, %v2138
    %2140 = vdwg.mxu0
    %2141 = vmatprep.subr.bf16.mxu0 0
    %2142 = vmatpush1.bf16.msra.mxu0 %v1913
    %2143 = vmatprep.subr.bf16.mxu0 0
    %2144 = vmatpush1.bf16.msra.mxu0 %v1916
    %2145 = vmatprep.subr.bf16.mxu0 0
    %2146 = vmatpush1.bf16.msra.mxu0 %v1919
    %2147 = vmatprep.subr.bf16.mxu0 0
    %2148 = vmatpush1.bf16.msra.mxu0 %v1922
    %2149 = vmatprep.subr.bf16.mxu0 0
    %2150 = vmatpush1.bf16.msra.mxu0 %v1925
    %2151 = vmatprep.subr.bf16.mxu0 0
    %2152 = vmatpush1.bf16.msra.mxu0 %v1928
    %2153 = vmatprep.subr.bf16.mxu0 0
    %2154 = vmatpush1.bf16.msra.mxu0 %v1931
    %2155 = vmatprep.subr.bf16.mxu0 0
    %2156 = vmatpush1.bf16.msra.mxu0 %v1934
    %2157 = vmatprep.subr.bf16.mxu0 0
    %2158 = vmatpush1.bf16.msra.mxu0 %v1937
    %2159 = vmatprep.subr.bf16.mxu0 0
    %2160 = vmatpush1.bf16.msra.mxu0 %v1940
    %2161 = vmatprep.subr.bf16.mxu0 0
    %2162 = vmatpush1.bf16.msra.mxu0 %v1943
    %2163 = vmatprep.subr.bf16.mxu0 0
    %2164 = vmatpush1.bf16.msra.mxu0 %v1946
    %2165 = vmatprep.subr.bf16.mxu0 0
    %2166 = vmatpush1.bf16.msra.mxu0 %v1949
    %2167 = vmatprep.subr.bf16.mxu0 0
    %2168 = vmatpush1.bf16.msra.mxu0 %v1952
    %2169 = vmatprep.subr.bf16.mxu0 0
    %2170 = vmatpush1.bf16.msra.mxu0 %v1955
    %2171 = vmatprep.subr.bf16.mxu0 0
    %2172 = vmatpush1.bf16.msra.mxu0 %v1958
    %2173 = vmatprep.mubr.bf16.mxu0 %v306
    %2174 = vmatmul.mubr.bf16.gmra.mrb[0].mxu0 %v305
    %v2175 = vpop.f32.mrb[0].mxu0
    %v2176 = vadd.f32 %v1667, %v2175
    %v2177 = vpop.f32.mrb[0].mxu0
    %v2178 = vpop.f32.mrb[0].mxu0
    %v2179 = vadd.f32 %v1667, %v2178
    %v2180 = vpop.f32.mrb[0].mxu0
    %2181 = vdwg.mxu0
    %2182 = vmatprep.subr.bf16.mxu0 0
    %2183 = vmatpush1.bf16.msra.mxu0 %v1961
    %2184 = vmatprep.subr.bf16.mxu0 0
    %2185 = vmatpush1.bf16.msra.mxu0 %v1964
    %2186 = vmatprep.subr.bf16.mxu0 0
    %2187 = vmatpush1.bf16.msra.mxu0 %v1967
    %2188 = vmatprep.subr.bf16.mxu0 0
    %2189 = vmatpush1.bf16.msra.mxu0 %v1970
    %2190 = vmatprep.subr.bf16.mxu0 0
    %2191 = vmatpush1.bf16.msra.mxu0 %v1973
    %2192 = vmatprep.subr.bf16.mxu0 0
    %2193 = vmatpush1.bf16.msra.mxu0 %v1976
    %2194 = vmatprep.subr.bf16.mxu0 0
    %2195 = vmatpush1.bf16.msra.mxu0 %v1979
    %2196 = vmatprep.subr.bf16.mxu0 0
    %2197 = vmatpush1.bf16.msra.mxu0 %v1982
    %2198 = vmatprep.subr.bf16.mxu0 0
    %2199 = vmatpush1.bf16.msra.mxu0 0
    %2200 = vmatprep.subr.bf16.mxu0 0
    %2201 = vmatpush1.bf16.msra.mxu0 0
    %2202 = vmatprep.subr.bf16.mxu0 0
    %2203 = vmatpush1.bf16.msra.mxu0 0
    %2204 = vmatprep.subr.bf16.mxu0 0
    %2205 = vmatpush1.bf16.msra.mxu0 0
    %2206 = vmatprep.subr.bf16.mxu0 0
    %2207 = vmatpush1.bf16.msra.mxu0 0
    %2208 = vmatprep.subr.bf16.mxu0 0
    %2209 = vmatpush1.bf16.msra.mxu0 0
    %2210 = vmatprep.subr.bf16.mxu0 0
    %2211 = vmatpush1.bf16.msra.mxu0 0
    %2212 = vmatprep.subr.bf16.mxu0 0
    %2213 = vmatpush1.bf16.msra.mxu0 0
    %2214 = vmatprep.mubr.bf16.mxu0 0
    %2215 = vmatmul.mubr.bf16.gmra.mrb[0].mxu0 %v307
    %v2216 = vpop.f32.mrb[0].mxu0
    %v2217 = vadd.f32 %v2176, %v2216
    %v2218 = vpop.f32.mrb[0].mxu0
    %v2219 = vpop.f32.mrb[0].mxu0
    %v2220 = vadd.f32 %v2179, %v2219
    %v2221 = vpop.f32.mrb[0].mxu0
    %2222 = vdwg.mxu0
    %2223 = vst [vmem:[#allocation2 + $0x60] sm:$0xff] %v2133
    %2224 = vst [vmem:[#allocation2 + $0x68] sm:$0xff] %v2135
    %2225 = vst [vmem:[#allocation2 + $0x70] sm:$0xff] %v2217
    %2226 = vst [vmem:[#allocation2 + $0x90] sm:$0xff] %v2137
    %2227 = vst [vmem:[#allocation2 + $0x98] sm:$0xff] %v2139
    %2228 = vst [vmem:[#allocation2 + $0xa0] sm:$0xff] %v2220
    %s2229 = scalar_lea.vmem [#allocation11], 576
    %v2230 = vld [vmem:[%s2229] sm:$0xff]
    %v2231 = vld [vmem:[%s2229 + $0x8] sm:$0xf]
    %v2232 = vld [vmem:[%s2229 + $0xc] sm:$0xff]
    %v2233 = vld [vmem:[%s2229 + $0x14] sm:$0xf]
    %v2234 = vld [vmem:[%s2229 + $0x18] sm:$0xff]
    %v2235 = vld [vmem:[%s2229 + $0x20] sm:$0xf]
    %v2236 = vld [vmem:[%s2229 + $0x24] sm:$0xff]
    %v2237 = vld [vmem:[%s2229 + $0x2c] sm:$0xf]
    %v2238 = vld [vmem:[%s2229 + $0x30] sm:$0xff]
    %v2239 = vld [vmem:[%s2229 + $0x38] sm:$0xf]
    %v2240 = vld [vmem:[%s2229 + $0x3c] sm:$0xff]
    %v2241 = vld [vmem:[%s2229 + $0x44] sm:$0xf]
    %v2242 = vld [vmem:[%s2229 + $0x48] sm:$0xff]
    %v2243 = vld [vmem:[%s2229 + $0x50] sm:$0xf]
    %v2244 = vld [vmem:[%s2229 + $0x54] sm:$0xff]
    %v2245 = vld [vmem:[%s2229 + $0x5c] sm:$0xf]
    %v2246 = vld [vmem:[%s2229 + $0x60] sm:$0xff]
    %v2247 = vld [vmem:[%s2229 + $0x68] sm:$0xf]
    %v2248 = vld [vmem:[%s2229 + $0x6c] sm:$0xff]
    %v2249 = vld [vmem:[%s2229 + $0x74] sm:$0xf]
    %v2250 = vld [vmem:[%s2229 + $0x78] sm:$0xff]
    %v2251 = vld [vmem:[%s2229 + $0x80] sm:$0xf]
    %v2252 = vld [vmem:[%s2229 + $0x84] sm:$0xff]
    %v2253 = vld [vmem:[%s2229 + $0x8c] sm:$0xf]
    %v2254 = vld [vmem:[%s2229 + $0x90] sm:$0xff]
    %v2255 = vld [vmem:[%s2229 + $0x98] sm:$0xf]
    %v2256 = vld [vmem:[%s2229 + $0x9c] sm:$0xff]
    %v2257 = vld [vmem:[%s2229 + $0xa4] sm:$0xf]
    %v2258 = vld [vmem:[%s2229 + $0xa8] sm:$0xff]
    %v2259 = vld [vmem:[%s2229 + $0xb0] sm:$0xf]
    %v2260 = vld [vmem:[%s2229 + $0xb4] sm:$0xff]
    %v2261 = vld [vmem:[%s2229 + $0xbc] sm:$0xf]
    %v2262 = vld [vmem:[%s2229 + $0xc0] sm:$0xff]
    %v2263 = vld [vmem:[%s2229 + $0xc8] sm:$0xf]
    %v2264 = vld [vmem:[%s2229 + $0xcc] sm:$0xff]
    %v2265 = vld [vmem:[%s2229 + $0xd4] sm:$0xf]
    %v2266 = vld [vmem:[%s2229 + $0xd8] sm:$0xff]
    %v2267 = vld [vmem:[%s2229 + $0xe0] sm:$0xf]
    %v2268 = vld [vmem:[%s2229 + $0xe4] sm:$0xff]
    %v2269 = vld [vmem:[%s2229 + $0xec] sm:$0xf]
    %v2270 = vld [vmem:[%s2229 + $0xf0] sm:$0xff]
    %v2271 = vld [vmem:[%s2229 + $0xf8] sm:$0xf]
    %v2272 = vld [vmem:[%s2229 + $0xfc] sm:$0xff]
    %v2273 = vld [vmem:[%s2229 + $0x104] sm:$0xf]
    %v2274 = vld [vmem:[%s2229 + $0x108] sm:$0xff]
    %v2275 = vld [vmem:[%s2229 + $0x110] sm:$0xf]
    %v2276 = vld [vmem:[%s2229 + $0x114] sm:$0xff]
    %v2277 = vld [vmem:[%s2229 + $0x11c] sm:$0xf]
    %v2278 = vld [vmem:[%s2229 + $0x120] sm:$0xff]
    %v2279 = vld [vmem:[%s2229 + $0x128] sm:$0xf]
    %v2280 = vld [vmem:[%s2229 + $0x12c] sm:$0xff]
    %v2281 = vld [vmem:[%s2229 + $0x134] sm:$0xf]
    %v2282 = vld [vmem:[%s2229 + $0x138] sm:$0xff]
    %v2283 = vld [vmem:[%s2229 + $0x140] sm:$0xf]
    %v2284 = vld [vmem:[%s2229 + $0x144] sm:$0xff]
    %v2285 = vld [vmem:[%s2229 + $0x14c] sm:$0xf]
    %v2286 = vld [vmem:[%s2229 + $0x150] sm:$0xff]
    %v2287 = vld [vmem:[%s2229 + $0x158] sm:$0xf]
    %v2288 = vld [vmem:[%s2229 + $0x15c] sm:$0xff]
    %v2289 = vld [vmem:[%s2229 + $0x164] sm:$0xf]
    %v2290 = vld [vmem:[%s2229 + $0x168] sm:$0xff]
    %v2291 = vld [vmem:[%s2229 + $0x170] sm:$0xf]
    %v2292 = vld [vmem:[%s2229 + $0x174] sm:$0xff]
    %v2293 = vld [vmem:[%s2229 + $0x17c] sm:$0xf]
    %v2294 = vld [vmem:[%s2229 + $0x180] sm:$0xff]
    %v2295 = vld [vmem:[%s2229 + $0x188] sm:$0xf]
    %v2296 = vld [vmem:[%s2229 + $0x18c] sm:$0xff]
    %v2297 = vld [vmem:[%s2229 + $0x194] sm:$0xf]
    %v2298 = vld [vmem:[%s2229 + $0x198] sm:$0xff]
    %v2299 = vld [vmem:[%s2229 + $0x1a0] sm:$0xf]
    %v2300 = vld [vmem:[%s2229 + $0x1a4] sm:$0xff]
    %v2301 = vld [vmem:[%s2229 + $0x1ac] sm:$0xf]
    %v2302 = vld [vmem:[%s2229 + $0x1b0] sm:$0xff]
    %v2303 = vld [vmem:[%s2229 + $0x1b8] sm:$0xf]
    %v2304 = vld [vmem:[%s2229 + $0x1bc] sm:$0xff]
    %v2305 = vld [vmem:[%s2229 + $0x1c4] sm:$0xf]
    %v2306 = vld [vmem:[%s2229 + $0x1c8] sm:$0xff]
    %v2307 = vld [vmem:[%s2229 + $0x1d0] sm:$0xf]
    %v2308 = vld [vmem:[%s2229 + $0x1d4] sm:$0xff]
    %v2309 = vld [vmem:[%s2229 + $0x1dc] sm:$0xf]
    %v2310 = vld [vmem:[%s2229 + $0x1e0] sm:$0xff]
    %v2311 = vld [vmem:[%s2229 + $0x1e8] sm:$0xf]
    %v2312 = vld [vmem:[%s2229 + $0x1ec] sm:$0xff]
    %v2313 = vld [vmem:[%s2229 + $0x1f4] sm:$0xf]
    %v2314 = vld [vmem:[%s2229 + $0x1f8] sm:$0xff]
    %v2315 = vld [vmem:[%s2229 + $0x200] sm:$0xf]
    %v2316 = vld [vmem:[%s2229 + $0x204] sm:$0xff]
    %v2317 = vld [vmem:[%s2229 + $0x20c] sm:$0xf]
    %v2318 = vld [vmem:[%s2229 + $0x210] sm:$0xff]
    %v2319 = vld [vmem:[%s2229 + $0x218] sm:$0xf]
    %v2320 = vld [vmem:[%s2229 + $0x21c] sm:$0xff]
    %v2321 = vld [vmem:[%s2229 + $0x224] sm:$0xf]
    %v2322 = vld [vmem:[%s2229 + $0x228] sm:$0xff]
    %v2323 = vld [vmem:[%s2229 + $0x230] sm:$0xf]
    %v2324 = vld [vmem:[%s2229 + $0x234] sm:$0xff]
    %v2325 = vld [vmem:[%s2229 + $0x23c] sm:$0xf]
    %s2326 = scalar_lea.vmem %s6, 3
    %v2327 = vld [vmem:[%s2326] sm:$0x7]
    %v2329 = vlaneseq
    %v2330 = vshrl.u32 %v2329, 7
    %v2331 = vsub.s32 0, %v2330
    %v2332 = vrot.slane %v2327, %v2331
    %v2333 = vlaneseq
    %v2334 = vshrl.u32 %v2333, 7
    %v2335 = vsub.s32 1, %v2334
    %v2336 = vrot.slane %v2327, %v2335
    %v2337 = vlaneseq
    %v2338 = vshrl.u32 %v2337, 7
    %v2339 = vsub.s32 2, %v2338
    %v2340 = vrot.slane %v2327, %v2339
    %v2440 = vunpack.c.l.b16 %v2230
    %v2441 = vunpack.c.h.b16 %v2230
    %v2442 = vunpack.c.l.b16 %v2231
    %v2443 = vunpack.c.l.b16 %v2232
    %v2444 = vunpack.c.h.b16 %v2232
    %v2445 = vunpack.c.l.b16 %v2233
    %v2446 = vunpack.c.l.b16 %v2234
    %v2447 = vunpack.c.h.b16 %v2234
    %v2448 = vunpack.c.l.b16 %v2235
    %v2449 = vunpack.c.l.b16 %v2236
    %v2450 = vunpack.c.h.b16 %v2236
    %v2451 = vunpack.c.l.b16 %v2237
    %v2452 = vunpack.c.l.b16 %v2238
    %v2453 = vunpack.c.h.b16 %v2238
    %v2454 = vunpack.c.l.b16 %v2239
    %v2455 = vunpack.c.l.b16 %v2240
    %v2456 = vunpack.c.h.b16 %v2240
    %v2457 = vunpack.c.l.b16 %v2241
    %v2458 = vunpack.c.l.b16 %v2242
    %v2459 = vunpack.c.h.b16 %v2242
    %v2460 = vunpack.c.l.b16 %v2243
    %v2461 = vunpack.c.l.b16 %v2244
    %v2462 = vunpack.c.h.b16 %v2244
    %v2463 = vunpack.c.l.b16 %v2245
    %v2464 = vunpack.c.l.b16 %v2246
    %v2465 = vunpack.c.h.b16 %v2246
    %v2466 = vunpack.c.l.b16 %v2247
    %v2467 = vunpack.c.l.b16 %v2248
    %v2468 = vunpack.c.h.b16 %v2248
    %v2469 = vunpack.c.l.b16 %v2249
    %v2470 = vunpack.c.l.b16 %v2250
    %v2471 = vunpack.c.h.b16 %v2250
    %v2472 = vunpack.c.l.b16 %v2251
    %v2473 = vunpack.c.l.b16 %v2252
    %v2474 = vunpack.c.h.b16 %v2252
    %v2475 = vunpack.c.l.b16 %v2253
    %v2476 = vunpack.c.l.b16 %v2254
    %v2477 = vunpack.c.h.b16 %v2254
    %v2478 = vunpack.c.l.b16 %v2255
    %v2479 = vunpack.c.l.b16 %v2256
    %v2480 = vunpack.c.h.b16 %v2256
    %v2481 = vunpack.c.l.b16 %v2257
    %v2482 = vunpack.c.l.b16 %v2258
    %v2483 = vunpack.c.h.b16 %v2258
    %v2484 = vunpack.c.l.b16 %v2259
    %v2485 = vunpack.c.l.b16 %v2260
    %v2486 = vunpack.c.h.b16 %v2260
    %v2487 = vunpack.c.l.b16 %v2261
    %v2488 = vunpack.c.l.b16 %v2262
    %v2489 = vunpack.c.h.b16 %v2262
    %v2490 = vunpack.c.l.b16 %v2263
    %v2491 = vunpack.c.l.b16 %v2264
    %v2492 = vunpack.c.h.b16 %v2264
    %v2493 = vunpack.c.l.b16 %v2265
    %v2494 = vunpack.c.l.b16 %v2266
    %v2495 = vunpack.c.h.b16 %v2266
    %v2496 = vunpack.c.l.b16 %v2267
    %v2497 = vunpack.c.l.b16 %v2268
    %v2498 = vunpack.c.h.b16 %v2268
    %v2499 = vunpack.c.l.b16 %v2269
    %v2500 = vunpack.c.l.b16 %v2270
    %v2501 = vunpack.c.h.b16 %v2270
    %v2502 = vunpack.c.l.b16 %v2271
    %v2503 = vunpack.c.l.b16 %v2272
    %v2504 = vunpack.c.h.b16 %v2272
    %v2505 = vunpack.c.l.b16 %v2273
    %v2506 = vunpack.c.l.b16 %v2274
    %v2507 = vunpack.c.h.b16 %v2274
    %v2508 = vunpack.c.l.b16 %v2275
    %v2509 = vunpack.c.l.b16 %v2276
    %v2510 = vunpack.c.h.b16 %v2276
    %v2511 = vunpack.c.l.b16 %v2277
    %v2512 = vunpack.c.l.b16 %v2278
    %v2513 = vunpack.c.h.b16 %v2278
    %v2514 = vunpack.c.l.b16 %v2279
    %v2515 = vunpack.c.l.b16 %v2280
    %v2516 = vunpack.c.h.b16 %v2280
    %v2517 = vunpack.c.l.b16 %v2281
    %v2518 = vunpack.c.l.b16 %v2282
    %v2519 = vunpack.c.h.b16 %v2282
    %v2520 = vunpack.c.l.b16 %v2283
    %v2521 = vunpack.c.l.b16 %v2284
    %v2522 = vunpack.c.h.b16 %v2284
    %v2523 = vunpack.c.l.b16 %v2285
    %v2524 = vunpack.c.l.b16 %v2286
    %v2525 = vunpack.c.h.b16 %v2286
    %v2526 = vunpack.c.l.b16 %v2287
    %v2527 = vunpack.c.l.b16 %v2288
    %v2528 = vunpack.c.h.b16 %v2288
    %v2529 = vunpack.c.l.b16 %v2289
    %v2530 = vunpack.c.l.b16 %v2290
    %v2531 = vunpack.c.h.b16 %v2290
    %v2532 = vunpack.c.l.b16 %v2291
    %v2533 = vunpack.c.l.b16 %v2292
    %v2534 = vunpack.c.h.b16 %v2292
    %v2535 = vunpack.c.l.b16 %v2293
    %v2536 = vunpack.c.l.b16 %v2294
    %v2537 = vunpack.c.h.b16 %v2294
    %v2538 = vunpack.c.l.b16 %v2295
    %v2539 = vunpack.c.l.b16 %v2296
    %v2540 = vunpack.c.h.b16 %v2296
    %v2541 = vunpack.c.l.b16 %v2297
    %v2542 = vunpack.c.l.b16 %v2298
    %v2543 = vunpack.c.h.b16 %v2298
    %v2544 = vunpack.c.l.b16 %v2299
    %v2545 = vunpack.c.l.b16 %v2300
    %v2546 = vunpack.c.h.b16 %v2300
    %v2547 = vunpack.c.l.b16 %v2301
    %v2548 = vunpack.c.l.b16 %v2302
    %v2549 = vunpack.c.h.b16 %v2302
    %v2550 = vunpack.c.l.b16 %v2303
    %v2551 = vunpack.c.l.b16 %v2304
    %v2552 = vunpack.c.h.b16 %v2304
    %v2553 = vunpack.c.l.b16 %v2305
    %v2554 = vunpack.c.l.b16 %v2306
    %v2555 = vunpack.c.h.b16 %v2306
    %v2556 = vunpack.c.l.b16 %v2307
    %v2557 = vunpack.c.l.b16 %v2308
    %v2558 = vunpack.c.h.b16 %v2308
    %v2559 = vunpack.c.l.b16 %v2309
    %v2560 = vunpack.c.l.b16 %v2310
    %v2561 = vunpack.c.h.b16 %v2310
    %v2562 = vunpack.c.l.b16 %v2311
    %v2563 = vunpack.c.l.b16 %v2312
    %v2564 = vunpack.c.h.b16 %v2312
    %v2565 = vunpack.c.l.b16 %v2313
    %v2566 = vunpack.c.l.b16 %v2314
    %v2567 = vunpack.c.h.b16 %v2314
    %v2568 = vunpack.c.l.b16 %v2315
    %v2569 = vunpack.c.l.b16 %v2316
    %v2570 = vunpack.c.h.b16 %v2316
    %v2571 = vunpack.c.l.b16 %v2317
    %v2572 = vunpack.c.l.b16 %v2318
    %v2573 = vunpack.c.h.b16 %v2318
    %v2574 = vunpack.c.l.b16 %v2319
    %v2575 = vunpack.c.l.b16 %v2320
    %v2576 = vunpack.c.h.b16 %v2320
    %v2577 = vunpack.c.l.b16 %v2321
    %v2578 = vunpack.c.l.b16 %v2322
    %v2579 = vunpack.c.h.b16 %v2322
    %v2580 = vunpack.c.l.b16 %v2323
    %v2581 = vunpack.c.l.b16 %v2324
    %v2582 = vunpack.c.h.b16 %v2324
    %v2583 = vunpack.c.l.b16 %v2325
    %v2584 = vpack.c.b16 %v2443, %v2440
    %v2585 = vpack.c.b16 %v2444, %v2441
    %v2586 = vpack.c.b16 %v2445, %v2442
    %v2587 = vpack.c.b16 %v2449, %v2446
    %v2588 = vpack.c.b16 %v2450, %v2447
    %v2589 = vpack.c.b16 %v2451, %v2448
    %v2590 = vpack.c.b16 %v2455, %v2452
    %v2591 = vpack.c.b16 %v2456, %v2453
    %v2592 = vpack.c.b16 %v2457, %v2454
    %v2593 = vpack.c.b16 %v2461, %v2458
    %v2594 = vpack.c.b16 %v2462, %v2459
    %v2595 = vpack.c.b16 %v2463, %v2460
    %v2596 = vpack.c.b16 %v2467, %v2464
    %v2597 = vpack.c.b16 %v2468, %v2465
    %v2598 = vpack.c.b16 %v2469, %v2466
    %v2599 = vpack.c.b16 %v2473, %v2470
    %v2600 = vpack.c.b16 %v2474, %v2471
    %v2601 = vpack.c.b16 %v2475, %v2472
    %v2602 = vpack.c.b16 %v2479, %v2476
    %v2603 = vpack.c.b16 %v2480, %v2477
    %v2604 = vpack.c.b16 %v2481, %v2478
    %v2605 = vpack.c.b16 %v2485, %v2482
    %v2606 = vpack.c.b16 %v2486, %v2483
    %v2607 = vpack.c.b16 %v2487, %v2484
    %v2608 = vpack.c.b16 %v2491, %v2488
    %v2609 = vpack.c.b16 %v2492, %v2489
    %v2610 = vpack.c.b16 %v2493, %v2490
    %v2611 = vpack.c.b16 %v2497, %v2494
    %v2612 = vpack.c.b16 %v2498, %v2495
    %v2613 = vpack.c.b16 %v2499, %v2496
    %v2614 = vpack.c.b16 %v2503, %v2500
    %v2615 = vpack.c.b16 %v2504, %v2501
    %v2616 = vpack.c.b16 %v2505, %v2502
    %v2617 = vpack.c.b16 %v2509, %v2506
    %v2618 = vpack.c.b16 %v2510, %v2507
    %v2619 = vpack.c.b16 %v2511, %v2508
    %v2620 = vpack.c.b16 %v2515, %v2512
    %v2621 = vpack.c.b16 %v2516, %v2513
    %v2622 = vpack.c.b16 %v2517, %v2514
    %v2623 = vpack.c.b16 %v2521, %v2518
    %v2624 = vpack.c.b16 %v2522, %v2519
    %v2625 = vpack.c.b16 %v2523, %v2520
    %v2626 = vpack.c.b16 %v2527, %v2524
    %v2627 = vpack.c.b16 %v2528, %v2525
    %v2628 = vpack.c.b16 %v2529, %v2526
    %v2629 = vpack.c.b16 %v2533, %v2530
    %v2630 = vpack.c.b16 %v2534, %v2531
    %v2631 = vpack.c.b16 %v2535, %v2532
    %v2632 = vpack.c.b16 %v2539, %v2536
    %v2633 = vpack.c.b16 %v2540, %v2537
    %v2634 = vpack.c.b16 %v2541, %v2538
    %v2635 = vpack.c.b16 %v2545, %v2542
    %v2636 = vpack.c.b16 %v2546, %v2543
    %v2637 = vpack.c.b16 %v2547, %v2544
    %v2638 = vpack.c.b16 %v2551, %v2548
    %v2639 = vpack.c.b16 %v2552, %v2549
    %v2640 = vpack.c.b16 %v2553, %v2550
    %v2641 = vpack.c.b16 %v2557, %v2554
    %v2642 = vpack.c.b16 %v2558, %v2555
    %v2643 = vpack.c.b16 %v2559, %v2556
    %v2644 = vpack.c.b16 %v2563, %v2560
    %v2645 = vpack.c.b16 %v2564, %v2561
    %v2646 = vpack.c.b16 %v2565, %v2562
    %v2647 = vpack.c.b16 %v2569, %v2566
    %v2648 = vpack.c.b16 %v2570, %v2567
    %v2649 = vpack.c.b16 %v2571, %v2568
    %v2650 = vpack.c.b16 %v2575, %v2572
    %v2651 = vpack.c.b16 %v2576, %v2573
    %v2652 = vpack.c.b16 %v2577, %v2574
    %v2653 = vpack.c.b16 %v2581, %v2578
    %v2654 = vpack.c.b16 %v2582, %v2579
    %v2655 = vpack.c.b16 %v2583, %v2580
    %2728 = vmatprep.subr.bf16.mxu0 %v2585
    %2729 = vmatpush1.bf16.msra.mxu0 %v2584
    %2730 = vmatprep.subr.bf16.mxu0 %v2588
    %2731 = vmatpush1.bf16.msra.mxu0 %v2587
    %2732 = vmatprep.subr.bf16.mxu0 %v2591
    %2733 = vmatpush1.bf16.msra.mxu0 %v2590
    %2734 = vmatprep.subr.bf16.mxu0 %v2594
    %2735 = vmatpush1.bf16.msra.mxu0 %v2593
    %2736 = vmatprep.subr.bf16.mxu0 %v2597
    %2737 = vmatpush1.bf16.msra.mxu0 %v2596
    %2738 = vmatprep.subr.bf16.mxu0 %v2600
    %2739 = vmatpush1.bf16.msra.mxu0 %v2599
    %2740 = vmatprep.subr.bf16.mxu0 %v2603
    %2741 = vmatpush1.bf16.msra.mxu0 %v2602
    %2742 = vmatprep.subr.bf16.mxu0 %v2606
    %2743 = vmatpush1.bf16.msra.mxu0 %v2605
    %2744 = vmatprep.subr.bf16.mxu0 %v2609
    %2745 = vmatpush1.bf16.msra.mxu0 %v2608
    %2746 = vmatprep.subr.bf16.mxu0 %v2612
    %2747 = vmatpush1.bf16.msra.mxu0 %v2611
    %2748 = vmatprep.subr.bf16.mxu0 %v2615
    %2749 = vmatpush1.bf16.msra.mxu0 %v2614
    %2750 = vmatprep.subr.bf16.mxu0 %v2618
    %2751 = vmatpush1.bf16.msra.mxu0 %v2617
    %2752 = vmatprep.subr.bf16.mxu0 %v2621
    %2753 = vmatpush1.bf16.msra.mxu0 %v2620
    %2754 = vmatprep.subr.bf16.mxu0 %v2624
    %2755 = vmatpush1.bf16.msra.mxu0 %v2623
    %2756 = vmatprep.subr.bf16.mxu0 %v2627
    %2757 = vmatpush1.bf16.msra.mxu0 %v2626
    %2758 = vmatprep.subr.bf16.mxu0 %v2630
    %2759 = vmatpush1.bf16.msra.mxu0 %v2629
    %2760 = vmatprep.mubr.bf16.mxu0 %v993
    %2761 = vmatmul.mubr.bf16.gmra.mrb[0].mxu0 %v992
    %v2762 = vpop.f32.mrb[0].mxu0
    %v2763 = vadd.f32 %v2332, %v2762
    %v2764 = vpop.f32.mrb[0].mxu0
    %v2765 = vadd.f32 %v2336, %v2764
    %v2766 = vpop.f32.mrb[0].mxu0
    %v2767 = vadd.f32 %v2332, %v2766
    %v2768 = vpop.f32.mrb[0].mxu0
    %v2769 = vadd.f32 %v2336, %v2768
    %2770 = vdwg.mxu0
    %2771 = vmatprep.subr.bf16.mxu0 %v2633
    %2772 = vmatpush1.bf16.msra.mxu0 %v2632
    %2773 = vmatprep.subr.bf16.mxu0 %v2636
    %2774 = vmatpush1.bf16.msra.mxu0 %v2635
    %2775 = vmatprep.subr.bf16.mxu0 %v2639
    %2776 = vmatpush1.bf16.msra.mxu0 %v2638
    %2777 = vmatprep.subr.bf16.mxu0 %v2642
    %2778 = vmatpush1.bf16.msra.mxu0 %v2641
    %2779 = vmatprep.subr.bf16.mxu0 %v2645
    %2780 = vmatpush1.bf16.msra.mxu0 %v2644
    %2781 = vmatprep.subr.bf16.mxu0 %v2648
    %2782 = vmatpush1.bf16.msra.mxu0 %v2647
    %2783 = vmatprep.subr.bf16.mxu0 %v2651
    %2784 = vmatpush1.bf16.msra.mxu0 %v2650
    %2785 = vmatprep.subr.bf16.mxu0 %v2654
    %2786 = vmatpush1.bf16.msra.mxu0 %v2653
    %2787 = vmatprep.subr.bf16.mxu0 0
    %2788 = vmatpush1.bf16.msra.mxu0 0
    %2789 = vmatprep.subr.bf16.mxu0 0
    %2790 = vmatpush1.bf16.msra.mxu0 0
    %2791 = vmatprep.subr.bf16.mxu0 0
    %2792 = vmatpush1.bf16.msra.mxu0 0
    %2793 = vmatprep.subr.bf16.mxu0 0
    %2794 = vmatpush1.bf16.msra.mxu0 0
    %2795 = vmatprep.subr.bf16.mxu0 0
    %2796 = vmatpush1.bf16.msra.mxu0 0
    %2797 = vmatprep.subr.bf16.mxu0 0
    %2798 = vmatpush1.bf16.msra.mxu0 0
    %2799 = vmatprep.subr.bf16.mxu0 0
    %2800 = vmatpush1.bf16.msra.mxu0 0
    %2801 = vmatprep.subr.bf16.mxu0 0
    %2802 = vmatpush1.bf16.msra.mxu0 0
    %2803 = vmatprep.mubr.bf16.mxu0 0
    %2804 = vmatmul.mubr.bf16.gmra.mrb[0].mxu0 %v994
    %v2805 = vpop.f32.mrb[0].mxu0
    %v2806 = vadd.f32 %v2763, %v2805
    %v2807 = vpop.f32.mrb[0].mxu0
    %v2808 = vadd.f32 %v2765, %v2807
    %v2809 = vpop.f32.mrb[0].mxu0
    %v2810 = vadd.f32 %v2767, %v2809
    %v2811 = vpop.f32.mrb[0].mxu0
    %v2812 = vadd.f32 %v2769, %v2811
    %2813 = vdwg.mxu0
    %2814 = vmatprep.subr.bf16.mxu0 0
    %2815 = vmatpush1.bf16.msra.mxu0 %v2586
    %2816 = vmatprep.subr.bf16.mxu0 0
    %2817 = vmatpush1.bf16.msra.mxu0 %v2589
    %2818 = vmatprep.subr.bf16.mxu0 0
    %2819 = vmatpush1.bf16.msra.mxu0 %v2592
    %2820 = vmatprep.subr.bf16.mxu0 0
    %2821 = vmatpush1.bf16.msra.mxu0 %v2595
    %2822 = vmatprep.subr.bf16.mxu0 0
    %2823 = vmatpush1.bf16.msra.mxu0 %v2598
    %2824 = vmatprep.subr.bf16.mxu0 0
    %2825 = vmatpush1.bf16.msra.mxu0 %v2601
    %2826 = vmatprep.subr.bf16.mxu0 0
    %2827 = vmatpush1.bf16.msra.mxu0 %v2604
    %2828 = vmatprep.subr.bf16.mxu0 0
    %2829 = vmatpush1.bf16.msra.mxu0 %v2607
    %2830 = vmatprep.subr.bf16.mxu0 0
    %2831 = vmatpush1.bf16.msra.mxu0 %v2610
    %2832 = vmatprep.subr.bf16.mxu0 0
    %2833 = vmatpush1.bf16.msra.mxu0 %v2613
    %2834 = vmatprep.subr.bf16.mxu0 0
    %2835 = vmatpush1.bf16.msra.mxu0 %v2616
    %2836 = vmatprep.subr.bf16.mxu0 0
    %2837 = vmatpush1.bf16.msra.mxu0 %v2619
    %2838 = vmatprep.subr.bf16.mxu0 0
    %2839 = vmatpush1.bf16.msra.mxu0 %v2622
    %2840 = vmatprep.subr.bf16.mxu0 0
    %2841 = vmatpush1.bf16.msra.mxu0 %v2625
    %2842 = vmatprep.subr.bf16.mxu0 0
    %2843 = vmatpush1.bf16.msra.mxu0 %v2628
    %2844 = vmatprep.subr.bf16.mxu0 0
    %2845 = vmatpush1.bf16.msra.mxu0 %v2631
    %2846 = vmatprep.mubr.bf16.mxu0 %v993
    %2847 = vmatmul.mubr.bf16.gmra.mrb[0].mxu0 %v992
    %v2848 = vpop.f32.mrb[0].mxu0
    %v2849 = vadd.f32 %v2340, %v2848
    %v2850 = vpop.f32.mrb[0].mxu0
    %v2851 = vpop.f32.mrb[0].mxu0
    %v2852 = vadd.f32 %v2340, %v2851
    %v2853 = vpop.f32.mrb[0].mxu0
    %2854 = vdwg.mxu0
    %2855 = vmatprep.subr.bf16.mxu0 0
    %2856 = vmatpush1.bf16.msra.mxu0 %v2634
    %2857 = vmatprep.subr.bf16.mxu0 0
    %2858 = vmatpush1.bf16.msra.mxu0 %v2637
    %2859 = vmatprep.subr.bf16.mxu0 0
    %2860 = vmatpush1.bf16.msra.mxu0 %v2640
    %2861 = vmatprep.subr.bf16.mxu0 0
    %2862 = vmatpush1.bf16.msra.mxu0 %v2643
    %2863 = vmatprep.subr.bf16.mxu0 0
    %2864 = vmatpush1.bf16.msra.mxu0 %v2646
    %2865 = vmatprep.subr.bf16.mxu0 0
    %2866 = vmatpush1.bf16.msra.mxu0 %v2649
    %2867 = vmatprep.subr.bf16.mxu0 0
    %2868 = vmatpush1.bf16.msra.mxu0 %v2652
    %2869 = vmatprep.subr.bf16.mxu0 0
    %2870 = vmatpush1.bf16.msra.mxu0 %v2655
    %2871 = vmatprep.subr.bf16.mxu0 0
    %2872 = vmatpush1.bf16.msra.mxu0 0
    %2873 = vmatprep.subr.bf16.mxu0 0
    %2874 = vmatpush1.bf16.msra.mxu0 0
    %2875 = vmatprep.subr.bf16.mxu0 0
    %2876 = vmatpush1.bf16.msra.mxu0 0
    %2877 = vmatprep.subr.bf16.mxu0 0
    %2878 = vmatpush1.bf16.msra.mxu0 0
    %2879 = vmatprep.subr.bf16.mxu0 0
    %2880 = vmatpush1.bf16.msra.mxu0 0
    %2881 = vmatprep.subr.bf16.mxu0 0
    %2882 = vmatpush1.bf16.msra.mxu0 0
    %2883 = vmatprep.subr.bf16.mxu0 0
    %2884 = vmatpush1.bf16.msra.mxu0 0
    %2885 = vmatprep.subr.bf16.mxu0 0
    %2886 = vmatpush1.bf16.msra.mxu0 0
    %2887 = vmatprep.mubr.bf16.mxu0 0
    %2888 = vmatmul.mubr.bf16.gmra.mrb[0].mxu0 %v994
    %v2889 = vpop.f32.mrb[0].mxu0
    %v2890 = vadd.f32 %v2849, %v2889
    %v2891 = vpop.f32.mrb[0].mxu0
    %v2892 = vpop.f32.mrb[0].mxu0
    %v2893 = vadd.f32 %v2852, %v2892
    %v2894 = vpop.f32.mrb[0].mxu0
    %2895 = vdwg.mxu0
    %2896 = vst [vmem:[#allocation2 + $0x78] sm:$0xff] %v2806
    %2897 = vst [vmem:[#allocation2 + $0x80] sm:$0xff] %v2808
    %2898 = vst [vmem:[#allocation2 + $0x88] sm:$0xff] %v2890
    %2899 = vst [vmem:[#allocation2 + $0xa8] sm:$0xff] %v2810
    %2900 = vst [vmem:[#allocation2 + $0xb0] sm:$0xff] %v2812
    %2901 = vst [vmem:[#allocation2 + $0xb8] sm:$0xff] %v2893
    // While loop
    $region86: #{trackers_forward.1} parent=1 // loop_pre_header
      _
    $region87: #{trackers_forward.1} parent=1 // loop_header
      %s2903 = sphi 0, %s2905
      %p2904 = scmp.ge.s32.totalorder %s2903, %s173
      %v2908 = vphi 0.0, %v3714
      %v2909 = vphi 0.0, %v4519
      %v2910 = vphi 0.0, %v3718
      %v2911 = vphi 0.0, %v4520
    $region88: #{trackers_forward.1} parent=1 // loop_header_branch
      %2907 = sbr.rel (%p2904) target = $region92
    $region89: #{trackers_forward.1} parent=1 // loop_body
      %p2912 = scmp.lt.s32.totalorder %s2903, %s170
      %p2913 = scmp.lt.s32.totalorder %s2903, %s171
      %s2914 = sshra.s32 %s2903, 3
      %s2915 = sand.u32 %s2903, 7
      %s2916 = sshra.s32 %s2903, 3
      %s2917 = sand.u32 %s2903, 7
      %s2918 = smul.u32 %s2914, 6
      %s2919 = smul.u32 %s2918, 8
      %s2920 = sadd.s32 %s2919, %s2917
      %s2921 = scalar_lea.vmem [#allocation2], %s2920
      %v2922 = vld [vmem:[%s2921] ss:$8 sm:$0xf]
      %v2923 = vld [vmem:[%s2921] ss:$8 sm:$0x30]
      %v2924 = vor.u32 %v2922, %v2923
      %v2925 = vpack.c.bf16 %v2908, %v2908
      %v2926 = vpack.c.bf16 %v2910, %v2910
      %v2927 = vld [vmem:[#allocation13] sm:$0xff]
      %v2928 = vld [vmem:[#allocation13 + $0x8] sm:$0xff]
      %v2929 = vld [vmem:[#allocation13 + $0x10] sm:$0xff]
      %v2930 = vld [vmem:[#allocation13 + $0x18] sm:$0xff]
      %v2931 = vld [vmem:[#allocation13 + $0x20] sm:$0xff]
      %v2932 = vld [vmem:[#allocation13 + $0x28] sm:$0xff]
      %v2933 = vld [vmem:[#allocation13 + $0x30] sm:$0xff]
      %v2934 = vld [vmem:[#allocation13 + $0x38] sm:$0xff]
      %v2935 = vld [vmem:[#allocation13 + $0x40] sm:$0xff]
      %v2936 = vld [vmem:[#allocation13 + $0x48] sm:$0xff]
      %v2937 = vld [vmem:[#allocation13 + $0x50] sm:$0xff]
      %v2938 = vld [vmem:[#allocation13 + $0x58] sm:$0xff]
      %v2939 = vld [vmem:[#allocation13 + $0x60] sm:$0xff]
      %v2940 = vld [vmem:[#allocation13 + $0x68] sm:$0xff]
      %v2941 = vld [vmem:[#allocation13 + $0x70] sm:$0xff]
      %v2942 = vld [vmem:[#allocation13 + $0x78] sm:$0xff]
      %v2943 = vld [vmem:[#allocation13 + $0x80] sm:$0xff]
      %v2944 = vld [vmem:[#allocation13 + $0x88] sm:$0xff]
      %v2945 = vld [vmem:[#allocation13 + $0x90] sm:$0xff]
      %v2946 = vld [vmem:[#allocation13 + $0x98] sm:$0xff]
      %v2947 = vld [vmem:[#allocation13 + $0xa0] sm:$0xff]
      %v2948 = vld [vmem:[#allocation13 + $0xa8] sm:$0xff]
      %v2949 = vld [vmem:[#allocation13 + $0xb0] sm:$0xff]
      %v2950 = vld [vmem:[#allocation13 + $0xb8] sm:$0xff]
      %v2951 = vld [vmem:[#allocation13 + $0xc0] sm:$0xff]
      %v2952 = vld [vmem:[#allocation13 + $0xc8] sm:$0xff]
      %v2953 = vld [vmem:[#allocation13 + $0xd0] sm:$0xff]
      %v2954 = vld [vmem:[#allocation13 + $0xd8] sm:$0xff]
      %v2955 = vld [vmem:[#allocation13 + $0xe0] sm:$0xff]
      %v2956 = vld [vmem:[#allocation13 + $0xe8] sm:$0xff]
      %v2957 = vld [vmem:[#allocation13 + $0xf0] sm:$0xff]
      %v2958 = vld [vmem:[#allocation13 + $0xf8] sm:$0xff]
      %v2959 = vld [vmem:[#allocation13 + $0x100] sm:$0xff]
      %v2960 = vld [vmem:[#allocation13 + $0x108] sm:$0xff]
      %v2961 = vld [vmem:[#allocation13 + $0x110] sm:$0xff]
      %v2962 = vld [vmem:[#allocation13 + $0x118] sm:$0xff]
      %v2963 = vld [vmem:[#allocation13 + $0x120] sm:$0xff]
      %v2964 = vld [vmem:[#allocation13 + $0x128] sm:$0xff]
      %v2965 = vld [vmem:[#allocation13 + $0x130] sm:$0xff]
      %v2966 = vld [vmem:[#allocation13 + $0x138] sm:$0xff]
      %v2967 = vld [vmem:[#allocation13 + $0x140] sm:$0xff]
      %v2968 = vld [vmem:[#allocation13 + $0x148] sm:$0xff]
      %v2969 = vld [vmem:[#allocation13 + $0x150] sm:$0xff]
      %v2970 = vld [vmem:[#allocation13 + $0x158] sm:$0xff]
      %v2971 = vld [vmem:[#allocation13 + $0x160] sm:$0xff]
      %v2972 = vld [vmem:[#allocation13 + $0x168] sm:$0xff]
      %v2973 = vld [vmem:[#allocation13 + $0x170] sm:$0xff]
      %v2974 = vld [vmem:[#allocation13 + $0x178] sm:$0xff]
      %v2975 = vld [vmem:[#allocation13 + $0x180] sm:$0xff]
      %v2976 = vld [vmem:[#allocation13 + $0x188] sm:$0xff]
      %v2977 = vld [vmem:[#allocation13 + $0x190] sm:$0xff]
      %v2978 = vld [vmem:[#allocation13 + $0x198] sm:$0xff]
      %v2979 = vld [vmem:[#allocation13 + $0x1a0] sm:$0xff]
      %v2980 = vld [vmem:[#allocation13 + $0x1a8] sm:$0xff]
      %v2981 = vld [vmem:[#allocation13 + $0x1b0] sm:$0xff]
      %v2982 = vld [vmem:[#allocation13 + $0x1b8] sm:$0xff]
      %v2983 = vld [vmem:[#allocation13 + $0x1c0] sm:$0xff]
      %v2984 = vld [vmem:[#allocation13 + $0x1c8] sm:$0xff]
      %v2985 = vld [vmem:[#allocation13 + $0x1d0] sm:$0xff]
      %v2986 = vld [vmem:[#allocation13 + $0x1d8] sm:$0xff]
      %v2987 = vld [vmem:[#allocation13 + $0x1e0] sm:$0xff]
      %v2988 = vld [vmem:[#allocation13 + $0x1e8] sm:$0xff]
      %v2989 = vld [vmem:[#allocation13 + $0x1f0] sm:$0xff]
      %v2990 = vld [vmem:[#allocation13 + $0x1f8] sm:$0xff]
      %v2991 = vld [vmem:[#allocation13 + $0x200] sm:$0xff]
      %v2992 = vld [vmem:[#allocation13 + $0x208] sm:$0xff]
      %v2993 = vld [vmem:[#allocation13 + $0x210] sm:$0xff]
      %v2994 = vld [vmem:[#allocation13 + $0x218] sm:$0xff]
      %v2995 = vld [vmem:[#allocation13 + $0x220] sm:$0xff]
      %v2996 = vld [vmem:[#allocation13 + $0x228] sm:$0xff]
      %v2997 = vld [vmem:[#allocation13 + $0x230] sm:$0xff]
      %v2998 = vld [vmem:[#allocation13 + $0x238] sm:$0xff]
      %v2999 = vld [vmem:[#allocation13 + $0x240] sm:$0xff]
      %v3000 = vld [vmem:[#allocation13 + $0x248] sm:$0xff]
      %v3001 = vld [vmem:[#allocation13 + $0x250] sm:$0xff]
      %v3002 = vld [vmem:[#allocation13 + $0x258] sm:$0xff]
      %v3003 = vld [vmem:[#allocation13 + $0x260] sm:$0xff]
      %v3004 = vld [vmem:[#allocation13 + $0x268] sm:$0xff]
      %v3005 = vld [vmem:[#allocation13 + $0x270] sm:$0xff]
      %v3006 = vld [vmem:[#allocation13 + $0x278] sm:$0xff]
      %v3007 = vld [vmem:[#allocation13 + $0x280] sm:$0xff]
      %v3008 = vld [vmem:[#allocation13 + $0x288] sm:$0xff]
      %v3009 = vld [vmem:[#allocation13 + $0x290] sm:$0xff]
      %v3010 = vld [vmem:[#allocation13 + $0x298] sm:$0xff]
      %v3011 = vld [vmem:[#allocation13 + $0x2a0] sm:$0xff]
      %v3012 = vld [vmem:[#allocation13 + $0x2a8] sm:$0xff]
      %v3013 = vld [vmem:[#allocation13 + $0x2b0] sm:$0xff]
      %v3014 = vld [vmem:[#allocation13 + $0x2b8] sm:$0xff]
      %v3015 = vld [vmem:[#allocation13 + $0x2c0] sm:$0xff]
      %v3016 = vld [vmem:[#allocation13 + $0x2c8] sm:$0xff]
      %v3017 = vld [vmem:[#allocation13 + $0x2d0] sm:$0xff]
      %v3018 = vld [vmem:[#allocation13 + $0x2d8] sm:$0xff]
      %v3019 = vld [vmem:[#allocation13 + $0x2e0] sm:$0xff]
      %v3020 = vld [vmem:[#allocation13 + $0x2e8] sm:$0xff]
      %v3021 = vld [vmem:[#allocation13 + $0x2f0] sm:$0xff]
      %v3022 = vld [vmem:[#allocation13 + $0x2f8] sm:$0xff]
      %v3023 = vld [vmem:[%s8] sm:$0x3f]
      %v3120 = vunpack.c.l.b16 %v2927
      %v3121 = vunpack.c.h.b16 %v2927
      %v3122 = vunpack.c.l.b16 %v2928
      %v3123 = vunpack.c.h.b16 %v2928
      %v3124 = vunpack.c.l.b16 %v2929
      %v3125 = vunpack.c.h.b16 %v2929
      %v3126 = vunpack.c.l.b16 %v2930
      %v3127 = vunpack.c.h.b16 %v2930
      %v3128 = vunpack.c.l.b16 %v2931
      %v3129 = vunpack.c.h.b16 %v2931
      %v3130 = vunpack.c.l.b16 %v2932
      %v3131 = vunpack.c.h.b16 %v2932
      %v3132 = vunpack.c.l.b16 %v2933
      %v3133 = vunpack.c.h.b16 %v2933
      %v3134 = vunpack.c.l.b16 %v2934
      %v3135 = vunpack.c.h.b16 %v2934
      %v3136 = vunpack.c.l.b16 %v2935
      %v3137 = vunpack.c.h.b16 %v2935
      %v3138 = vunpack.c.l.b16 %v2936
      %v3139 = vunpack.c.h.b16 %v2936
      %v3140 = vunpack.c.l.b16 %v2937
      %v3141 = vunpack.c.h.b16 %v2937
      %v3142 = vunpack.c.l.b16 %v2938
      %v3143 = vunpack.c.h.b16 %v2938
      %v3144 = vunpack.c.l.b16 %v2939
      %v3145 = vunpack.c.h.b16 %v2939
      %v3146 = vunpack.c.l.b16 %v2940
      %v3147 = vunpack.c.h.b16 %v2940
      %v3148 = vunpack.c.l.b16 %v2941
      %v3149 = vunpack.c.h.b16 %v2941
      %v3150 = vunpack.c.l.b16 %v2942
      %v3151 = vunpack.c.h.b16 %v2942
      %v3152 = vunpack.c.l.b16 %v2943
      %v3153 = vunpack.c.h.b16 %v2943
      %v3154 = vunpack.c.l.b16 %v2944
      %v3155 = vunpack.c.h.b16 %v2944
      %v3156 = vunpack.c.l.b16 %v2945
      %v3157 = vunpack.c.h.b16 %v2945
      %v3158 = vunpack.c.l.b16 %v2946
      %v3159 = vunpack.c.h.b16 %v2946
      %v3160 = vunpack.c.l.b16 %v2947
      %v3161 = vunpack.c.h.b16 %v2947
      %v3162 = vunpack.c.l.b16 %v2948
      %v3163 = vunpack.c.h.b16 %v2948
      %v3164 = vunpack.c.l.b16 %v2949
      %v3165 = vunpack.c.h.b16 %v2949
      %v3166 = vunpack.c.l.b16 %v2950
      %v3167 = vunpack.c.h.b16 %v2950
      %v3168 = vunpack.c.l.b16 %v2951
      %v3169 = vunpack.c.h.b16 %v2951
      %v3170 = vunpack.c.l.b16 %v2952
      %v3171 = vunpack.c.h.b16 %v2952
      %v3172 = vunpack.c.l.b16 %v2953
      %v3173 = vunpack.c.h.b16 %v2953
      %v3174 = vunpack.c.l.b16 %v2954
      %v3175 = vunpack.c.h.b16 %v2954
      %v3176 = vunpack.c.l.b16 %v2955
      %v3177 = vunpack.c.h.b16 %v2955
      %v3178 = vunpack.c.l.b16 %v2956
      %v3179 = vunpack.c.h.b16 %v2956
      %v3180 = vunpack.c.l.b16 %v2957
      %v3181 = vunpack.c.h.b16 %v2957
      %v3182 = vunpack.c.l.b16 %v2958
      %v3183 = vunpack.c.h.b16 %v2958
      %v3184 = vunpack.c.l.b16 %v2959
      %v3185 = vunpack.c.h.b16 %v2959
      %v3186 = vunpack.c.l.b16 %v2960
      %v3187 = vunpack.c.h.b16 %v2960
      %v3188 = vunpack.c.l.b16 %v2961
      %v3189 = vunpack.c.h.b16 %v2961
      %v3190 = vunpack.c.l.b16 %v2962
      %v3191 = vunpack.c.h.b16 %v2962
      %v3192 = vunpack.c.l.b16 %v2963
      %v3193 = vunpack.c.h.b16 %v2963
      %v3194 = vunpack.c.l.b16 %v2964
      %v3195 = vunpack.c.h.b16 %v2964
      %v3196 = vunpack.c.l.b16 %v2965
      %v3197 = vunpack.c.h.b16 %v2965
      %v3198 = vunpack.c.l.b16 %v2966
      %v3199 = vunpack.c.h.b16 %v2966
      %v3200 = vunpack.c.l.b16 %v2967
      %v3201 = vunpack.c.h.b16 %v2967
      %v3202 = vunpack.c.l.b16 %v2968
      %v3203 = vunpack.c.h.b16 %v2968
      %v3204 = vunpack.c.l.b16 %v2969
      %v3205 = vunpack.c.h.b16 %v2969
      %v3206 = vunpack.c.l.b16 %v2970
      %v3207 = vunpack.c.h.b16 %v2970
      %v3208 = vunpack.c.l.b16 %v2971
      %v3209 = vunpack.c.h.b16 %v2971
      %v3210 = vunpack.c.l.b16 %v2972
      %v3211 = vunpack.c.h.b16 %v2972
      %v3212 = vunpack.c.l.b16 %v2973
      %v3213 = vunpack.c.h.b16 %v2973
      %v3214 = vunpack.c.l.b16 %v2974
      %v3215 = vunpack.c.h.b16 %v2974
      %v3216 = vunpack.c.l.b16 %v2975
      %v3217 = vunpack.c.h.b16 %v2975
      %v3218 = vunpack.c.l.b16 %v2976
      %v3219 = vunpack.c.h.b16 %v2976
      %v3220 = vunpack.c.l.b16 %v2977
      %v3221 = vunpack.c.h.b16 %v2977
      %v3222 = vunpack.c.l.b16 %v2978
      %v3223 = vunpack.c.h.b16 %v2978
      %v3224 = vunpack.c.l.b16 %v2979
      %v3225 = vunpack.c.h.b16 %v2979
      %v3226 = vunpack.c.l.b16 %v2980
      %v3227 = vunpack.c.h.b16 %v2980
      %v3228 = vunpack.c.l.b16 %v2981
      %v3229 = vunpack.c.h.b16 %v2981
      %v3230 = vunpack.c.l.b16 %v2982
      %v3231 = vunpack.c.h.b16 %v2982
      %v3232 = vunpack.c.l.b16 %v2983
      %v3233 = vunpack.c.h.b16 %v2983
      %v3234 = vunpack.c.l.b16 %v2984
      %v3235 = vunpack.c.h.b16 %v2984
      %v3236 = vunpack.c.l.b16 %v2985
      %v3237 = vunpack.c.h.b16 %v2985
      %v3238 = vunpack.c.l.b16 %v2986
      %v3239 = vunpack.c.h.b16 %v2986
      %v3240 = vunpack.c.l.b16 %v2987
      %v3241 = vunpack.c.h.b16 %v2987
      %v3242 = vunpack.c.l.b16 %v2988
      %v3243 = vunpack.c.h.b16 %v2988
      %v3244 = vunpack.c.l.b16 %v2989
      %v3245 = vunpack.c.h.b16 %v2989
      %v3246 = vunpack.c.l.b16 %v2990
      %v3247 = vunpack.c.h.b16 %v2990
      %v3248 = vunpack.c.l.b16 %v2991
      %v3249 = vunpack.c.h.b16 %v2991
      %v3250 = vunpack.c.l.b16 %v2992
      %v3251 = vunpack.c.h.b16 %v2992
      %v3252 = vunpack.c.l.b16 %v2993
      %v3253 = vunpack.c.h.b16 %v2993
      %v3254 = vunpack.c.l.b16 %v2994
      %v3255 = vunpack.c.h.b16 %v2994
      %v3256 = vunpack.c.l.b16 %v2995
      %v3257 = vunpack.c.h.b16 %v2995
      %v3258 = vunpack.c.l.b16 %v2996
      %v3259 = vunpack.c.h.b16 %v2996
      %v3260 = vunpack.c.l.b16 %v2997
      %v3261 = vunpack.c.h.b16 %v2997
      %v3262 = vunpack.c.l.b16 %v2998
      %v3263 = vunpack.c.h.b16 %v2998
      %v3264 = vunpack.c.l.b16 %v2999
      %v3265 = vunpack.c.h.b16 %v2999
      %v3266 = vunpack.c.l.b16 %v3000
      %v3267 = vunpack.c.h.b16 %v3000
      %v3268 = vunpack.c.l.b16 %v3001
      %v3269 = vunpack.c.h.b16 %v3001
      %v3270 = vunpack.c.l.b16 %v3002
      %v3271 = vunpack.c.h.b16 %v3002
      %v3272 = vunpack.c.l.b16 %v3003
      %v3273 = vunpack.c.h.b16 %v3003
      %v3274 = vunpack.c.l.b16 %v3004
      %v3275 = vunpack.c.h.b16 %v3004
      %v3276 = vunpack.c.l.b16 %v3005
      %v3277 = vunpack.c.h.b16 %v3005
      %v3278 = vunpack.c.l.b16 %v3006
      %v3279 = vunpack.c.h.b16 %v3006
      %v3280 = vunpack.c.l.b16 %v3007
      %v3281 = vunpack.c.h.b16 %v3007
      %v3282 = vunpack.c.l.b16 %v3008
      %v3283 = vunpack.c.h.b16 %v3008
      %v3284 = vunpack.c.l.b16 %v3009
      %v3285 = vunpack.c.h.b16 %v3009
      %v3286 = vunpack.c.l.b16 %v3010
      %v3287 = vunpack.c.h.b16 %v3010
      %v3288 = vunpack.c.l.b16 %v3011
      %v3289 = vunpack.c.h.b16 %v3011
      %v3290 = vunpack.c.l.b16 %v3012
      %v3291 = vunpack.c.h.b16 %v3012
      %v3292 = vunpack.c.l.b16 %v3013
      %v3293 = vunpack.c.h.b16 %v3013
      %v3294 = vunpack.c.l.b16 %v3014
      %v3295 = vunpack.c.h.b16 %v3014
      %v3296 = vunpack.c.l.b16 %v3015
      %v3297 = vunpack.c.h.b16 %v3015
      %v3298 = vunpack.c.l.b16 %v3016
      %v3299 = vunpack.c.h.b16 %v3016
      %v3300 = vunpack.c.l.b16 %v3017
      %v3301 = vunpack.c.h.b16 %v3017
      %v3302 = vunpack.c.l.b16 %v3018
      %v3303 = vunpack.c.h.b16 %v3018
      %v3304 = vunpack.c.l.b16 %v3019
      %v3305 = vunpack.c.h.b16 %v3019
      %v3306 = vunpack.c.l.b16 %v3020
      %v3307 = vunpack.c.h.b16 %v3020
      %v3308 = vunpack.c.l.b16 %v3021
      %v3309 = vunpack.c.h.b16 %v3021
      %v3310 = vunpack.c.l.b16 %v3022
      %v3311 = vunpack.c.h.b16 %v3022
      %v3312 = vpack.c.b16 %v3126, %v3120
      %v3313 = vpack.c.b16 %v3127, %v3121
      %v3314 = vpack.c.b16 %v3128, %v3122
      %v3315 = vpack.c.b16 %v3129, %v3123
      %v3316 = vpack.c.b16 %v3130, %v3124
      %v3317 = vpack.c.b16 %v3131, %v3125
      %v3318 = vpack.c.b16 %v3138, %v3132
      %v3319 = vpack.c.b16 %v3139, %v3133
      %v3320 = vpack.c.b16 %v3140, %v3134
      %v3321 = vpack.c.b16 %v3141, %v3135
      %v3322 = vpack.c.b16 %v3142, %v3136
      %v3323 = vpack.c.b16 %v3143, %v3137
      %v3324 = vpack.c.b16 %v3150, %v3144
      %v3325 = vpack.c.b16 %v3151, %v3145
      %v3326 = vpack.c.b16 %v3152, %v3146
      %v3327 = vpack.c.b16 %v3153, %v3147
      %v3328 = vpack.c.b16 %v3154, %v3148
      %v3329 = vpack.c.b16 %v3155, %v3149
      %v3330 = vpack.c.b16 %v3162, %v3156
      %v3331 = vpack.c.b16 %v3163, %v3157
      %v3332 = vpack.c.b16 %v3164, %v3158
      %v3333 = vpack.c.b16 %v3165, %v3159
      %v3334 = vpack.c.b16 %v3166, %v3160
      %v3335 = vpack.c.b16 %v3167, %v3161
      %v3336 = vpack.c.b16 %v3174, %v3168
      %v3337 = vpack.c.b16 %v3175, %v3169
      %v3338 = vpack.c.b16 %v3176, %v3170
      %v3339 = vpack.c.b16 %v3177, %v3171
      %v3340 = vpack.c.b16 %v3178, %v3172
      %v3341 = vpack.c.b16 %v3179, %v3173
      %v3342 = vpack.c.b16 %v3186, %v3180
      %v3343 = vpack.c.b16 %v3187, %v3181
      %v3344 = vpack.c.b16 %v3188, %v3182
      %v3345 = vpack.c.b16 %v3189, %v3183
      %v3346 = vpack.c.b16 %v3190, %v3184
      %v3347 = vpack.c.b16 %v3191, %v3185
      %v3348 = vpack.c.b16 %v3198, %v3192
      %v3349 = vpack.c.b16 %v3199, %v3193
      %v3350 = vpack.c.b16 %v3200, %v3194
      %v3351 = vpack.c.b16 %v3201, %v3195
      %v3352 = vpack.c.b16 %v3202, %v3196
      %v3353 = vpack.c.b16 %v3203, %v3197
      %v3354 = vpack.c.b16 %v3210, %v3204
      %v3355 = vpack.c.b16 %v3211, %v3205
      %v3356 = vpack.c.b16 %v3212, %v3206
      %v3357 = vpack.c.b16 %v3213, %v3207
      %v3358 = vpack.c.b16 %v3214, %v3208
      %v3359 = vpack.c.b16 %v3215, %v3209
      %v3360 = vpack.c.b16 %v3222, %v3216
      %v3361 = vpack.c.b16 %v3223, %v3217
      %v3362 = vpack.c.b16 %v3224, %v3218
      %v3363 = vpack.c.b16 %v3225, %v3219
      %v3364 = vpack.c.b16 %v3226, %v3220
      %v3365 = vpack.c.b16 %v3227, %v3221
      %v3366 = vpack.c.b16 %v3234, %v3228
      %v3367 = vpack.c.b16 %v3235, %v3229
      %v3368 = vpack.c.b16 %v3236, %v3230
      %v3369 = vpack.c.b16 %v3237, %v3231
      %v3370 = vpack.c.b16 %v3238, %v3232
      %v3371 = vpack.c.b16 %v3239, %v3233
      %v3372 = vpack.c.b16 %v3246, %v3240
      %v3373 = vpack.c.b16 %v3247, %v3241
      %v3374 = vpack.c.b16 %v3248, %v3242
      %v3375 = vpack.c.b16 %v3249, %v3243
      %v3376 = vpack.c.b16 %v3250, %v3244
      %v3377 = vpack.c.b16 %v3251, %v3245
      %v3378 = vpack.c.b16 %v3258, %v3252
      %v3379 = vpack.c.b16 %v3259, %v3253
      %v3380 = vpack.c.b16 %v3260, %v3254
      %v3381 = vpack.c.b16 %v3261, %v3255
      %v3382 = vpack.c.b16 %v3262, %v3256
      %v3383 = vpack.c.b16 %v3263, %v3257
      %v3384 = vpack.c.b16 %v3270, %v3264
      %v3385 = vpack.c.b16 %v3271, %v3265
      %v3386 = vpack.c.b16 %v3272, %v3266
      %v3387 = vpack.c.b16 %v3273, %v3267
      %v3388 = vpack.c.b16 %v3274, %v3268
      %v3389 = vpack.c.b16 %v3275, %v3269
      %v3390 = vpack.c.b16 %v3282, %v3276
      %v3391 = vpack.c.b16 %v3283, %v3277
      %v3392 = vpack.c.b16 %v3284, %v3278
      %v3393 = vpack.c.b16 %v3285, %v3279
      %v3394 = vpack.c.b16 %v3286, %v3280
      %v3395 = vpack.c.b16 %v3287, %v3281
      %v3396 = vpack.c.b16 %v3294, %v3288
      %v3397 = vpack.c.b16 %v3295, %v3289
      %v3398 = vpack.c.b16 %v3296, %v3290
      %v3399 = vpack.c.b16 %v3297, %v3291
      %v3400 = vpack.c.b16 %v3298, %v3292
      %v3401 = vpack.c.b16 %v3299, %v3293
      %v3402 = vpack.c.b16 %v3306, %v3300
      %v3403 = vpack.c.b16 %v3307, %v3301
      %v3404 = vpack.c.b16 %v3308, %v3302
      %v3405 = vpack.c.b16 %v3309, %v3303
      %v3406 = vpack.c.b16 %v3310, %v3304
      %v3407 = vpack.c.b16 %v3311, %v3305
      %v3505 = vlaneseq
      %v3506 = vshrl.u32 %v3505, 7
      %v3507 = vsub.s32 0, %v3506
      %v3508 = vrot.slane %v3023, %v3507
      %v3509 = vlaneseq
      %v3510 = vshrl.u32 %v3509, 7
      %v3511 = vsub.s32 1, %v3510
      %v3512 = vrot.slane %v3023, %v3511
      %v3513 = vlaneseq
      %v3514 = vshrl.u32 %v3513, 7
      %v3515 = vsub.s32 2, %v3514
      %v3516 = vrot.slane %v3023, %v3515
      %v3517 = vlaneseq
      %v3518 = vshrl.u32 %v3517, 7
      %v3519 = vsub.s32 3, %v3518
      %v3520 = vrot.slane %v3023, %v3519
      %v3521 = vlaneseq
      %v3522 = vshrl.u32 %v3521, 7
      %v3523 = vsub.s32 4, %v3522
      %v3524 = vrot.slane %v3023, %v3523
      %v3525 = vlaneseq
      %v3526 = vshrl.u32 %v3525, 7
      %v3527 = vsub.s32 5, %v3526
      %v3528 = vrot.slane %v3023, %v3527
      %3535 = vmatprep.subr.bf16.mxu0 %v3313
      %3536 = vmatpush1.bf16.msra.mxu0 %v3312
      %3537 = vmatprep.subr.bf16.mxu0 %v3319
      %3538 = vmatpush1.bf16.msra.mxu0 %v3318
      %3539 = vmatprep.subr.bf16.mxu0 %v3325
      %3540 = vmatpush1.bf16.msra.mxu0 %v3324
      %3541 = vmatprep.subr.bf16.mxu0 %v3331
      %3542 = vmatpush1.bf16.msra.mxu0 %v3330
      %3543 = vmatprep.subr.bf16.mxu0 %v3337
      %3544 = vmatpush1.bf16.msra.mxu0 %v3336
      %3545 = vmatprep.subr.bf16.mxu0 %v3343
      %3546 = vmatpush1.bf16.msra.mxu0 %v3342
      %3547 = vmatprep.subr.bf16.mxu0 %v3349
      %3548 = vmatpush1.bf16.msra.mxu0 %v3348
      %3549 = vmatprep.subr.bf16.mxu0 %v3355
      %3550 = vmatpush1.bf16.msra.mxu0 %v3354
      %3551 = vmatprep.subr.bf16.mxu0 %v3361
      %3552 = vmatpush1.bf16.msra.mxu0 %v3360
      %3553 = vmatprep.subr.bf16.mxu0 %v3367
      %3554 = vmatpush1.bf16.msra.mxu0 %v3366
      %3555 = vmatprep.subr.bf16.mxu0 %v3373
      %3556 = vmatpush1.bf16.msra.mxu0 %v3372
      %3557 = vmatprep.subr.bf16.mxu0 %v3379
      %3558 = vmatpush1.bf16.msra.mxu0 %v3378
      %3559 = vmatprep.subr.bf16.mxu0 %v3385
      %3560 = vmatpush1.bf16.msra.mxu0 %v3384
      %3561 = vmatprep.subr.bf16.mxu0 %v3391
      %3562 = vmatpush1.bf16.msra.mxu0 %v3390
      %3563 = vmatprep.subr.bf16.mxu0 %v3397
      %3564 = vmatpush1.bf16.msra.mxu0 %v3396
      %3565 = vmatprep.subr.bf16.mxu0 %v3403
      %3566 = vmatpush1.bf16.msra.mxu0 %v3402
      %3567 = vmatprep.mubr.bf16.mxu0 %v2926
      %3568 = vmatmul.mubr.bf16.gmra.mrb[0].mxu0 %v2925
      %v3569 = vpop.f32.mrb[0].mxu0
      %v3570 = vadd.f32 %v3508, %v3569
      %v3571 = vpop.f32.mrb[0].mxu0
      %v3572 = vadd.f32 %v3512, %v3571
      %v3573 = vpop.f32.mrb[0].mxu0
      %v3574 = vpop.f32.mrb[0].mxu0
      %3575 = vdwg.mxu0
      %3576 = vmatprep.subr.bf16.mxu0 %v3315
      %3577 = vmatpush1.bf16.msra.mxu0 %v3314
      %3578 = vmatprep.subr.bf16.mxu0 %v3321
      %3579 = vmatpush1.bf16.msra.mxu0 %v3320
      %3580 = vmatprep.subr.bf16.mxu0 %v3327
      %3581 = vmatpush1.bf16.msra.mxu0 %v3326
      %3582 = vmatprep.subr.bf16.mxu0 %v3333
      %3583 = vmatpush1.bf16.msra.mxu0 %v3332
      %3584 = vmatprep.subr.bf16.mxu0 %v3339
      %3585 = vmatpush1.bf16.msra.mxu0 %v3338
      %3586 = vmatprep.subr.bf16.mxu0 %v3345
      %3587 = vmatpush1.bf16.msra.mxu0 %v3344
      %3588 = vmatprep.subr.bf16.mxu0 %v3351
      %3589 = vmatpush1.bf16.msra.mxu0 %v3350
      %3590 = vmatprep.subr.bf16.mxu0 %v3357
      %3591 = vmatpush1.bf16.msra.mxu0 %v3356
      %3592 = vmatprep.subr.bf16.mxu0 %v3363
      %3593 = vmatpush1.bf16.msra.mxu0 %v3362
      %3594 = vmatprep.subr.bf16.mxu0 %v3369
      %3595 = vmatpush1.bf16.msra.mxu0 %v3368
      %3596 = vmatprep.subr.bf16.mxu0 %v3375
      %3597 = vmatpush1.bf16.msra.mxu0 %v3374
      %3598 = vmatprep.subr.bf16.mxu0 %v3381
      %3599 = vmatpush1.bf16.msra.mxu0 %v3380
      %3600 = vmatprep.subr.bf16.mxu0 %v3387
      %3601 = vmatpush1.bf16.msra.mxu0 %v3386
      %3602 = vmatprep.subr.bf16.mxu0 %v3393
      %3603 = vmatpush1.bf16.msra.mxu0 %v3392
      %3604 = vmatprep.subr.bf16.mxu0 %v3399
      %3605 = vmatpush1.bf16.msra.mxu0 %v3398
      %3606 = vmatprep.subr.bf16.mxu0 %v3405
      %3607 = vmatpush1.bf16.msra.mxu0 %v3404
      %3608 = vmatprep.mubr.bf16.mxu0 %v2926
      %3609 = vmatmul.mubr.bf16.gmra.mrb[0].mxu0 %v2925
      %v3610 = vpop.f32.mrb[0].mxu0
      %v3611 = vadd.f32 %v3516, %v3610
      %v3612 = vpop.f32.mrb[0].mxu0
      %v3613 = vadd.f32 %v3520, %v3612
      %v3614 = vpop.f32.mrb[0].mxu0
      %v3615 = vpop.f32.mrb[0].mxu0
      %3616 = vdwg.mxu0
      %3617 = vmatprep.subr.bf16.mxu0 %v3317
      %3618 = vmatpush1.bf16.msra.mxu0 %v3316
      %3619 = vmatprep.subr.bf16.mxu0 %v3323
      %3620 = vmatpush1.bf16.msra.mxu0 %v3322
      %3621 = vmatprep.subr.bf16.mxu0 %v3329
      %3622 = vmatpush1.bf16.msra.mxu0 %v3328
      %3623 = vmatprep.subr.bf16.mxu0 %v3335
      %3624 = vmatpush1.bf16.msra.mxu0 %v3334
      %3625 = vmatprep.subr.bf16.mxu0 %v3341
      %3626 = vmatpush1.bf16.msra.mxu0 %v3340
      %3627 = vmatprep.subr.bf16.mxu0 %v3347
      %3628 = vmatpush1.bf16.msra.mxu0 %v3346
      %3629 = vmatprep.subr.bf16.mxu0 %v3353
      %3630 = vmatpush1.bf16.msra.mxu0 %v3352
      %3631 = vmatprep.subr.bf16.mxu0 %v3359
      %3632 = vmatpush1.bf16.msra.mxu0 %v3358
      %3633 = vmatprep.subr.bf16.mxu0 %v3365
      %3634 = vmatpush1.bf16.msra.mxu0 %v3364
      %3635 = vmatprep.subr.bf16.mxu0 %v3371
      %3636 = vmatpush1.bf16.msra.mxu0 %v3370
      %3637 = vmatprep.subr.bf16.mxu0 %v3377
      %3638 = vmatpush1.bf16.msra.mxu0 %v3376
      %3639 = vmatprep.subr.bf16.mxu0 %v3383
      %3640 = vmatpush1.bf16.msra.mxu0 %v3382
      %3641 = vmatprep.subr.bf16.mxu0 %v3389
      %3642 = vmatpush1.bf16.msra.mxu0 %v3388
      %3643 = vmatprep.subr.bf16.mxu0 %v3395
      %3644 = vmatpush1.bf16.msra.mxu0 %v3394
      %3645 = vmatprep.subr.bf16.mxu0 %v3401
      %3646 = vmatpush1.bf16.msra.mxu0 %v3400
      %3647 = vmatprep.subr.bf16.mxu0 %v3407
      %3648 = vmatpush1.bf16.msra.mxu0 %v3406
      %3649 = vmatprep.mubr.bf16.mxu0 %v2926
      %3650 = vmatmul.mubr.bf16.gmra.mrb[0].mxu0 %v2925
      %v3651 = vpop.f32.mrb[0].mxu0
      %v3652 = vadd.f32 %v3524, %v3651
      %v3653 = vpop.f32.mrb[0].mxu0
      %v3654 = vadd.f32 %v3528, %v3653
      %v3655 = vpop.f32.mrb[0].mxu0
      %v3656 = vpop.f32.mrb[0].mxu0
      %3657 = vdwg.mxu0
      %v3658 = vadd.f32 %v2924, %v3570
      %v3659 = vxor.u32 %v3658, 2147483648
      %v3660 = vmul.f32 %v3659, 1.442695
      %v3661 = vpow.pop %v3660
      %v3662 = vadd.f32 %v3661, 1.0
      %v3663 = vrcp.pop %v3662
      %v3664 = vmul.f32 1.0, %v3663
      %v3666 = vrot.slane %v2924, 1
      %v3668 = vadd.f32 %v3666, %v3572
      %v3669 = vxor.u32 %v3668, 2147483648
      %v3670 = vmul.f32 %v3669, 1.442695
      %v3671 = vpow.pop %v3670
      %v3672 = vadd.f32 %v3671, 1.0
      %v3673 = vrcp.pop %v3672
      %v3674 = vmul.f32 1.0, %v3673
      %v3675 = vmul.f32 %v3664, %v3611
      %v3676 = vrot.slane %v2924, 2
      %v3678 = vadd.f32 %v3676, %v3675
      %v3679 = vtanh.pop %v3678
      %v3680 = vrot.slane %v2924, 3
      %v3682 = vadd.f32 %v3680, %v3613
      %v3683 = vxor.u32 %v3682, 2147483648
      %v3684 = vmul.f32 %v3683, 1.442695
      %v3685 = vpow.pop %v3684
      %v3686 = vadd.f32 %v3685, 1.0
      %v3687 = vrcp.pop %v3686
      %v3688 = vmul.f32 1.0, %v3687
      %v3689 = vrot.slane %v2924, 4
      %v3691 = vadd.f32 %v3689, %v3652
      %v3692 = vxor.u32 %v3691, 2147483648
      %v3693 = vmul.f32 %v3692, 1.442695
      %v3694 = vpow.pop %v3693
      %v3695 = vadd.f32 %v3694, 1.0
      %v3696 = vrcp.pop %v3695
      %v3697 = vmul.f32 1.0, %v3696
      %v3698 = vmul.f32 %v3688, %v3654
      %v3699 = vrot.slane %v2924, 5
      %v3701 = vadd.f32 %v3699, %v3698
      %v3702 = vtanh.pop %v3701
      %v3703 = vsub.f32 1.0, %v3674
      %v3704 = vmul.f32 %v3703, %v3679
      %v3705 = vmul.f32 %v3674, %v2908
      %v3706 = vadd.f32 %v3704, %v3705
      %v3707 = vsub.f32 1.0, %v3697
      %v3708 = vmul.f32 %v3707, %v3702
      %v3709 = vmul.f32 %v3697, %v2910
      %v3710 = vadd.f32 %v3708, %v3709
      %s3711 = scalar_select %p2912, 1, 0
      %v3712 = vstv %s3711
      %vm3713 = vcmp.eq.s32.totalorder %v3712, 1
      %v3714 = vsel %vm3713, %v3706, %v2908
      %s3715 = scalar_select %p2913, 1, 0
      %v3716 = vstv %s3715
      %vm3717 = vcmp.eq.s32.totalorder %v3716, 1
      %v3718 = vsel %vm3717, %v3710, %v2910
      %s3719 = sadd.s32 %s2903, 16
      %s3720 = sshra.s32 %s3719, 3
      %s3721 = sand.u32 %s3719, 7
      %s3722 = sshra.s32 %s3719, 3
      %s3723 = sand.u32 %s3719, 7
      %s3724 = smul.u32 %s3720, 6
      %s3725 = smul.u32 %s3724, 8
      %s3726 = sadd.s32 %s3725, %s3723
      %s3727 = scalar_lea.vmem [#allocation2], %s3726
      %v3728 = vld [vmem:[%s3727] ss:$8 sm:$0xf]
      %v3729 = vld [vmem:[%s3727] ss:$8 sm:$0x30]
      %v3730 = vor.u32 %v3728, %v3729
      %v3731 = vpack.c.bf16 %v2909, %v2909
      %v3732 = vpack.c.bf16 %v2911, %v2911
      %s3733 = scalar_lea.vmem [#allocation13], 768
      %v3734 = vld [vmem:[%s3733] sm:$0xff]
      %v3735 = vld [vmem:[%s3733 + $0x8] sm:$0xff]
      %v3736 = vld [vmem:[%s3733 + $0x10] sm:$0xff]
      %v3737 = vld [vmem:[%s3733 + $0x18] sm:$0xff]
      %v3738 = vld [vmem:[%s3733 + $0x20] sm:$0xff]
      %v3739 = vld [vmem:[%s3733 + $0x28] sm:$0xff]
      %v3740 = vld [vmem:[%s3733 + $0x30] sm:$0xff]
      %v3741 = vld [vmem:[%s3733 + $0x38] sm:$0xff]
      %v3742 = vld [vmem:[%s3733 + $0x40] sm:$0xff]
      %v3743 = vld [vmem:[%s3733 + $0x48] sm:$0xff]
      %v3744 = vld [vmem:[%s3733 + $0x50] sm:$0xff]
      %v3745 = vld [vmem:[%s3733 + $0x58] sm:$0xff]
      %v3746 = vld [vmem:[%s3733 + $0x60] sm:$0xff]
      %v3747 = vld [vmem:[%s3733 + $0x68] sm:$0xff]
      %v3748 = vld [vmem:[%s3733 + $0x70] sm:$0xff]
      %v3749 = vld [vmem:[%s3733 + $0x78] sm:$0xff]
      %v3750 = vld [vmem:[%s3733 + $0x80] sm:$0xff]
      %v3751 = vld [vmem:[%s3733 + $0x88] sm:$0xff]
      %v3752 = vld [vmem:[%s3733 + $0x90] sm:$0xff]
      %v3753 = vld [vmem:[%s3733 + $0x98] sm:$0xff]
      %v3754 = vld [vmem:[%s3733 + $0xa0] sm:$0xff]
      %v3755 = vld [vmem:[%s3733 + $0xa8] sm:$0xff]
      %v3756 = vld [vmem:[%s3733 + $0xb0] sm:$0xff]
      %v3757 = vld [vmem:[%s3733 + $0xb8] sm:$0xff]
      %v3758 = vld [vmem:[%s3733 + $0xc0] sm:$0xff]
      %v3759 = vld [vmem:[%s3733 + $0xc8] sm:$0xff]
      %v3760 = vld [vmem:[%s3733 + $0xd0] sm:$0xff]
      %v3761 = vld [vmem:[%s3733 + $0xd8] sm:$0xff]
      %v3762 = vld [vmem:[%s3733 + $0xe0] sm:$0xff]
      %v3763 = vld [vmem:[%s3733 + $0xe8] sm:$0xff]
      %v3764 = vld [vmem:[%s3733 + $0xf0] sm:$0xff]
      %v3765 = vld [vmem:[%s3733 + $0xf8] sm:$0xff]
      %v3766 = vld [vmem:[%s3733 + $0x100] sm:$0xff]
      %v3767 = vld [vmem:[%s3733 + $0x108] sm:$0xff]
      %v3768 = vld [vmem:[%s3733 + $0x110] sm:$0xff]
      %v3769 = vld [vmem:[%s3733 + $0x118] sm:$0xff]
      %v3770 = vld [vmem:[%s3733 + $0x120] sm:$0xff]
      %v3771 = vld [vmem:[%s3733 + $0x128] sm:$0xff]
      %v3772 = vld [vmem:[%s3733 + $0x130] sm:$0xff]
      %v3773 = vld [vmem:[%s3733 + $0x138] sm:$0xff]
      %v3774 = vld [vmem:[%s3733 + $0x140] sm:$0xff]
      %v3775 = vld [vmem:[%s3733 + $0x148] sm:$0xff]
      %v3776 = vld [vmem:[%s3733 + $0x150] sm:$0xff]
      %v3777 = vld [vmem:[%s3733 + $0x158] sm:$0xff]
      %v3778 = vld [vmem:[%s3733 + $0x160] sm:$0xff]
      %v3779 = vld [vmem:[%s3733 + $0x168] sm:$0xff]
      %v3780 = vld [vmem:[%s3733 + $0x170] sm:$0xff]
      %v3781 = vld [vmem:[%s3733 + $0x178] sm:$0xff]
      %v3782 = vld [vmem:[%s3733 + $0x180] sm:$0xff]
      %v3783 = vld [vmem:[%s3733 + $0x188] sm:$0xff]
      %v3784 = vld [vmem:[%s3733 + $0x190] sm:$0xff]
      %v3785 = vld [vmem:[%s3733 + $0x198] sm:$0xff]
      %v3786 = vld [vmem:[%s3733 + $0x1a0] sm:$0xff]
      %v3787 = vld [vmem:[%s3733 + $0x1a8] sm:$0xff]
      %v3788 = vld [vmem:[%s3733 + $0x1b0] sm:$0xff]
      %v3789 = vld [vmem:[%s3733 + $0x1b8] sm:$0xff]
      %v3790 = vld [vmem:[%s3733 + $0x1c0] sm:$0xff]
      %v3791 = vld [vmem:[%s3733 + $0x1c8] sm:$0xff]
      %v3792 = vld [vmem:[%s3733 + $0x1d0] sm:$0xff]
      %v3793 = vld [vmem:[%s3733 + $0x1d8] sm:$0xff]
      %v3794 = vld [vmem:[%s3733 + $0x1e0] sm:$0xff]
      %v3795 = vld [vmem:[%s3733 + $0x1e8] sm:$0xff]
      %v3796 = vld [vmem:[%s3733 + $0x1f0] sm:$0xff]
      %v3797 = vld [vmem:[%s3733 + $0x1f8] sm:$0xff]
      %v3798 = vld [vmem:[%s3733 + $0x200] sm:$0xff]
      %v3799 = vld [vmem:[%s3733 + $0x208] sm:$0xff]
      %v3800 = vld [vmem:[%s3733 + $0x210] sm:$0xff]
      %v3801 = vld [vmem:[%s3733 + $0x218] sm:$0xff]
      %v3802 = vld [vmem:[%s3733 + $0x220] sm:$0xff]
      %v3803 = vld [vmem:[%s3733 + $0x228] sm:$0xff]
      %v3804 = vld [vmem:[%s3733 + $0x230] sm:$0xff]
      %v3805 = vld [vmem:[%s3733 + $0x238] sm:$0xff]
      %v3806 = vld [vmem:[%s3733 + $0x240] sm:$0xff]
      %v3807 = vld [vmem:[%s3733 + $0x248] sm:$0xff]
      %v3808 = vld [vmem:[%s3733 + $0x250] sm:$0xff]
      %v3809 = vld [vmem:[%s3733 + $0x258] sm:$0xff]
      %v3810 = vld [vmem:[%s3733 + $0x260] sm:$0xff]
      %v3811 = vld [vmem:[%s3733 + $0x268] sm:$0xff]
      %v3812 = vld [vmem:[%s3733 + $0x270] sm:$0xff]
      %v3813 = vld [vmem:[%s3733 + $0x278] sm:$0xff]
      %v3814 = vld [vmem:[%s3733 + $0x280] sm:$0xff]
      %v3815 = vld [vmem:[%s3733 + $0x288] sm:$0xff]
      %v3816 = vld [vmem:[%s3733 + $0x290] sm:$0xff]
      %v3817 = vld [vmem:[%s3733 + $0x298] sm:$0xff]
      %v3818 = vld [vmem:[%s3733 + $0x2a0] sm:$0xff]
      %v3819 = vld [vmem:[%s3733 + $0x2a8] sm:$0xff]
      %v3820 = vld [vmem:[%s3733 + $0x2b0] sm:$0xff]
      %v3821 = vld [vmem:[%s3733 + $0x2b8] sm:$0xff]
      %v3822 = vld [vmem:[%s3733 + $0x2c0] sm:$0xff]
      %v3823 = vld [vmem:[%s3733 + $0x2c8] sm:$0xff]
      %v3824 = vld [vmem:[%s3733 + $0x2d0] sm:$0xff]
      %v3825 = vld [vmem:[%s3733 + $0x2d8] sm:$0xff]
      %v3826 = vld [vmem:[%s3733 + $0x2e0] sm:$0xff]
      %v3827 = vld [vmem:[%s3733 + $0x2e8] sm:$0xff]
      %v3828 = vld [vmem:[%s3733 + $0x2f0] sm:$0xff]
      %v3829 = vld [vmem:[%s3733 + $0x2f8] sm:$0xff]
      %s3830 = scalar_lea.vmem %s8, 6
      %v3831 = vld [vmem:[%s3830] sm:$0x3f]
      %v3928 = vunpack.c.l.b16 %v3734
      %v3929 = vunpack.c.h.b16 %v3734
      %v3930 = vunpack.c.l.b16 %v3735
      %v3931 = vunpack.c.h.b16 %v3735
      %v3932 = vunpack.c.l.b16 %v3736
      %v3933 = vunpack.c.h.b16 %v3736
      %v3934 = vunpack.c.l.b16 %v3737
      %v3935 = vunpack.c.h.b16 %v3737
      %v3936 = vunpack.c.l.b16 %v3738
      %v3937 = vunpack.c.h.b16 %v3738
      %v3938 = vunpack.c.l.b16 %v3739
      %v3939 = vunpack.c.h.b16 %v3739
      %v3940 = vunpack.c.l.b16 %v3740
      %v3941 = vunpack.c.h.b16 %v3740
      %v3942 = vunpack.c.l.b16 %v3741
      %v3943 = vunpack.c.h.b16 %v3741
      %v3944 = vunpack.c.l.b16 %v3742
      %v3945 = vunpack.c.h.b16 %v3742
      %v3946 = vunpack.c.l.b16 %v3743
      %v3947 = vunpack.c.h.b16 %v3743
      %v3948 = vunpack.c.l.b16 %v3744
      %v3949 = vunpack.c.h.b16 %v3744
      %v3950 = vunpack.c.l.b16 %v3745
      %v3951 = vunpack.c.h.b16 %v3745
      %v3952 = vunpack.c.l.b16 %v3746
      %v3953 = vunpack.c.h.b16 %v3746
      %v3954 = vunpack.c.l.b16 %v3747
      %v3955 = vunpack.c.h.b16 %v3747
      %v3956 = vunpack.c.l.b16 %v3748
      %v3957 = vunpack.c.h.b16 %v3748
      %v3958 = vunpack.c.l.b16 %v3749
      %v3959 = vunpack.c.h.b16 %v3749
      %v3960 = vunpack.c.l.b16 %v3750
      %v3961 = vunpack.c.h.b16 %v3750
      %v3962 = vunpack.c.l.b16 %v3751
      %v3963 = vunpack.c.h.b16 %v3751
      %v3964 = vunpack.c.l.b16 %v3752
      %v3965 = vunpack.c.h.b16 %v3752
      %v3966 = vunpack.c.l.b16 %v3753
      %v3967 = vunpack.c.h.b16 %v3753
      %v3968 = vunpack.c.l.b16 %v3754
      %v3969 = vunpack.c.h.b16 %v3754
      %v3970 = vunpack.c.l.b16 %v3755
      %v3971 = vunpack.c.h.b16 %v3755
      %v3972 = vunpack.c.l.b16 %v3756
      %v3973 = vunpack.c.h.b16 %v3756
      %v3974 = vunpack.c.l.b16 %v3757
      %v3975 = vunpack.c.h.b16 %v3757
      %v3976 = vunpack.c.l.b16 %v3758
      %v3977 = vunpack.c.h.b16 %v3758
      %v3978 = vunpack.c.l.b16 %v3759
      %v3979 = vunpack.c.h.b16 %v3759
      %v3980 = vunpack.c.l.b16 %v3760
      %v3981 = vunpack.c.h.b16 %v3760
      %v3982 = vunpack.c.l.b16 %v3761
      %v3983 = vunpack.c.h.b16 %v3761
      %v3984 = vunpack.c.l.b16 %v3762
      %v3985 = vunpack.c.h.b16 %v3762
      %v3986 = vunpack.c.l.b16 %v3763
      %v3987 = vunpack.c.h.b16 %v3763
      %v3988 = vunpack.c.l.b16 %v3764
      %v3989 = vunpack.c.h.b16 %v3764
      %v3990 = vunpack.c.l.b16 %v3765
      %v3991 = vunpack.c.h.b16 %v3765
      %v3992 = vunpack.c.l.b16 %v3766
      %v3993 = vunpack.c.h.b16 %v3766
      %v3994 = vunpack.c.l.b16 %v3767
      %v3995 = vunpack.c.h.b16 %v3767
      %v3996 = vunpack.c.l.b16 %v3768
      %v3997 = vunpack.c.h.b16 %v3768
      %v3998 = vunpack.c.l.b16 %v3769
      %v3999 = vunpack.c.h.b16 %v3769
      %v4000 = vunpack.c.l.b16 %v3770
      %v4001 = vunpack.c.h.b16 %v3770
      %v4002 = vunpack.c.l.b16 %v3771
      %v4003 = vunpack.c.h.b16 %v3771
      %v4004 = vunpack.c.l.b16 %v3772
      %v4005 = vunpack.c.h.b16 %v3772
      %v4006 = vunpack.c.l.b16 %v3773
      %v4007 = vunpack.c.h.b16 %v3773
      %v4008 = vunpack.c.l.b16 %v3774
      %v4009 = vunpack.c.h.b16 %v3774
      %v4010 = vunpack.c.l.b16 %v3775
      %v4011 = vunpack.c.h.b16 %v3775
      %v4012 = vunpack.c.l.b16 %v3776
      %v4013 = vunpack.c.h.b16 %v3776
      %v4014 = vunpack.c.l.b16 %v3777
      %v4015 = vunpack.c.h.b16 %v3777
      %v4016 = vunpack.c.l.b16 %v3778
      %v4017 = vunpack.c.h.b16 %v3778
      %v4018 = vunpack.c.l.b16 %v3779
      %v4019 = vunpack.c.h.b16 %v3779
      %v4020 = vunpack.c.l.b16 %v3780
      %v4021 = vunpack.c.h.b16 %v3780
      %v4022 = vunpack.c.l.b16 %v3781
      %v4023 = vunpack.c.h.b16 %v3781
      %v4024 = vunpack.c.l.b16 %v3782
      %v4025 = vunpack.c.h.b16 %v3782
      %v4026 = vunpack.c.l.b16 %v3783
      %v4027 = vunpack.c.h.b16 %v3783
      %v4028 = vunpack.c.l.b16 %v3784
      %v4029 = vunpack.c.h.b16 %v3784
      %v4030 = vunpack.c.l.b16 %v3785
      %v4031 = vunpack.c.h.b16 %v3785
      %v4032 = vunpack.c.l.b16 %v3786
      %v4033 = vunpack.c.h.b16 %v3786
      %v4034 = vunpack.c.l.b16 %v3787
      %v4035 = vunpack.c.h.b16 %v3787
      %v4036 = vunpack.c.l.b16 %v3788
      %v4037 = vunpack.c.h.b16 %v3788
      %v4038 = vunpack.c.l.b16 %v3789
      %v4039 = vunpack.c.h.b16 %v3789
      %v4040 = vunpack.c.l.b16 %v3790
      %v4041 = vunpack.c.h.b16 %v3790
      %v4042 = vunpack.c.l.b16 %v3791
      %v4043 = vunpack.c.h.b16 %v3791
      %v4044 = vunpack.c.l.b16 %v3792
      %v4045 = vunpack.c.h.b16 %v3792
      %v4046 = vunpack.c.l.b16 %v3793
      %v4047 = vunpack.c.h.b16 %v3793
      %v4048 = vunpack.c.l.b16 %v3794
      %v4049 = vunpack.c.h.b16 %v3794
      %v4050 = vunpack.c.l.b16 %v3795
      %v4051 = vunpack.c.h.b16 %v3795
      %v4052 = vunpack.c.l.b16 %v3796
      %v4053 = vunpack.c.h.b16 %v3796
      %v4054 = vunpack.c.l.b16 %v3797
      %v4055 = vunpack.c.h.b16 %v3797
      %v4056 = vunpack.c.l.b16 %v3798
      %v4057 = vunpack.c.h.b16 %v3798
      %v4058 = vunpack.c.l.b16 %v3799
      %v4059 = vunpack.c.h.b16 %v3799
      %v4060 = vunpack.c.l.b16 %v3800
      %v4061 = vunpack.c.h.b16 %v3800
      %v4062 = vunpack.c.l.b16 %v3801
      %v4063 = vunpack.c.h.b16 %v3801
      %v4064 = vunpack.c.l.b16 %v3802
      %v4065 = vunpack.c.h.b16 %v3802
      %v4066 = vunpack.c.l.b16 %v3803
      %v4067 = vunpack.c.h.b16 %v3803
      %v4068 = vunpack.c.l.b16 %v3804
      %v4069 = vunpack.c.h.b16 %v3804
      %v4070 = vunpack.c.l.b16 %v3805
      %v4071 = vunpack.c.h.b16 %v3805
      %v4072 = vunpack.c.l.b16 %v3806
      %v4073 = vunpack.c.h.b16 %v3806
      %v4074 = vunpack.c.l.b16 %v3807
      %v4075 = vunpack.c.h.b16 %v3807
      %v4076 = vunpack.c.l.b16 %v3808
      %v4077 = vunpack.c.h.b16 %v3808
      %v4078 = vunpack.c.l.b16 %v3809
      %v4079 = vunpack.c.h.b16 %v3809
      %v4080 = vunpack.c.l.b16 %v3810
      %v4081 = vunpack.c.h.b16 %v3810
      %v4082 = vunpack.c.l.b16 %v3811
      %v4083 = vunpack.c.h.b16 %v3811
      %v4084 = vunpack.c.l.b16 %v3812
      %v4085 = vunpack.c.h.b16 %v3812
      %v4086 = vunpack.c.l.b16 %v3813
      %v4087 = vunpack.c.h.b16 %v3813
      %v4088 = vunpack.c.l.b16 %v3814
      %v4089 = vunpack.c.h.b16 %v3814
      %v4090 = vunpack.c.l.b16 %v3815
      %v4091 = vunpack.c.h.b16 %v3815
      %v4092 = vunpack.c.l.b16 %v3816
      %v4093 = vunpack.c.h.b16 %v3816
      %v4094 = vunpack.c.l.b16 %v3817
      %v4095 = vunpack.c.h.b16 %v3817
      %v4096 = vunpack.c.l.b16 %v3818
      %v4097 = vunpack.c.h.b16 %v3818
      %v4098 = vunpack.c.l.b16 %v3819
      %v4099 = vunpack.c.h.b16 %v3819
      %v4100 = vunpack.c.l.b16 %v3820
      %v4101 = vunpack.c.h.b16 %v3820
      %v4102 = vunpack.c.l.b16 %v3821
      %v4103 = vunpack.c.h.b16 %v3821
      %v4104 = vunpack.c.l.b16 %v3822
      %v4105 = vunpack.c.h.b16 %v3822
      %v4106 = vunpack.c.l.b16 %v3823
      %v4107 = vunpack.c.h.b16 %v3823
      %v4108 = vunpack.c.l.b16 %v3824
      %v4109 = vunpack.c.h.b16 %v3824
      %v4110 = vunpack.c.l.b16 %v3825
      %v4111 = vunpack.c.h.b16 %v3825
      %v4112 = vunpack.c.l.b16 %v3826
      %v4113 = vunpack.c.h.b16 %v3826
      %v4114 = vunpack.c.l.b16 %v3827
      %v4115 = vunpack.c.h.b16 %v3827
      %v4116 = vunpack.c.l.b16 %v3828
      %v4117 = vunpack.c.h.b16 %v3828
      %v4118 = vunpack.c.l.b16 %v3829
      %v4119 = vunpack.c.h.b16 %v3829
      %v4120 = vpack.c.b16 %v3934, %v3928
      %v4121 = vpack.c.b16 %v3935, %v3929
      %v4122 = vpack.c.b16 %v3936, %v3930
      %v4123 = vpack.c.b16 %v3937, %v3931
      %v4124 = vpack.c.b16 %v3938, %v3932
      %v4125 = vpack.c.b16 %v3939, %v3933
      %v4126 = vpack.c.b16 %v3946, %v3940
      %v4127 = vpack.c.b16 %v3947, %v3941
      %v4128 = vpack.c.b16 %v3948, %v3942
      %v4129 = vpack.c.b16 %v3949, %v3943
      %v4130 = vpack.c.b16 %v3950, %v3944
      %v4131 = vpack.c.b16 %v3951, %v3945
      %v4132 = vpack.c.b16 %v3958, %v3952
      %v4133 = vpack.c.b16 %v3959, %v3953
      %v4134 = vpack.c.b16 %v3960, %v3954
      %v4135 = vpack.c.b16 %v3961, %v3955
      %v4136 = vpack.c.b16 %v3962, %v3956
      %v4137 = vpack.c.b16 %v3963, %v3957
      %v4138 = vpack.c.b16 %v3970, %v3964
      %v4139 = vpack.c.b16 %v3971, %v3965
      %v4140 = vpack.c.b16 %v3972, %v3966
      %v4141 = vpack.c.b16 %v3973, %v3967
      %v4142 = vpack.c.b16 %v3974, %v3968
      %v4143 = vpack.c.b16 %v3975, %v3969
      %v4144 = vpack.c.b16 %v3982, %v3976
      %v4145 = vpack.c.b16 %v3983, %v3977
      %v4146 = vpack.c.b16 %v3984, %v3978
      %v4147 = vpack.c.b16 %v3985, %v3979
      %v4148 = vpack.c.b16 %v3986, %v3980
      %v4149 = vpack.c.b16 %v3987, %v3981
      %v4150 = vpack.c.b16 %v3994, %v3988
      %v4151 = vpack.c.b16 %v3995, %v3989
      %v4152 = vpack.c.b16 %v3996, %v3990
      %v4153 = vpack.c.b16 %v3997, %v3991
      %v4154 = vpack.c.b16 %v3998, %v3992
      %v4155 = vpack.c.b16 %v3999, %v3993
      %v4156 = vpack.c.b16 %v4006, %v4000
      %v4157 = vpack.c.b16 %v4007, %v4001
      %v4158 = vpack.c.b16 %v4008, %v4002
      %v4159 = vpack.c.b16 %v4009, %v4003
      %v4160 = vpack.c.b16 %v4010, %v4004
      %v4161 = vpack.c.b16 %v4011, %v4005
      %v4162 = vpack.c.b16 %v4018, %v4012
      %v4163 = vpack.c.b16 %v4019, %v4013
      %v4164 = vpack.c.b16 %v4020, %v4014
      %v4165 = vpack.c.b16 %v4021, %v4015
      %v4166 = vpack.c.b16 %v4022, %v4016
      %v4167 = vpack.c.b16 %v4023, %v4017
      %v4168 = vpack.c.b16 %v4030, %v4024
      %v4169 = vpack.c.b16 %v4031, %v4025
      %v4170 = vpack.c.b16 %v4032, %v4026
      %v4171 = vpack.c.b16 %v4033, %v4027
      %v4172 = vpack.c.b16 %v4034, %v4028
      %v4173 = vpack.c.b16 %v4035, %v4029
      %v4174 = vpack.c.b16 %v4042, %v4036
      %v4175 = vpack.c.b16 %v4043, %v4037
      %v4176 = vpack.c.b16 %v4044, %v4038
      %v4177 = vpack.c.b16 %v4045, %v4039
      %v4178 = vpack.c.b16 %v4046, %v4040
      %v4179 = vpack.c.b16 %v4047, %v4041
      %v4180 = vpack.c.b16 %v4054, %v4048
      %v4181 = vpack.c.b16 %v4055, %v4049
      %v4182 = vpack.c.b16 %v4056, %v4050
      %v4183 = vpack.c.b16 %v4057, %v4051
      %v4184 = vpack.c.b16 %v4058, %v4052
      %v4185 = vpack.c.b16 %v4059, %v4053
      %v4186 = vpack.c.b16 %v4066, %v4060
      %v4187 = vpack.c.b16 %v4067, %v4061
      %v4188 = vpack.c.b16 %v4068, %v4062
      %v4189 = vpack.c.b16 %v4069, %v4063
      %v4190 = vpack.c.b16 %v4070, %v4064
      %v4191 = vpack.c.b16 %v4071, %v4065
      %v4192 = vpack.c.b16 %v4078, %v4072
      %v4193 = vpack.c.b16 %v4079, %v4073
      %v4194 = vpack.c.b16 %v4080, %v4074
      %v4195 = vpack.c.b16 %v4081, %v4075
      %v4196 = vpack.c.b16 %v4082, %v4076
      %v4197 = vpack.c.b16 %v4083, %v4077
      %v4198 = vpack.c.b16 %v4090, %v4084
      %v4199 = vpack.c.b16 %v4091, %v4085
      %v4200 = vpack.c.b16 %v4092, %v4086
      %v4201 = vpack.c.b16 %v4093, %v4087
      %v4202 = vpack.c.b16 %v4094, %v4088
      %v4203 = vpack.c.b16 %v4095, %v4089
      %v4204 = vpack.c.b16 %v4102, %v4096
      %v4205 = vpack.c.b16 %v4103, %v4097
      %v4206 = vpack.c.b16 %v4104, %v4098
      %v4207 = vpack.c.b16 %v4105, %v4099
      %v4208 = vpack.c.b16 %v4106, %v4100
      %v4209 = vpack.c.b16 %v4107, %v4101
      %v4210 = vpack.c.b16 %v4114, %v4108
      %v4211 = vpack.c.b16 %v4115, %v4109
      %v4212 = vpack.c.b16 %v4116, %v4110
      %v4213 = vpack.c.b16 %v4117, %v4111
      %v4214 = vpack.c.b16 %v4118, %v4112
      %v4215 = vpack.c.b16 %v4119, %v4113
      %v4313 = vlaneseq
      %v4314 = vshrl.u32 %v4313, 7
      %v4315 = vsub.s32 0, %v4314
      %v4316 = vrot.slane %v3831, %v4315
      %v4317 = vlaneseq
      %v4318 = vshrl.u32 %v4317, 7
      %v4319 = vsub.s32 1, %v4318
      %v4320 = vrot.slane %v3831, %v4319
      %v4321 = vlaneseq
      %v4322 = vshrl.u32 %v4321, 7
      %v4323 = vsub.s32 2, %v4322
      %v4324 = vrot.slane %v3831, %v4323
      %v4325 = vlaneseq
      %v4326 = vshrl.u32 %v4325, 7
      %v4327 = vsub.s32 3, %v4326
      %v4328 = vrot.slane %v3831, %v4327
      %v4329 = vlaneseq
      %v4330 = vshrl.u32 %v4329, 7
      %v4331 = vsub.s32 4, %v4330
      %v4332 = vrot.slane %v3831, %v4331
      %v4333 = vlaneseq
      %v4334 = vshrl.u32 %v4333, 7
      %v4335 = vsub.s32 5, %v4334
      %v4336 = vrot.slane %v3831, %v4335
      %4343 = vmatprep.subr.bf16.mxu0 %v4121
      %4344 = vmatpush1.bf16.msra.mxu0 %v4120
      %4345 = vmatprep.subr.bf16.mxu0 %v4127
      %4346 = vmatpush1.bf16.msra.mxu0 %v4126
      %4347 = vmatprep.subr.bf16.mxu0 %v4133
      %4348 = vmatpush1.bf16.msra.mxu0 %v4132
      %4349 = vmatprep.subr.bf16.mxu0 %v4139
      %4350 = vmatpush1.bf16.msra.mxu0 %v4138
      %4351 = vmatprep.subr.bf16.mxu0 %v4145
      %4352 = vmatpush1.bf16.msra.mxu0 %v4144
      %4353 = vmatprep.subr.bf16.mxu0 %v4151
      %4354 = vmatpush1.bf16.msra.mxu0 %v4150
      %4355 = vmatprep.subr.bf16.mxu0 %v4157
      %4356 = vmatpush1.bf16.msra.mxu0 %v4156
      %4357 = vmatprep.subr.bf16.mxu0 %v4163
      %4358 = vmatpush1.bf16.msra.mxu0 %v4162
      %4359 = vmatprep.subr.bf16.mxu0 %v4169
      %4360 = vmatpush1.bf16.msra.mxu0 %v4168
      %4361 = vmatprep.subr.bf16.mxu0 %v4175
      %4362 = vmatpush1.bf16.msra.mxu0 %v4174
      %4363 = vmatprep.subr.bf16.mxu0 %v4181
      %4364 = vmatpush1.bf16.msra.mxu0 %v4180
      %4365 = vmatprep.subr.bf16.mxu0 %v4187
      %4366 = vmatpush1.bf16.msra.mxu0 %v4186
      %4367 = vmatprep.subr.bf16.mxu0 %v4193
      %4368 = vmatpush1.bf16.msra.mxu0 %v4192
      %4369 = vmatprep.subr.bf16.mxu0 %v4199
      %4370 = vmatpush1.bf16.msra.mxu0 %v4198
      %4371 = vmatprep.subr.bf16.mxu0 %v4205
      %4372 = vmatpush1.bf16.msra.mxu0 %v4204
      %4373 = vmatprep.subr.bf16.mxu0 %v4211
      %4374 = vmatpush1.bf16.msra.mxu0 %v4210
      %4375 = vmatprep.mubr.bf16.mxu0 %v3732
      %4376 = vmatmul.mubr.bf16.gmra.mrb[0].mxu0 %v3731
      %v4377 = vpop.f32.mrb[0].mxu0
      %v4378 = vadd.f32 %v4316, %v4377
      %v4379 = vpop.f32.mrb[0].mxu0
      %v4380 = vadd.f32 %v4320, %v4379
      %v4381 = vpop.f32.mrb[0].mxu0
      %v4382 = vpop.f32.mrb[0].mxu0
      %4383 = vdwg.mxu0
      %4384 = vmatprep.subr.bf16.mxu0 %v4123
      %4385 = vmatpush1.bf16.msra.mxu0 %v4122
      %4386 = vmatprep.subr.bf16.mxu0 %v4129
      %4387 = vmatpush1.bf16.msra.mxu0 %v4128
      %4388 = vmatprep.subr.bf16.mxu0 %v4135
      %4389 = vmatpush1.bf16.msra.mxu0 %v4134
      %4390 = vmatprep.subr.bf16.mxu0 %v4141
      %4391 = vmatpush1.bf16.msra.mxu0 %v4140
      %4392 = vmatprep.subr.bf16.mxu0 %v4147
      %4393 = vmatpush1.bf16.msra.mxu0 %v4146
      %4394 = vmatprep.subr.bf16.mxu0 %v4153
      %4395 = vmatpush1.bf16.msra.mxu0 %v4152
      %4396 = vmatprep.subr.bf16.mxu0 %v4159
      %4397 = vmatpush1.bf16.msra.mxu0 %v4158
      %4398 = vmatprep.subr.bf16.mxu0 %v4165
      %4399 = vmatpush1.bf16.msra.mxu0 %v4164
      %4400 = vmatprep.subr.bf16.mxu0 %v4171
      %4401 = vmatpush1.bf16.msra.mxu0 %v4170
      %4402 = vmatprep.subr.bf16.mxu0 %v4177
      %4403 = vmatpush1.bf16.msra.mxu0 %v4176
      %4404 = vmatprep.subr.bf16.mxu0 %v4183
      %4405 = vmatpush1.bf16.msra.mxu0 %v4182
      %4406 = vmatprep.subr.bf16.mxu0 %v4189
      %4407 = vmatpush1.bf16.msra.mxu0 %v4188
      %4408 = vmatprep.subr.bf16.mxu0 %v4195
      %4409 = vmatpush1.bf16.msra.mxu0 %v4194
      %4410 = vmatprep.subr.bf16.mxu0 %v4201
      %4411 = vmatpush1.bf16.msra.mxu0 %v4200
      %4412 = vmatprep.subr.bf16.mxu0 %v4207
      %4413 = vmatpush1.bf16.msra.mxu0 %v4206
      %4414 = vmatprep.subr.bf16.mxu0 %v4213
      %4415 = vmatpush1.bf16.msra.mxu0 %v4212
      %4416 = vmatprep.mubr.bf16.mxu0 %v3732
      %4417 = vmatmul.mubr.bf16.gmra.mrb[0].mxu0 %v3731
      %v4418 = vpop.f32.mrb[0].mxu0
      %v4419 = vadd.f32 %v4324, %v4418
      %v4420 = vpop.f32.mrb[0].mxu0
      %v4421 = vadd.f32 %v4328, %v4420
      %v4422 = vpop.f32.mrb[0].mxu0
      %v4423 = vpop.f32.mrb[0].mxu0
      %4424 = vdwg.mxu0
      %4425 = vmatprep.subr.bf16.mxu0 %v4125
      %4426 = vmatpush1.bf16.msra.mxu0 %v4124
      %4427 = vmatprep.subr.bf16.mxu0 %v4131
      %4428 = vmatpush1.bf16.msra.mxu0 %v4130
      %4429 = vmatprep.subr.bf16.mxu0 %v4137
      %4430 = vmatpush1.bf16.msra.mxu0 %v4136
      %4431 = vmatprep.subr.bf16.mxu0 %v4143
      %4432 = vmatpush1.bf16.msra.mxu0 %v4142
      %4433 = vmatprep.subr.bf16.mxu0 %v4149
      %4434 = vmatpush1.bf16.msra.mxu0 %v4148
      %4435 = vmatprep.subr.bf16.mxu0 %v4155
      %4436 = vmatpush1.bf16.msra.mxu0 %v4154
      %4437 = vmatprep.subr.bf16.mxu0 %v4161
      %4438 = vmatpush1.bf16.msra.mxu0 %v4160
      %4439 = vmatprep.subr.bf16.mxu0 %v4167
      %4440 = vmatpush1.bf16.msra.mxu0 %v4166
      %4441 = vmatprep.subr.bf16.mxu0 %v4173
      %4442 = vmatpush1.bf16.msra.mxu0 %v4172
      %4443 = vmatprep.subr.bf16.mxu0 %v4179
      %4444 = vmatpush1.bf16.msra.mxu0 %v4178
      %4445 = vmatprep.subr.bf16.mxu0 %v4185
      %4446 = vmatpush1.bf16.msra.mxu0 %v4184
      %4447 = vmatprep.subr.bf16.mxu0 %v4191
      %4448 = vmatpush1.bf16.msra.mxu0 %v4190
      %4449 = vmatprep.subr.bf16.mxu0 %v4197
      %4450 = vmatpush1.bf16.msra.mxu0 %v4196
      %4451 = vmatprep.subr.bf16.mxu0 %v4203
      %4452 = vmatpush1.bf16.msra.mxu0 %v4202
      %4453 = vmatprep.subr.bf16.mxu0 %v4209
      %4454 = vmatpush1.bf16.msra.mxu0 %v4208
      %4455 = vmatprep.subr.bf16.mxu0 %v4215
      %4456 = vmatpush1.bf16.msra.mxu0 %v4214
      %4457 = vmatprep.mubr.bf16.mxu0 %v3732
      %4458 = vmatmul.mubr.bf16.gmra.mrb[0].mxu0 %v3731
      %v4459 = vpop.f32.mrb[0].mxu0
      %v4460 = vadd.f32 %v4332, %v4459
      %v4461 = vpop.f32.mrb[0].mxu0
      %v4462 = vadd.f32 %v4336, %v4461
      %v4463 = vpop.f32.mrb[0].mxu0
      %v4464 = vpop.f32.mrb[0].mxu0
      %4465 = vdwg.mxu0
      %v4466 = vadd.f32 %v3730, %v4378
      %v4467 = vxor.u32 %v4466, 2147483648
      %v4468 = vmul.f32 %v4467, 1.442695
      %v4469 = vpow.pop %v4468
      %v4470 = vadd.f32 %v4469, 1.0
      %v4471 = vrcp.pop %v4470
      %v4472 = vmul.f32 1.0, %v4471
      %v4474 = vrot.slane %v3730, 1
      %v4476 = vadd.f32 %v4474, %v4380
      %v4477 = vxor.u32 %v4476, 2147483648
      %v4478 = vmul.f32 %v4477, 1.442695
      %v4479 = vpow.pop %v4478
      %v4480 = vadd.f32 %v4479, 1.0
      %v4481 = vrcp.pop %v4480
      %v4482 = vmul.f32 1.0, %v4481
      %v4483 = vmul.f32 %v4472, %v4419
      %v4484 = vrot.slane %v3730, 2
      %v4486 = vadd.f32 %v4484, %v4483
      %v4487 = vtanh.pop %v4486
      %v4488 = vrot.slane %v3730, 3
      %v4490 = vadd.f32 %v4488, %v4421
      %v4491 = vxor.u32 %v4490, 2147483648
      %v4492 = vmul.f32 %v4491, 1.442695
      %v4493 = vpow.pop %v4492
      %v4494 = vadd.f32 %v4493, 1.0
      %v4495 = vrcp.pop %v4494
      %v4496 = vmul.f32 1.0, %v4495
      %v4497 = vrot.slane %v3730, 4
      %v4499 = vadd.f32 %v4497, %v4460
      %v4500 = vxor.u32 %v4499, 2147483648
      %v4501 = vmul.f32 %v4500, 1.442695
      %v4502 = vpow.pop %v4501
      %v4503 = vadd.f32 %v4502, 1.0
      %v4504 = vrcp.pop %v4503
      %v4505 = vmul.f32 1.0, %v4504
      %v4506 = vmul.f32 %v4496, %v4462
      %v4507 = vrot.slane %v3730, 5
      %v4509 = vadd.f32 %v4507, %v4506
      %v4510 = vtanh.pop %v4509
      %v4511 = vsub.f32 1.0, %v4482
      %v4512 = vmul.f32 %v4511, %v4487
      %v4513 = vmul.f32 %v4482, %v2909
      %v4514 = vadd.f32 %v4512, %v4513
      %v4515 = vsub.f32 1.0, %v4505
      %v4516 = vmul.f32 %v4515, %v4510
      %v4517 = vmul.f32 %v4505, %v2911
      %v4518 = vadd.f32 %v4516, %v4517
      %v4519 = vsel %vm3713, %v4514, %v2909
      %v4520 = vsel %vm3717, %v4518, %v2911
    $region90: #{trackers_forward.1} parent=1 // loop_footer
      %s2905 = sadd.s32 %s2903, 1
    $region91: #{trackers_forward.1} parent=1 // loop_footer_branch
      %2902 = sbr.rel target = $region87
    $region92: #{trackers_forward.1} parent=1 // loop_exit
      _
    %v4521 = vpack.c.bf16 %v2908, %v2908
    %v4522 = vpack.c.bf16 %v2910, %v2910
    %v4523 = vld [vmem:[#allocation14] sm:$0xf]
    %v4524 = vld [vmem:[#allocation14 + $0x4] sm:$0xf]
    %v4525 = vld [vmem:[#allocation14 + $0x8] sm:$0xf]
    %v4526 = vld [vmem:[#allocation14 + $0xc] sm:$0xf]
    %v4527 = vld [vmem:[#allocation14 + $0x10] sm:$0xf]
    %v4528 = vld [vmem:[#allocation14 + $0x14] sm:$0xf]
    %v4529 = vld [vmem:[#allocation14 + $0x18] sm:$0xf]
    %v4530 = vld [vmem:[#allocation14 + $0x1c] sm:$0xf]
    %v4531 = vld [vmem:[#allocation14 + $0x20] sm:$0xf]
    %v4532 = vld [vmem:[#allocation14 + $0x24] sm:$0xf]
    %v4533 = vld [vmem:[#allocation14 + $0x28] sm:$0xf]
    %v4534 = vld [vmem:[#allocation14 + $0x2c] sm:$0xf]
    %v4535 = vld [vmem:[#allocation14 + $0x30] sm:$0xf]
    %v4536 = vld [vmem:[#allocation14 + $0x34] sm:$0xf]
    %v4537 = vld [vmem:[#allocation14 + $0x38] sm:$0xf]
    %v4538 = vld [vmem:[#allocation14 + $0x3c] sm:$0xf]
    %v4539 = vld [vmem:[#allocation14 + $0x40] sm:$0xf]
    %v4540 = vld [vmem:[#allocation14 + $0x44] sm:$0xf]
    %v4541 = vld [vmem:[#allocation14 + $0x48] sm:$0xf]
    %v4542 = vld [vmem:[#allocation14 + $0x4c] sm:$0xf]
    %v4543 = vld [vmem:[#allocation14 + $0x50] sm:$0xf]
    %v4544 = vld [vmem:[#allocation14 + $0x54] sm:$0xf]
    %v4545 = vld [vmem:[#allocation14 + $0x58] sm:$0xf]
    %v4546 = vld [vmem:[#allocation14 + $0x5c] sm:$0xf]
    %v4547 = vld [vmem:[#allocation14 + $0x60] sm:$0xf]
    %v4548 = vld [vmem:[#allocation14 + $0x64] sm:$0xf]
    %v4549 = vld [vmem:[#allocation14 + $0x68] sm:$0xf]
    %v4550 = vld [vmem:[#allocation14 + $0x6c] sm:$0xf]
    %v4551 = vld [vmem:[#allocation14 + $0x70] sm:$0xf]
    %v4552 = vld [vmem:[#allocation14 + $0x74] sm:$0xf]
    %v4553 = vld [vmem:[#allocation14 + $0x78] sm:$0xf]
    %v4554 = vld [vmem:[#allocation14 + $0x7c] sm:$0xf]
    %v4555 = vld [vmem:[#allocation16] sm:$0x1]
    %v4588 = vunpack.c.l.b16 %v4523
    %v4589 = vunpack.c.l.b16 %v4524
    %v4590 = vunpack.c.l.b16 %v4525
    %v4591 = vunpack.c.l.b16 %v4526
    %v4592 = vunpack.c.l.b16 %v4527
    %v4593 = vunpack.c.l.b16 %v4528
    %v4594 = vunpack.c.l.b16 %v4529
    %v4595 = vunpack.c.l.b16 %v4530
    %v4596 = vunpack.c.l.b16 %v4531
    %v4597 = vunpack.c.l.b16 %v4532
    %v4598 = vunpack.c.l.b16 %v4533
    %v4599 = vunpack.c.l.b16 %v4534
    %v4600 = vunpack.c.l.b16 %v4535
    %v4601 = vunpack.c.l.b16 %v4536
    %v4602 = vunpack.c.l.b16 %v4537
    %v4603 = vunpack.c.l.b16 %v4538
    %v4604 = vunpack.c.l.b16 %v4539
    %v4605 = vunpack.c.l.b16 %v4540
    %v4606 = vunpack.c.l.b16 %v4541
    %v4607 = vunpack.c.l.b16 %v4542
    %v4608 = vunpack.c.l.b16 %v4543
    %v4609 = vunpack.c.l.b16 %v4544
    %v4610 = vunpack.c.l.b16 %v4545
    %v4611 = vunpack.c.l.b16 %v4546
    %v4612 = vunpack.c.l.b16 %v4547
    %v4613 = vunpack.c.l.b16 %v4548
    %v4614 = vunpack.c.l.b16 %v4549
    %v4615 = vunpack.c.l.b16 %v4550
    %v4616 = vunpack.c.l.b16 %v4551
    %v4617 = vunpack.c.l.b16 %v4552
    %v4618 = vunpack.c.l.b16 %v4553
    %v4619 = vunpack.c.l.b16 %v4554
    %v4620 = vpack.c.b16 %v4589, %v4588
    %v4621 = vpack.c.b16 %v4591, %v4590
    %v4622 = vpack.c.b16 %v4593, %v4592
    %v4623 = vpack.c.b16 %v4595, %v4594
    %v4624 = vpack.c.b16 %v4597, %v4596
    %v4625 = vpack.c.b16 %v4599, %v4598
    %v4626 = vpack.c.b16 %v4601, %v4600
    %v4627 = vpack.c.b16 %v4603, %v4602
    %v4628 = vpack.c.b16 %v4605, %v4604
    %v4629 = vpack.c.b16 %v4607, %v4606
    %v4630 = vpack.c.b16 %v4609, %v4608
    %v4631 = vpack.c.b16 %v4611, %v4610
    %v4632 = vpack.c.b16 %v4613, %v4612
    %v4633 = vpack.c.b16 %v4615, %v4614
    %v4634 = vpack.c.b16 %v4617, %v4616
    %v4635 = vpack.c.b16 %v4619, %v4618
    %4652 = vmatprep.subr.bf16.mxu0 0
    %4653 = vmatpush1.bf16.msra.mxu0 %v4620
    %4654 = vmatprep.subr.bf16.mxu0 0
    %4655 = vmatpush1.bf16.msra.mxu0 %v4621
    %4656 = vmatprep.subr.bf16.mxu0 0
    %4657 = vmatpush1.bf16.msra.mxu0 %v4622
    %4658 = vmatprep.subr.bf16.mxu0 0
    %4659 = vmatpush1.bf16.msra.mxu0 %v4623
    %4660 = vmatprep.subr.bf16.mxu0 0
    %4661 = vmatpush1.bf16.msra.mxu0 %v4624
    %4662 = vmatprep.subr.bf16.mxu0 0
    %4663 = vmatpush1.bf16.msra.mxu0 %v4625
    %4664 = vmatprep.subr.bf16.mxu0 0
    %4665 = vmatpush1.bf16.msra.mxu0 %v4626
    %4666 = vmatprep.subr.bf16.mxu0 0
    %4667 = vmatpush1.bf16.msra.mxu0 %v4627
    %4668 = vmatprep.subr.bf16.mxu0 0
    %4669 = vmatpush1.bf16.msra.mxu0 %v4628
    %4670 = vmatprep.subr.bf16.mxu0 0
    %4671 = vmatpush1.bf16.msra.mxu0 %v4629
    %4672 = vmatprep.subr.bf16.mxu0 0
    %4673 = vmatpush1.bf16.msra.mxu0 %v4630
    %4674 = vmatprep.subr.bf16.mxu0 0
    %4675 = vmatpush1.bf16.msra.mxu0 %v4631
    %4676 = vmatprep.subr.bf16.mxu0 0
    %4677 = vmatpush1.bf16.msra.mxu0 %v4632
    %4678 = vmatprep.subr.bf16.mxu0 0
    %4679 = vmatpush1.bf16.msra.mxu0 %v4633
    %4680 = vmatprep.subr.bf16.mxu0 0
    %4681 = vmatpush1.bf16.msra.mxu0 %v4634
    %4682 = vmatprep.subr.bf16.mxu0 0
    %4683 = vmatpush1.bf16.msra.mxu0 %v4635
    %4684 = vmatprep.mubr.bf16.mxu0 %v4522
    %4685 = vmatmul.mubr.bf16.gmra.mrb[0].mxu0 %v4521
    %v4686 = vpop.f32.mrb[0].mxu0
    %v4687 = vadd.f32 %v4555, %v4686
    %v4688 = vpop.f32.mrb[0].mxu0
    %v4689 = vpop.f32.mrb[0].mxu0
    %v4690 = vpop.f32.mrb[0].mxu0
    %4691 = vdwg.mxu0
    %v4692 = vmax.f32 %v4687, 0.0
    %v4693 = vpack.c.bf16 %v4692, %v4692
    %v4694 = vld [vmem:[#allocation17] sm:$0xf]
    %v4695 = vld [vmem:[#allocation17 + $0x4] sm:$0xf]
    %v4696 = vld [vmem:[#allocation17 + $0x8] sm:$0xf]
    %v4697 = vld [vmem:[#allocation17 + $0xc] sm:$0xf]
    %v4698 = vld [vmem:[#allocation17 + $0x10] sm:$0xf]
    %v4699 = vld [vmem:[#allocation17 + $0x14] sm:$0xf]
    %v4700 = vld [vmem:[#allocation17 + $0x18] sm:$0xf]
    %v4701 = vld [vmem:[#allocation17 + $0x1c] sm:$0xf]
    %v4702 = vld [vmem:[#allocation17 + $0x20] sm:$0xf]
    %v4703 = vld [vmem:[#allocation17 + $0x24] sm:$0xf]
    %v4704 = vld [vmem:[#allocation17 + $0x28] sm:$0xf]
    %v4705 = vld [vmem:[#allocation17 + $0x2c] sm:$0xf]
    %v4706 = vld [vmem:[#allocation17 + $0x30] sm:$0xf]
    %v4707 = vld [vmem:[#allocation17 + $0x34] sm:$0xf]
    %v4708 = vld [vmem:[#allocation17 + $0x38] sm:$0xf]
    %v4709 = vld [vmem:[#allocation17 + $0x3c] sm:$0xf]
    %v4710 = vld [vmem:[#allocation19] sm:$0x1]
    %v4727 = vunpack.c.l.b16 %v4694
    %v4728 = vunpack.c.l.b16 %v4695
    %v4729 = vunpack.c.l.b16 %v4696
    %v4730 = vunpack.c.l.b16 %v4697
    %v4731 = vunpack.c.l.b16 %v4698
    %v4732 = vunpack.c.l.b16 %v4699
    %v4733 = vunpack.c.l.b16 %v4700
    %v4734 = vunpack.c.l.b16 %v4701
    %v4735 = vunpack.c.l.b16 %v4702
    %v4736 = vunpack.c.l.b16 %v4703
    %v4737 = vunpack.c.l.b16 %v4704
    %v4738 = vunpack.c.l.b16 %v4705
    %v4739 = vunpack.c.l.b16 %v4706
    %v4740 = vunpack.c.l.b16 %v4707
    %v4741 = vunpack.c.l.b16 %v4708
    %v4742 = vunpack.c.l.b16 %v4709
    %v4743 = vpack.c.b16 %v4728, %v4727
    %v4744 = vpack.c.b16 %v4730, %v4729
    %v4745 = vpack.c.b16 %v4732, %v4731
    %v4746 = vpack.c.b16 %v4734, %v4733
    %v4747 = vpack.c.b16 %v4736, %v4735
    %v4748 = vpack.c.b16 %v4738, %v4737
    %v4749 = vpack.c.b16 %v4740, %v4739
    %v4750 = vpack.c.b16 %v4742, %v4741
    %4759 = vmatprep.subr.bf16.mxu0 0
    %4760 = vmatpush1.bf16.msra.mxu0 %v4743
    %4761 = vmatprep.subr.bf16.mxu0 0
    %4762 = vmatpush1.bf16.msra.mxu0 %v4744
    %4763 = vmatprep.subr.bf16.mxu0 0
    %4764 = vmatpush1.bf16.msra.mxu0 %v4745
    %4765 = vmatprep.subr.bf16.mxu0 0
    %4766 = vmatpush1.bf16.msra.mxu0 %v4746
    %4767 = vmatprep.subr.bf16.mxu0 0
    %4768 = vmatpush1.bf16.msra.mxu0 %v4747
    %4769 = vmatprep.subr.bf16.mxu0 0
    %4770 = vmatpush1.bf16.msra.mxu0 %v4748
    %4771 = vmatprep.subr.bf16.mxu0 0
    %4772 = vmatpush1.bf16.msra.mxu0 %v4749
    %4773 = vmatprep.subr.bf16.mxu0 0
    %4774 = vmatpush1.bf16.msra.mxu0 %v4750
    %4775 = vmatprep.subr.bf16.mxu0 0
    %4776 = vmatpush1.bf16.msra.mxu0 0
    %4777 = vmatprep.subr.bf16.mxu0 0
    %4778 = vmatpush1.bf16.msra.mxu0 0
    %4779 = vmatprep.subr.bf16.mxu0 0
    %4780 = vmatpush1.bf16.msra.mxu0 0
    %4781 = vmatprep.subr.bf16.mxu0 0
    %4782 = vmatpush1.bf16.msra.mxu0 0
    %4783 = vmatprep.subr.bf16.mxu0 0
    %4784 = vmatpush1.bf16.msra.mxu0 0
    %4785 = vmatprep.subr.bf16.mxu0 0
    %4786 = vmatpush1.bf16.msra.mxu0 0
    %4787 = vmatprep.subr.bf16.mxu0 0
    %4788 = vmatpush1.bf16.msra.mxu0 0
    %4789 = vmatprep.subr.bf16.mxu0 0
    %4790 = vmatpush1.bf16.msra.mxu0 0
    %4791 = vmatprep.mubr.bf16.mxu0 0
    %4792 = vmatmul.mubr.bf16.gmra.mrb[0].mxu0 %v4693
    %v4793 = vpop.f32.mrb[0].mxu0
    %v4794 = vadd.f32 %v4710, %v4793
    %v4795 = vpop.f32.mrb[0].mxu0
    %v4796 = vpop.f32.mrb[0].mxu0
    %v4797 = vpop.f32.mrb[0].mxu0
    %4798 = vdwg.mxu0
    %vm4799 = vcmask 1040384
    %v4800 = vsel %vm4799, %v4794, -inf
    %4801 = vmax.xlane.f32.xlu0 %v4800
    %v4802 = vpop.xlane.xlu0 %4801
    %v4803 = vsub.f32 %v4794, %v4802
    %v4804 = vmul.f32 %v4803, 1.442695
    %v4805 = vpow.pop %v4804
    %v4806 = vsel %vm4799, %v4805, 0.0
    %4807 = vadd.xlane.f32.xlu0 %v4806
    %v4808 = vpop.xlane.xlu0 %4807
    %v4809 = vrcp.pop %v4808
    %v4810 = vmul.f32 %v4805, %v4809
    %4811 = vst [vmem:[#allocation20] sm:$0x1] %v4810
    %v4812 = vpack.c.bf16 %v2909, %v2909
    %v4813 = vpack.c.bf16 %v2911, %v2911
    %s4814 = scalar_lea.vmem [#allocation14], 128
    %v4815 = vld [vmem:[%s4814] sm:$0xf]
    %v4816 = vld [vmem:[%s4814 + $0x4] sm:$0xf]
    %v4817 = vld [vmem:[%s4814 + $0x8] sm:$0xf]
    %v4818 = vld [vmem:[%s4814 + $0xc] sm:$0xf]
    %v4819 = vld [vmem:[%s4814 + $0x10] sm:$0xf]
    %v4820 = vld [vmem:[%s4814 + $0x14] sm:$0xf]
    %v4821 = vld [vmem:[%s4814 + $0x18] sm:$0xf]
    %v4822 = vld [vmem:[%s4814 + $0x1c] sm:$0xf]
    %v4823 = vld [vmem:[%s4814 + $0x20] sm:$0xf]
    %v4824 = vld [vmem:[%s4814 + $0x24] sm:$0xf]
    %v4825 = vld [vmem:[%s4814 + $0x28] sm:$0xf]
    %v4826 = vld [vmem:[%s4814 + $0x2c] sm:$0xf]
    %v4827 = vld [vmem:[%s4814 + $0x30] sm:$0xf]
    %v4828 = vld [vmem:[%s4814 + $0x34] sm:$0xf]
    %v4829 = vld [vmem:[%s4814 + $0x38] sm:$0xf]
    %v4830 = vld [vmem:[%s4814 + $0x3c] sm:$0xf]
    %v4831 = vld [vmem:[%s4814 + $0x40] sm:$0xf]
    %v4832 = vld [vmem:[%s4814 + $0x44] sm:$0xf]
    %v4833 = vld [vmem:[%s4814 + $0x48] sm:$0xf]
    %v4834 = vld [vmem:[%s4814 + $0x4c] sm:$0xf]
    %v4835 = vld [vmem:[%s4814 + $0x50] sm:$0xf]
    %v4836 = vld [vmem:[%s4814 + $0x54] sm:$0xf]
    %v4837 = vld [vmem:[%s4814 + $0x58] sm:$0xf]
    %v4838 = vld [vmem:[%s4814 + $0x5c] sm:$0xf]
    %v4839 = vld [vmem:[%s4814 + $0x60] sm:$0xf]
    %v4840 = vld [vmem:[%s4814 + $0x64] sm:$0xf]
    %v4841 = vld [vmem:[%s4814 + $0x68] sm:$0xf]
    %v4842 = vld [vmem:[%s4814 + $0x6c] sm:$0xf]
    %v4843 = vld [vmem:[%s4814 + $0x70] sm:$0xf]
    %v4844 = vld [vmem:[%s4814 + $0x74] sm:$0xf]
    %v4845 = vld [vmem:[%s4814 + $0x78] sm:$0xf]
    %v4846 = vld [vmem:[%s4814 + $0x7c] sm:$0xf]
    %s4847 = scalar_lea.vmem [#allocation16], 1
    %v4848 = vld [vmem:[%s4847] sm:$0x1]
    %v4881 = vunpack.c.l.b16 %v4815
    %v4882 = vunpack.c.l.b16 %v4816
    %v4883 = vunpack.c.l.b16 %v4817
    %v4884 = vunpack.c.l.b16 %v4818
    %v4885 = vunpack.c.l.b16 %v4819
    %v4886 = vunpack.c.l.b16 %v4820
    %v4887 = vunpack.c.l.b16 %v4821
    %v4888 = vunpack.c.l.b16 %v4822
    %v4889 = vunpack.c.l.b16 %v4823
    %v4890 = vunpack.c.l.b16 %v4824
    %v4891 = vunpack.c.l.b16 %v4825
    %v4892 = vunpack.c.l.b16 %v4826
    %v4893 = vunpack.c.l.b16 %v4827
    %v4894 = vunpack.c.l.b16 %v4828
    %v4895 = vunpack.c.l.b16 %v4829
    %v4896 = vunpack.c.l.b16 %v4830
    %v4897 = vunpack.c.l.b16 %v4831
    %v4898 = vunpack.c.l.b16 %v4832
    %v4899 = vunpack.c.l.b16 %v4833
    %v4900 = vunpack.c.l.b16 %v4834
    %v4901 = vunpack.c.l.b16 %v4835
    %v4902 = vunpack.c.l.b16 %v4836
    %v4903 = vunpack.c.l.b16 %v4837
    %v4904 = vunpack.c.l.b16 %v4838
    %v4905 = vunpack.c.l.b16 %v4839
    %v4906 = vunpack.c.l.b16 %v4840
    %v4907 = vunpack.c.l.b16 %v4841
    %v4908 = vunpack.c.l.b16 %v4842
    %v4909 = vunpack.c.l.b16 %v4843
    %v4910 = vunpack.c.l.b16 %v4844
    %v4911 = vunpack.c.l.b16 %v4845
    %v4912 = vunpack.c.l.b16 %v4846
    %v4913 = vpack.c.b16 %v4882, %v4881
    %v4914 = vpack.c.b16 %v4884, %v4883
    %v4915 = vpack.c.b16 %v4886, %v4885
    %v4916 = vpack.c.b16 %v4888, %v4887
    %v4917 = vpack.c.b16 %v4890, %v4889
    %v4918 = vpack.c.b16 %v4892, %v4891
    %v4919 = vpack.c.b16 %v4894, %v4893
    %v4920 = vpack.c.b16 %v4896, %v4895
    %v4921 = vpack.c.b16 %v4898, %v4897
    %v4922 = vpack.c.b16 %v4900, %v4899
    %v4923 = vpack.c.b16 %v4902, %v4901
    %v4924 = vpack.c.b16 %v4904, %v4903
    %v4925 = vpack.c.b16 %v4906, %v4905
    %v4926 = vpack.c.b16 %v4908, %v4907
    %v4927 = vpack.c.b16 %v4910, %v4909
    %v4928 = vpack.c.b16 %v4912, %v4911
    %4945 = vmatprep.subr.bf16.mxu0 0
    %4946 = vmatpush1.bf16.msra.mxu0 %v4913
    %4947 = vmatprep.subr.bf16.mxu0 0
    %4948 = vmatpush1.bf16.msra.mxu0 %v4914
    %4949 = vmatprep.subr.bf16.mxu0 0
    %4950 = vmatpush1.bf16.msra.mxu0 %v4915
    %4951 = vmatprep.subr.bf16.mxu0 0
    %4952 = vmatpush1.bf16.msra.mxu0 %v4916
    %4953 = vmatprep.subr.bf16.mxu0 0
    %4954 = vmatpush1.bf16.msra.mxu0 %v4917
    %4955 = vmatprep.subr.bf16.mxu0 0
    %4956 = vmatpush1.bf16.msra.mxu0 %v4918
    %4957 = vmatprep.subr.bf16.mxu0 0
    %4958 = vmatpush1.bf16.msra.mxu0 %v4919
    %4959 = vmatprep.subr.bf16.mxu0 0
    %4960 = vmatpush1.bf16.msra.mxu0 %v4920
    %4961 = vmatprep.subr.bf16.mxu0 0
    %4962 = vmatpush1.bf16.msra.mxu0 %v4921
    %4963 = vmatprep.subr.bf16.mxu0 0
    %4964 = vmatpush1.bf16.msra.mxu0 %v4922
    %4965 = vmatprep.subr.bf16.mxu0 0
    %4966 = vmatpush1.bf16.msra.mxu0 %v4923
    %4967 = vmatprep.subr.bf16.mxu0 0
    %4968 = vmatpush1.bf16.msra.mxu0 %v4924
    %4969 = vmatprep.subr.bf16.mxu0 0
    %4970 = vmatpush1.bf16.msra.mxu0 %v4925
    %4971 = vmatprep.subr.bf16.mxu0 0
    %4972 = vmatpush1.bf16.msra.mxu0 %v4926
    %4973 = vmatprep.subr.bf16.mxu0 0
    %4974 = vmatpush1.bf16.msra.mxu0 %v4927
    %4975 = vmatprep.subr.bf16.mxu0 0
    %4976 = vmatpush1.bf16.msra.mxu0 %v4928
    %4977 = vmatprep.mubr.bf16.mxu0 %v4813
    %4978 = vmatmul.mubr.bf16.gmra.mrb[0].mxu0 %v4812
    %v4979 = vpop.f32.mrb[0].mxu0
    %v4980 = vadd.f32 %v4848, %v4979
    %v4981 = vpop.f32.mrb[0].mxu0
    %v4982 = vpop.f32.mrb[0].mxu0
    %v4983 = vpop.f32.mrb[0].mxu0
    %4984 = vdwg.mxu0
    %v4985 = vmax.f32 %v4980, 0.0
    %v4986 = vpack.c.bf16 %v4985, %v4985
    %s4987 = scalar_lea.vmem [#allocation17], 64
    %v4988 = vld [vmem:[%s4987] sm:$0xf]
    %v4989 = vld [vmem:[%s4987 + $0x4] sm:$0xf]
    %v4990 = vld [vmem:[%s4987 + $0x8] sm:$0xf]
    %v4991 = vld [vmem:[%s4987 + $0xc] sm:$0xf]
    %v4992 = vld [vmem:[%s4987 + $0x10] sm:$0xf]
    %v4993 = vld [vmem:[%s4987 + $0x14] sm:$0xf]
    %v4994 = vld [vmem:[%s4987 + $0x18] sm:$0xf]
    %v4995 = vld [vmem:[%s4987 + $0x1c] sm:$0xf]
    %v4996 = vld [vmem:[%s4987 + $0x20] sm:$0xf]
    %v4997 = vld [vmem:[%s4987 + $0x24] sm:$0xf]
    %v4998 = vld [vmem:[%s4987 + $0x28] sm:$0xf]
    %v4999 = vld [vmem:[%s4987 + $0x2c] sm:$0xf]
    %v5000 = vld [vmem:[%s4987 + $0x30] sm:$0xf]
    %v5001 = vld [vmem:[%s4987 + $0x34] sm:$0xf]
    %v5002 = vld [vmem:[%s4987 + $0x38] sm:$0xf]
    %v5003 = vld [vmem:[%s4987 + $0x3c] sm:$0xf]
    %s5004 = scalar_lea.vmem [#allocation19], 1
    %v5005 = vld [vmem:[%s5004] sm:$0x1]
    %v5022 = vunpack.c.l.b16 %v4988
    %v5023 = vunpack.c.l.b16 %v4989
    %v5024 = vunpack.c.l.b16 %v4990
    %v5025 = vunpack.c.l.b16 %v4991
    %v5026 = vunpack.c.l.b16 %v4992
    %v5027 = vunpack.c.l.b16 %v4993
    %v5028 = vunpack.c.l.b16 %v4994
    %v5029 = vunpack.c.l.b16 %v4995
    %v5030 = vunpack.c.l.b16 %v4996
    %v5031 = vunpack.c.l.b16 %v4997
    %v5032 = vunpack.c.l.b16 %v4998
    %v5033 = vunpack.c.l.b16 %v4999
    %v5034 = vunpack.c.l.b16 %v5000
    %v5035 = vunpack.c.l.b16 %v5001
    %v5036 = vunpack.c.l.b16 %v5002
    %v5037 = vunpack.c.l.b16 %v5003
    %v5038 = vpack.c.b16 %v5023, %v5022
    %v5039 = vpack.c.b16 %v5025, %v5024
    %v5040 = vpack.c.b16 %v5027, %v5026
    %v5041 = vpack.c.b16 %v5029, %v5028
    %v5042 = vpack.c.b16 %v5031, %v5030
    %v5043 = vpack.c.b16 %v5033, %v5032
    %v5044 = vpack.c.b16 %v5035, %v5034
    %v5045 = vpack.c.b16 %v5037, %v5036
    %5054 = vmatprep.subr.bf16.mxu0 0
    %5055 = vmatpush1.bf16.msra.mxu0 %v5038
    %5056 = vmatprep.subr.bf16.mxu0 0
    %5057 = vmatpush1.bf16.msra.mxu0 %v5039
    %5058 = vmatprep.subr.bf16.mxu0 0
    %5059 = vmatpush1.bf16.msra.mxu0 %v5040
    %5060 = vmatprep.subr.bf16.mxu0 0
    %5061 = vmatpush1.bf16.msra.mxu0 %v5041
    %5062 = vmatprep.subr.bf16.mxu0 0
    %5063 = vmatpush1.bf16.msra.mxu0 %v5042
    %5064 = vmatprep.subr.bf16.mxu0 0
    %5065 = vmatpush1.bf16.msra.mxu0 %v5043
    %5066 = vmatprep.subr.bf16.mxu0 0
    %5067 = vmatpush1.bf16.msra.mxu0 %v5044
    %5068 = vmatprep.subr.bf16.mxu0 0
    %5069 = vmatpush1.bf16.msra.mxu0 %v5045
    %5070 = vmatprep.subr.bf16.mxu0 0
    %5071 = vmatpush1.bf16.msra.mxu0 0
    %5072 = vmatprep.subr.bf16.mxu0 0
    %5073 = vmatpush1.bf16.msra.mxu0 0
    %5074 = vmatprep.subr.bf16.mxu0 0
    %5075 = vmatpush1.bf16.msra.mxu0 0
    %5076 = vmatprep.subr.bf16.mxu0 0
    %5077 = vmatpush1.bf16.msra.mxu0 0
    %5078 = vmatprep.subr.bf16.mxu0 0
    %5079 = vmatpush1.bf16.msra.mxu0 0
    %5080 = vmatprep.subr.bf16.mxu0 0
    %5081 = vmatpush1.bf16.msra.mxu0 0
    %5082 = vmatprep.subr.bf16.mxu0 0
    %5083 = vmatpush1.bf16.msra.mxu0 0
    %5084 = vmatprep.subr.bf16.mxu0 0
    %5085 = vmatpush1.bf16.msra.mxu0 0
    %5086 = vmatprep.mubr.bf16.mxu0 0
    %5087 = vmatmul.mubr.bf16.gmra.mrb[0].mxu0 %v4986
    %v5088 = vpop.f32.mrb[0].mxu0
    %v5089 = vadd.f32 %v5005, %v5088
    %v5090 = vpop.f32.mrb[0].mxu0
    %v5091 = vpop.f32.mrb[0].mxu0
    %v5092 = vpop.f32.mrb[0].mxu0
    %5093 = vdwg.mxu0
    %v5094 = vsel %vm4799, %v5089, -inf
    %5095 = vmax.xlane.f32.xlu0 %v5094
    %v5096 = vpop.xlane.xlu0 %5095
    %v5097 = vsub.f32 %v5089, %v5096
    %v5098 = vmul.f32 %v5097, 1.442695
    %v5099 = vpow.pop %v5098
    %v5100 = vsel %vm4799, %v5099, 0.0
    %5101 = vadd.xlane.f32.xlu0 %v5100
    %v5102 = vpop.xlane.xlu0 %5101
    %v5103 = vrcp.pop %v5102
    %v5104 = vmul.f32 %v5099, %v5103
    %5105 = vst [vmem:[#allocation20 + $0x1] sm:$0x1] %v5104
    // Predicated region
    $region93: #{trackers_forward.1} parent=1 // pred_check
      _
    $region94: #{trackers_forward.1} parent=1 // pred_check_branch
      %5107 = sbr.rel (0) target = $region96
    $region95: #{trackers_forward.1} parent=1 // pred_region
      %s5109 = ssub.s32 32, 32
      %5110 = vsyncadd [#allocation7], %s5109
      %s5112 = sshll.u32 [#allocation20], 4
      %s5113 = int_to_ptr.vmem [resolvable:$true] %s5112
      %5115 = dma.vmem_to_hbm [thread:$0]  %s5113, 32, %s13, [#allocation7]
    $region96: #{trackers_forward.1} parent=1 // pred_fallthru
      _
    // Predicated region
    $region97: #{trackers_forward.1} parent=1 // pred_check
      _
    $region98: #{trackers_forward.1} parent=1 // pred_check_branch
      %5117 = sbr.rel (0) target = $region100
    $region99: #{trackers_forward.1} parent=1 // pred_region
      %5118 = dma.done [#allocation7], 32
    $region100: #{trackers_forward.1} parent=1 // pred_fallthru
      _
    %5119 = vsyncpa [#allocation6], 1
    %5120 = vsyncpa [#allocation9], 1
    %5121 = vsyncpa [#allocation12], 1
    %5122 = vsyncpa [#allocation15], 1
    %5123 = vsyncpa [#allocation18], 1
    %5124 = vsyncpa [#allocation7], 1

</llo_original>
